<compile_context>
chip_gen: v5e
topology: v5e:2x2
jax: 0.10.0
libtpu: 0.0.40
codegen_flags: <defaults>
</compile_context>

<pallas_src>
import math
import functools

import jax
import jax.numpy as jnp
from jax.experimental import pallas as pl
from jax.experimental.pallas import tpu as pltpu


def _encoder_layer_kernel(x_ref, ln1g_ref, ln1b_ref, wqkv_ref, bqkv_ref,
                          wo_ref, bo_ref, ln2g_ref, ln2b_ref,
                          w1_ref, b1_ref, w2_ref, b2_ref, out_ref,
                          *, num_heads, head_dim, eps, mlp_block_i):
    f32 = jnp.float32
    bf16 = jnp.bfloat16
    D = num_heads * head_dim
    S = x_ref.shape[1]
    I = w1_ref.shape[1]

    x = x_ref[0].astype(f32)                                   # (S, D) f32

    def layernorm(v, g_ref, b_ref):
        mu = jnp.mean(v, axis=-1, keepdims=True)
        var = jnp.mean((v - mu) ** 2, axis=-1, keepdims=True)
        return (v - mu) * jax.lax.rsqrt(var + eps) * g_ref[...] + b_ref[...]

    # ---- LayerNorm 1 (f32 stats), cast once to bf16 for the MXU ----
    h = layernorm(x, ln1g_ref, ln1b_ref).astype(bf16)

    # ---- QKV projection: one lane-dense (S,D)@(D,3D) matmul, bf16 operands, f32 accumulation.
    #      1/sqrt(head_dim) is pre-folded into the q columns of wqkv/bqkv host-side.
    qkv = jnp.dot(h, wqkv_ref[...], preferred_element_type=f32) + bqkv_ref[...]
    qkv = qkv.astype(bf16)    # drop the f32 copy immediately; stats/residuals stay f32

    # ---- Attention, tiled per head: only one (S,S) score tensor live at a time.
    #      Head-merge is fused into the output projection, so there is no (H,S,hd) stack
    #      and no (S,D) concatenate relayout.
    # TODO(synk): switch the static unroll to lax.fori_loop over a head-major VMEM scratch
    #             (or a grid axis) at production H to bound live ranges explicitly.
    acc = jnp.zeros((S, D), f32)
    for hh in range(num_heads):
        off = hh * head_dim
        qh = qkv[:, off:off + head_dim]                        # (S, hd) bf16
        kh = qkv[:, D + off:D + off + head_dim]                # (S, hd) bf16
        vh = qkv[:, 2 * D + off:2 * D + off + head_dim]        # (S, hd) bf16
        # scores: contract last dims of q and k (no explicit transpose fed to the MXU)
        s = jax.lax.dot_general(qh, kh, (((1,), (1,)), ((), ())),
                                preferred_element_type=f32)    # (S, S) f32
        m = jnp.max(s, axis=-1, keepdims=True)
        p = jnp.exp(s - m)
        denom = jnp.sum(p, axis=-1, keepdims=True)
        p = (p * pl.reciprocal(denom, approx=True)).astype(bf16)  # EUP reciprocal
        oh = jnp.dot(p, vh, preferred_element_type=f32)        # (S, hd) f32
        acc = acc + jnp.dot(oh.astype(bf16), wo_ref[off:off + head_dim, :],
                            preferred_element_type=f32)        # fused head-merge + out-proj
    x1 = x + acc + bo_ref[...]                                 # residual 1 (f32)

    # ---- LayerNorm 2 + MLP (Linear1 -> gelu(tanh) -> Linear2), tiled over I so the full
    #      (S, I) activation never materializes.
    h2 = layernorm(x1, ln2g_ref, ln2b_ref).astype(bf16)
    c = 0.7978845608028654  # sqrt(2/pi)
    acc2 = jnp.zeros((S, D), f32)
    for t0 in range(0, I, mlp_block_i):
        tw = min(mlp_block_i, I - t0)
        z = jnp.dot(h2, w1_ref[:, t0:t0 + tw],
                    preferred_element_type=f32) + b1_ref[:, t0:t0 + tw]
        # TODO(synk): on v6e/v7x this tanh-GELU chain could run in bf16 (VPU/EUP support it);
        #             kept in f32 so v5e pays no conversion passes and accuracy stays tight.
        z = 0.5 * z * (1.0 + jnp.tanh(c * (z + 0.044715 * z * z * z)))
        acc2 = acc2 + jnp.dot(z.astype(bf16), w2_ref[t0:t0 + tw, :],
                              preferred_element_type=f32)
    out_ref[0] = (x1 + acc2 + b2_ref[...]).astype(out_ref.dtype)   # residual 2


def siglip_encoder_layer(x, params, *, num_heads, eps, mlp_block_i=512):
    B, S, D = x.shape
    I = params["w1"].shape[1]
    assert D % num_heads == 0
    head_dim = D // num_heads

    f32, bf16 = jnp.float32, jnp.bfloat16
    scale = 1.0 / math.sqrt(head_dim)

    # Host-side weight prep (trace-time, outside the kernel hot path):
    #   * fold 1/sqrt(head_dim) into the q columns of Wqkv / bqkv,
    #   * cast MXU weight operands to bf16; biases / LN params stay f32.
    wqkv = params["wqkv"].astype(f32).at[:, :D].multiply(scale).astype(bf16)
    bqkv = params["bqkv"].astype(f32).at[:, :D].multiply(scale)
    wo = params["wo"].astype(bf16)
    w1 = params["w1"].astype(bf16)
    w2 = params["w2"].astype(bf16)

    kernel = functools.partial(_encoder_layer_kernel, num_heads=num_heads,
                               head_dim=head_dim, eps=eps, mlp_block_i=mlp_block_i)

    # VMEM budget: use the chip's real capacity when we can query it (v5e/v6e: 128 MiB,
    # v7x: 64 MiB), otherwise a conservative 64 MiB that compiles everywhere.
    try:
        vmem_cap = pltpu.get_tpu_info().vmem_capacity_bytes
        vmem_limit = max(32 * 1024 * 1024,
                         min(int(vmem_cap * 0.85), 110 * 1024 * 1024))
    except Exception:
        vmem_limit = 64 * 1024 * 1024

    def make_call(single_buffer_weights):
        def full(shape):
            idx = lambda b: (0,) * len(shape)
            if single_buffer_weights:
                # Grid-invariant block: single-buffer it (no re-DMA benefit from 2 buffers).
                return pl.BlockSpec(shape, idx, pipeline_mode=pl.Buffered(1))
            return pl.BlockSpec(shape, idx)

        in_specs = [
            pl.BlockSpec((1, S, D), lambda b: (b, 0, 0)),   # x
            full((1, D)), full((1, D)),                     # ln1 gamma/beta (f32)
            full((D, 3 * D)), full((1, 3 * D)),             # qkv proj (bf16, scale-folded), bias
            full((D, D)), full((1, D)),                     # out proj (bf16), bias
            full((1, D)), full((1, D)),                     # ln2 gamma/beta (f32)
            full((D, I)), full((1, I)),                     # mlp linear1 (bf16), bias
            full((I, D)), full((1, D)),                     # mlp linear2 (bf16), bias
        ]
        out_spec = pl.BlockSpec((1, S, D), lambda b: (b, 0, 0))

        return pl.pallas_call(
            kernel,
            out_shape=jax.ShapeDtypeStruct((B, S, D), x.dtype),
            grid_spec=pltpu.PrefetchScalarGridSpec(
                num_scalar_prefetch=0,
                grid=(B,),
                in_specs=in_specs,
                out_specs=out_spec,
            ),
            compiler_params=pltpu.CompilerParams(
                dimension_semantics=("parallel",),
                vmem_limit_bytes=vmem_limit,
            ),
        )

    args = (x, params["ln1_g"], params["ln1_b"], wqkv, bqkv, wo, params["bo"],
            params["ln2_g"], params["ln2_b"], w1, params["b1"], w2, params["b2"])

    try:
        return make_call(True)(*args)
    except Exception:
        # Fallback for jax versions where pl.Buffered(1) on an input spec is not accepted.
        return make_call(False)(*args)


def _reference(x, params, *, num_heads, eps):
    """Pure-JAX f32 reference of the same forward pass, for validation."""
    B, S, D = x.shape
    hd = D // num_heads

    def ln(v, g, b):
        mu = jnp.mean(v, axis=-1, keepdims=True)
        var = jnp.mean((v - mu) ** 2, axis=-1, keepdims=True)
        return (v - mu) * jax.lax.rsqrt(var + eps) * g + b

    h = ln(x, params["ln1_g"], params["ln1_b"])
    qkv = h @ params["wqkv"] + params["bqkv"]
    q, k, v = qkv[..., :D], qkv[..., D:2 * D], qkv[..., 2 * D:]
    q = q.reshape(B, S, num_heads, hd).transpose(0, 2, 1, 3)
    k = k.reshape(B, S, num_heads, hd).transpose(0, 2, 1, 3)
    v = v.reshape(B, S, num_heads, hd).transpose(0, 2, 1, 3)
    s = jnp.einsum("bhqd,bhkd->bhqk", q, k) / math.sqrt(hd)
    p = jax.nn.softmax(s, axis=-1)
    a = jnp.einsum("bhqk,bhkd->bhqd", p, v).transpose(0, 2, 1, 3).reshape(B, S, D)
    a = a @ params["wo"] + params["bo"]
    x1 = x + a
    h2 = ln(x1, params["ln2_g"], params["ln2_b"])
    z = h2 @ params["w1"] + params["b1"]
    z = 0.5 * z * (1.0 + jnp.tanh(0.7978845608028654 * (z + 0.044715 * z ** 3)))
    z = z @ params["w2"] + params["b2"]
    return x1 + z


if __name__ == "__main__":
    # Small config consistent with SiglipVisionConfig semantics.
    # I=768 with the default 512-wide MLP tile exercises both a full and a remainder tile.
    B, S = 2, 32
    D, I, H = 128, 768, 4          # hidden, intermediate, num_heads (head_dim = 32)
    eps = 1e-6

    key = jax.random.PRNGKey(0)
    ks = jax.random.split(key, 10)
    scale = 0.02
    params = {
        "ln1_g": jnp.ones((1, D), jnp.float32),
        "ln1_b": jnp.zeros((1, D), jnp.float32),
        "wqkv": scale * jax.random.normal(ks[0], (D, 3 * D), jnp.float32),
        "bqkv": scale * jax.random.normal(ks[1], (1, 3 * D), jnp.float32),
        "wo":   scale * jax.random.normal(ks[2], (D, D), jnp.float32),
        "bo":   scale * jax.random.normal(ks[3], (1, D), jnp.float32),
        "ln2_g": jnp.ones((1, D), jnp.float32),
        "ln2_b": jnp.zeros((1, D), jnp.float32),
        "w1":   scale * jax.random.normal(ks[4], (D, I), jnp.float32),
        "b1":   scale * jax.random.normal(ks[5], (1, I), jnp.float32),
        "w2":   scale * jax.random.normal(ks[6], (I, D), jnp.float32),
        "b2":   scale * jax.random.normal(ks[7], (1, D), jnp.float32),
    }
    x = jax.random.normal(ks[8], (B, S, D), jnp.float32)

    out = siglip_encoder_layer(x, params, num_heads=H, eps=eps)
    out = jax.block_until_ready(out)

    ref = _reference(x, params, num_heads=H, eps=eps)
    assert out.shape == (B, S, D)
    # Kernel runs matmuls with bf16 operands (f32 accumulation) and an approximate EUP
    # reciprocal in the softmax, so compare against the f32 reference with a bf16 tolerance.
    assert jnp.allclose(out, ref, atol=2e-2, rtol=2e-2), "mismatch vs pure-JAX reference"
    print("KERNEL_OK")
</pallas_src>

<mosaic_0001>
module attributes {stable_mosaic.version = 11 : i64} {
  func.func @_encoder_layer_kernel(%arg0: i32, %arg1: memref<1x32x128xf32, #tpu.memory_space<vmem>>, %arg2: memref<1x128xf32, #tpu.memory_space<vmem>>, %arg3: memref<1x128xf32, #tpu.memory_space<vmem>>, %arg4: memref<128x384xbf16, #tpu.memory_space<vmem>>, %arg5: memref<1x384xf32, #tpu.memory_space<vmem>>, %arg6: memref<128x128xbf16, #tpu.memory_space<vmem>>, %arg7: memref<1x128xf32, #tpu.memory_space<vmem>>, %arg8: memref<1x128xf32, #tpu.memory_space<vmem>>, %arg9: memref<1x128xf32, #tpu.memory_space<vmem>>, %arg10: memref<128x768xbf16, #tpu.memory_space<vmem>>, %arg11: memref<1x768xf32, #tpu.memory_space<vmem>>, %arg12: memref<768x128xbf16, #tpu.memory_space<vmem>>, %arg13: memref<1x128xf32, #tpu.memory_space<vmem>>, %arg14: memref<1x32x128xf32, #tpu.memory_space<vmem>>) attributes {dimension_semantics = [#tpu.dimension_semantics<parallel>], iteration_bounds = array<i64: 2>, scalar_prefetch = 0 : i64, scratch_operands = 0 : i64, tpu.core_type = #tpu.core_type<tc>, window_params = [{transform_indices = @transform_0, window_bounds = array<i64: 1, 32, 128>}, {pipeline_mode = #tpu.pipeline_mode<synchronous>, transform_indices = @transform_1, window_bounds = array<i64: 1, 128>}, {pipeline_mode = #tpu.pipeline_mode<synchronous>, transform_indices = @transform_2, window_bounds = array<i64: 1, 128>}, {pipeline_mode = #tpu.pipeline_mode<synchronous>, transform_indices = @transform_3, window_bounds = array<i64: 128, 384>}, {pipeline_mode = #tpu.pipeline_mode<synchronous>, transform_indices = @transform_4, window_bounds = array<i64: 1, 384>}, {pipeline_mode = #tpu.pipeline_mode<synchronous>, transform_indices = @transform_5, window_bounds = array<i64: 128, 128>}, {pipeline_mode = #tpu.pipeline_mode<synchronous>, transform_indices = @transform_6, window_bounds = array<i64: 1, 128>}, {pipeline_mode = #tpu.pipeline_mode<synchronous>, transform_indices = @transform_7, window_bounds = array<i64: 1, 128>}, {pipeline_mode = #tpu.pipeline_mode<synchronous>, transform_indices = @transform_8, window_bounds = array<i64: 1, 128>}, {pipeline_mode = #tpu.pipeline_mode<synchronous>, transform_indices = @transform_9, window_bounds = array<i64: 128, 768>}, {pipeline_mode = #tpu.pipeline_mode<synchronous>, transform_indices = @transform_10, window_bounds = array<i64: 1, 768>}, {pipeline_mode = #tpu.pipeline_mode<synchronous>, transform_indices = @transform_11, window_bounds = array<i64: 768, 128>}, {pipeline_mode = #tpu.pipeline_mode<synchronous>, transform_indices = @transform_12, window_bounds = array<i64: 1, 128>}, {transform_indices = @transform_13, window_bounds = array<i64: 1, 32, 128>}]} {
    %c0 = arith.constant 0 : index
    %c0_0 = arith.constant 0 : index
    %c0_1 = arith.constant 0 : index
    %0 = vector.load %arg1[%c0, %c0_0, %c0_1] : memref<1x32x128xf32, #tpu.memory_space<vmem>>, vector<1x32x128xf32>
    %1 = vector.shape_cast %0 : vector<1x32x128xf32> to vector<32x128xf32>
    %cst = arith.constant dense<0.000000e+00> : vector<32xf32>
    %2 = vector.multi_reduction <add>, %1, %cst [1] : vector<32x128xf32> to vector<32xf32>
    %3 = vector.shape_cast %2 : vector<32xf32> to vector<32x1xf32>
    %cst_2 = arith.constant 1.280000e+02 : f32
    %4 = vector.broadcast %cst_2 : f32 to vector<32x1xf32>
    %5 = arith.divf %3, %4 : vector<32x1xf32>
    %6 = vector.broadcast %5 : vector<32x1xf32> to vector<32x128xf32>
    %7 = arith.subf %1, %6 : vector<32x128xf32>
    %8 = arith.mulf %7, %7 : vector<32x128xf32>
    %cst_3 = arith.constant dense<0.000000e+00> : vector<32xf32>
    %9 = vector.multi_reduction <add>, %8, %cst_3 [1] : vector<32x128xf32> to vector<32xf32>
    %10 = vector.shape_cast %9 : vector<32xf32> to vector<32x1xf32>
    %cst_4 = arith.constant 1.280000e+02 : f32
    %11 = vector.broadcast %cst_4 : f32 to vector<32x1xf32>
    %12 = arith.divf %10, %11 : vector<32x1xf32>
    %13 = vector.broadcast %5 : vector<32x1xf32> to vector<32x128xf32>
    %14 = arith.subf %1, %13 : vector<32x128xf32>
    %cst_5 = arith.constant 9.99999997E-7 : f32
    %15 = vector.broadcast %cst_5 : f32 to vector<32x1xf32>
    %16 = arith.addf %12, %15 : vector<32x1xf32>
    %17 = math.rsqrt %16 : vector<32x1xf32>
    %18 = vector.broadcast %17 : vector<32x1xf32> to vector<32x128xf32>
    %19 = arith.mulf %14, %18 : vector<32x128xf32>
    %c0_6 = arith.constant 0 : index
    %c0_7 = arith.constant 0 : index
    %20 = vector.load %arg2[%c0_6, %c0_7] : memref<1x128xf32, #tpu.memory_space<vmem>>, vector<1x128xf32>
    %21 = vector.broadcast %20 : vector<1x128xf32> to vector<32x128xf32>
    %22 = arith.mulf %19, %21 : vector<32x128xf32>
    %c0_8 = arith.constant 0 : index
    %c0_9 = arith.constant 0 : index
    %23 = vector.load %arg3[%c0_8, %c0_9] : memref<1x128xf32, #tpu.memory_space<vmem>>, vector<1x128xf32>
    %24 = vector.broadcast %23 : vector<1x128xf32> to vector<32x128xf32>
    %25 = arith.addf %22, %24 : vector<32x128xf32>
    %26 = arith.truncf %25 : vector<32x128xf32> to vector<32x128xbf16>
    %c0_10 = arith.constant 0 : index
    %c0_11 = arith.constant 0 : index
    %27 = vector.load %arg4[%c0_10, %c0_11] : memref<128x384xbf16, #tpu.memory_space<vmem>>, vector<128x384xbf16>
    %cst_12 = arith.constant dense<0.000000e+00> : vector<32x384xf32>
    %28 = tpu.matmul %26, %27, %cst_12 {dimension_numbers = #tpu.dot_dimension_numbers<[1], [0], [0], [1], [0, 0, 1, 1], [], []>} : vector<32x128xbf16>, vector<128x384xbf16>, vector<32x384xf32> -> vector<32x384xf32>
    %c0_13 = arith.constant 0 : index
    %c0_14 = arith.constant 0 : index
    %29 = vector.load %arg5[%c0_13, %c0_14] : memref<1x384xf32, #tpu.memory_space<vmem>>, vector<1x384xf32>
    %30 = vector.broadcast %29 : vector<1x384xf32> to vector<32x384xf32>
    %31 = arith.addf %28, %30 : vector<32x384xf32>
    %32 = arith.truncf %31 : vector<32x384xf32> to vector<32x384xbf16>
    %cst_15 = arith.constant 0.000000e+00 : f32
    %33 = vector.broadcast %cst_15 : f32 to vector<32x128xf32>
    %34 = vector.extract_strided_slice %32 {offsets = [0, 0], sizes = [32, 32], strides = [1, 1]} : vector<32x384xbf16> to vector<32x32xbf16>
    %35 = vector.extract_strided_slice %32 {offsets = [0, 128], sizes = [32, 32], strides = [1, 1]} : vector<32x384xbf16> to vector<32x32xbf16>
    %36 = vector.extract_strided_slice %32 {offsets = [0, 256], sizes = [32, 32], strides = [1, 1]} : vector<32x384xbf16> to vector<32x32xbf16>
    %cst_16 = arith.constant dense<0.000000e+00> : vector<32x32xf32>
    %37 = tpu.matmul %34, %35, %cst_16 {dimension_numbers = #tpu.dot_dimension_numbers<[1], [1], [0], [0], [0, 0, 1, 0], [], []>} : vector<32x32xbf16>, vector<32x32xbf16>, vector<32x32xf32> -> vector<32x32xf32>
    %cst_17 = arith.constant dense<0xFF800000> : vector<32xf32>
    %38 = vector.multi_reduction <maximumf>, %37, %cst_17 [1] : vector<32x32xf32> to vector<32xf32>
    %39 = vector.shape_cast %38 : vector<32xf32> to vector<32x1xf32>
    %40 = vector.broadcast %39 : vector<32x1xf32> to vector<32x32xf32>
    %41 = arith.subf %37, %40 : vector<32x32xf32>
    %42 = math.exp %41 : vector<32x32xf32>
    %cst_18 = arith.constant dense<0.000000e+00> : vector<32xf32>
    %43 = vector.multi_reduction <add>, %42, %cst_18 [1] : vector<32x32xf32> to vector<32xf32>
    %44 = vector.shape_cast %43 : vector<32xf32> to vector<32x1xf32>
    %45 = tpu.reciprocal %44 {approx = true} : vector<32x1xf32> -> vector<32x1xf32>
    %46 = vector.broadcast %45 : vector<32x1xf32> to vector<32x32xf32>
    %47 = arith.mulf %42, %46 : vector<32x32xf32>
    %48 = arith.truncf %47 : vector<32x32xf32> to vector<32x32xbf16>
    %cst_19 = arith.constant dense<0.000000e+00> : vector<32x32xf32>
    %49 = tpu.matmul %48, %36, %cst_19 {dimension_numbers = #tpu.dot_dimension_numbers<[1], [0], [0], [1], [0, 0, 1, 1], [], []>} : vector<32x32xbf16>, vector<32x32xbf16>, vector<32x32xf32> -> vector<32x32xf32>
    %50 = arith.truncf %49 : vector<32x32xf32> to vector<32x32xbf16>
    %c0_20 = arith.constant 0 : index
    %c0_21 = arith.constant 0 : index
    %51 = vector.load %arg6[%c0_20, %c0_21] : memref<128x128xbf16, #tpu.memory_space<vmem>>, vector<32x128xbf16>
    %cst_22 = arith.constant dense<0.000000e+00> : vector<32x128xf32>
    %52 = tpu.matmul %50, %51, %cst_22 {dimension_numbers = #tpu.dot_dimension_numbers<[1], [0], [0], [1], [0, 0, 1, 1], [], []>} : vector<32x32xbf16>, vector<32x128xbf16>, vector<32x128xf32> -> vector<32x128xf32>
    %53 = arith.addf %33, %52 : vector<32x128xf32>
    %54 = vector.extract_strided_slice %32 {offsets = [0, 32], sizes = [32, 32], strides = [1, 1]} : vector<32x384xbf16> to vector<32x32xbf16>
    %55 = vector.extract_strided_slice %32 {offsets = [0, 160], sizes = [32, 32], strides = [1, 1]} : vector<32x384xbf16> to vector<32x32xbf16>
    %56 = vector.extract_strided_slice %32 {offsets = [0, 288], sizes = [32, 32], strides = [1, 1]} : vector<32x384xbf16> to vector<32x32xbf16>
    %cst_23 = arith.constant dense<0.000000e+00> : vector<32x32xf32>
    %57 = tpu.matmul %54, %55, %cst_23 {dimension_numbers = #tpu.dot_dimension_numbers<[1], [1], [0], [0], [0, 0, 1, 0], [], []>} : vector<32x32xbf16>, vector<32x32xbf16>, vector<32x32xf32> -> vector<32x32xf32>
    %cst_24 = arith.constant dense<0xFF800000> : vector<32xf32>
    %58 = vector.multi_reduction <maximumf>, %57, %cst_24 [1] : vector<32x32xf32> to vector<32xf32>
    %59 = vector.shape_cast %58 : vector<32xf32> to vector<32x1xf32>
    %60 = vector.broadcast %59 : vector<32x1xf32> to vector<32x32xf32>
    %61 = arith.subf %57, %60 : vector<32x32xf32>
    %62 = math.exp %61 : vector<32x32xf32>
    %cst_25 = arith.constant dense<0.000000e+00> : vector<32xf32>
    %63 = vector.multi_reduction <add>, %62, %cst_25 [1] : vector<32x32xf32> to vector<32xf32>
    %64 = vector.shape_cast %63 : vector<32xf32> to vector<32x1xf32>
    %65 = tpu.reciprocal %64 {approx = true} : vector<32x1xf32> -> vector<32x1xf32>
    %66 = vector.broadcast %65 : vector<32x1xf32> to vector<32x32xf32>
    %67 = arith.mulf %62, %66 : vector<32x32xf32>
    %68 = arith.truncf %67 : vector<32x32xf32> to vector<32x32xbf16>
    %cst_26 = arith.constant dense<0.000000e+00> : vector<32x32xf32>
    %69 = tpu.matmul %68, %56, %cst_26 {dimension_numbers = #tpu.dot_dimension_numbers<[1], [0], [0], [1], [0, 0, 1, 1], [], []>} : vector<32x32xbf16>, vector<32x32xbf16>, vector<32x32xf32> -> vector<32x32xf32>
    %70 = arith.truncf %69 : vector<32x32xf32> to vector<32x32xbf16>
    %c32 = arith.constant 32 : index
    %c0_27 = arith.constant 0 : index
    %71 = vector.load %arg6[%c32, %c0_27] : memref<128x128xbf16, #tpu.memory_space<vmem>>, vector<32x128xbf16>
    %cst_28 = arith.constant dense<0.000000e+00> : vector<32x128xf32>
    %72 = tpu.matmul %70, %71, %cst_28 {dimension_numbers = #tpu.dot_dimension_numbers<[1], [0], [0], [1], [0, 0, 1, 1], [], []>} : vector<32x32xbf16>, vector<32x128xbf16>, vector<32x128xf32> -> vector<32x128xf32>
    %73 = arith.addf %53, %72 : vector<32x128xf32>
    %74 = vector.extract_strided_slice %32 {offsets = [0, 64], sizes = [32, 32], strides = [1, 1]} : vector<32x384xbf16> to vector<32x32xbf16>
    %75 = vector.extract_strided_slice %32 {offsets = [0, 192], sizes = [32, 32], strides = [1, 1]} : vector<32x384xbf16> to vector<32x32xbf16>
    %76 = vector.extract_strided_slice %32 {offsets = [0, 320], sizes = [32, 32], strides = [1, 1]} : vector<32x384xbf16> to vector<32x32xbf16>
    %cst_29 = arith.constant dense<0.000000e+00> : vector<32x32xf32>
    %77 = tpu.matmul %74, %75, %cst_29 {dimension_numbers = #tpu.dot_dimension_numbers<[1], [1], [0], [0], [0, 0, 1, 0], [], []>} : vector<32x32xbf16>, vector<32x32xbf16>, vector<32x32xf32> -> vector<32x32xf32>
    %cst_30 = arith.constant dense<0xFF800000> : vector<32xf32>
    %78 = vector.multi_reduction <maximumf>, %77, %cst_30 [1] : vector<32x32xf32> to vector<32xf32>
    %79 = vector.shape_cast %78 : vector<32xf32> to vector<32x1xf32>
    %80 = vector.broadcast %79 : vector<32x1xf32> to vector<32x32xf32>
    %81 = arith.subf %77, %80 : vector<32x32xf32>
    %82 = math.exp %81 : vector<32x32xf32>
    %cst_31 = arith.constant dense<0.000000e+00> : vector<32xf32>
    %83 = vector.multi_reduction <add>, %82, %cst_31 [1] : vector<32x32xf32> to vector<32xf32>
    %84 = vector.shape_cast %83 : vector<32xf32> to vector<32x1xf32>
    %85 = tpu.reciprocal %84 {approx = true} : vector<32x1xf32> -> vector<32x1xf32>
    %86 = vector.broadcast %85 : vector<32x1xf32> to vector<32x32xf32>
    %87 = arith.mulf %82, %86 : vector<32x32xf32>
    %88 = arith.truncf %87 : vector<32x32xf32> to vector<32x32xbf16>
    %cst_32 = arith.constant dense<0.000000e+00> : vector<32x32xf32>
    %89 = tpu.matmul %88, %76, %cst_32 {dimension_numbers = #tpu.dot_dimension_numbers<[1], [0], [0], [1], [0, 0, 1, 1], [], []>} : vector<32x32xbf16>, vector<32x32xbf16>, vector<32x32xf32> -> vector<32x32xf32>
    %90 = arith.truncf %89 : vector<32x32xf32> to vector<32x32xbf16>
    %c64 = arith.constant 64 : index
    %c0_33 = arith.constant 0 : index
    %91 = vector.load %arg6[%c64, %c0_33] : memref<128x128xbf16, #tpu.memory_space<vmem>>, vector<32x128xbf16>
    %cst_34 = arith.constant dense<0.000000e+00> : vector<32x128xf32>
    %92 = tpu.matmul %90, %91, %cst_34 {dimension_numbers = #tpu.dot_dimension_numbers<[1], [0], [0], [1], [0, 0, 1, 1], [], []>} : vector<32x32xbf16>, vector<32x128xbf16>, vector<32x128xf32> -> vector<32x128xf32>
    %93 = arith.addf %73, %92 : vector<32x128xf32>
    %94 = vector.extract_strided_slice %32 {offsets = [0, 96], sizes = [32, 32], strides = [1, 1]} : vector<32x384xbf16> to vector<32x32xbf16>
    %95 = vector.extract_strided_slice %32 {offsets = [0, 224], sizes = [32, 32], strides = [1, 1]} : vector<32x384xbf16> to vector<32x32xbf16>
    %96 = vector.extract_strided_slice %32 {offsets = [0, 352], sizes = [32, 32], strides = [1, 1]} : vector<32x384xbf16> to vector<32x32xbf16>
    %cst_35 = arith.constant dense<0.000000e+00> : vector<32x32xf32>
    %97 = tpu.matmul %94, %95, %cst_35 {dimension_numbers = #tpu.dot_dimension_numbers<[1], [1], [0], [0], [0, 0, 1, 0], [], []>} : vector<32x32xbf16>, vector<32x32xbf16>, vector<32x32xf32> -> vector<32x32xf32>
    %cst_36 = arith.constant dense<0xFF800000> : vector<32xf32>
    %98 = vector.multi_reduction <maximumf>, %97, %cst_36 [1] : vector<32x32xf32> to vector<32xf32>
    %99 = vector.shape_cast %98 : vector<32xf32> to vector<32x1xf32>
    %100 = vector.broadcast %99 : vector<32x1xf32> to vector<32x32xf32>
    %101 = arith.subf %97, %100 : vector<32x32xf32>
    %102 = math.exp %101 : vector<32x32xf32>
    %cst_37 = arith.constant dense<0.000000e+00> : vector<32xf32>
    %103 = vector.multi_reduction <add>, %102, %cst_37 [1] : vector<32x32xf32> to vector<32xf32>
    %104 = vector.shape_cast %103 : vector<32xf32> to vector<32x1xf32>
    %105 = tpu.reciprocal %104 {approx = true} : vector<32x1xf32> -> vector<32x1xf32>
    %106 = vector.broadcast %105 : vector<32x1xf32> to vector<32x32xf32>
    %107 = arith.mulf %102, %106 : vector<32x32xf32>
    %108 = arith.truncf %107 : vector<32x32xf32> to vector<32x32xbf16>
    %cst_38 = arith.constant dense<0.000000e+00> : vector<32x32xf32>
    %109 = tpu.matmul %108, %96, %cst_38 {dimension_numbers = #tpu.dot_dimension_numbers<[1], [0], [0], [1], [0, 0, 1, 1], [], []>} : vector<32x32xbf16>, vector<32x32xbf16>, vector<32x32xf32> -> vector<32x32xf32>
    %110 = arith.truncf %109 : vector<32x32xf32> to vector<32x32xbf16>
    %c96 = arith.constant 96 : index
    %c0_39 = arith.constant 0 : index
    %111 = vector.load %arg6[%c96, %c0_39] : memref<128x128xbf16, #tpu.memory_space<vmem>>, vector<32x128xbf16>
    %cst_40 = arith.constant dense<0.000000e+00> : vector<32x128xf32>
    %112 = tpu.matmul %110, %111, %cst_40 {dimension_numbers = #tpu.dot_dimension_numbers<[1], [0], [0], [1], [0, 0, 1, 1], [], []>} : vector<32x32xbf16>, vector<32x128xbf16>, vector<32x128xf32> -> vector<32x128xf32>
    %113 = arith.addf %93, %112 : vector<32x128xf32>
    %114 = arith.addf %1, %113 : vector<32x128xf32>
    %c0_41 = arith.constant 0 : index
    %c0_42 = arith.constant 0 : index
    %115 = vector.load %arg7[%c0_41, %c0_42] : memref<1x128xf32, #tpu.memory_space<vmem>>, vector<1x128xf32>
    %116 = vector.broadcast %115 : vector<1x128xf32> to vector<32x128xf32>
    %117 = arith.addf %114, %116 : vector<32x128xf32>
    %cst_43 = arith.constant dense<0.000000e+00> : vector<32xf32>
    %118 = vector.multi_reduction <add>, %117, %cst_43 [1] : vector<32x128xf32> to vector<32xf32>
    %119 = vector.shape_cast %118 : vector<32xf32> to vector<32x1xf32>
    %cst_44 = arith.constant 1.280000e+02 : f32
    %120 = vector.broadcast %cst_44 : f32 to vector<32x1xf32>
    %121 = arith.divf %119, %120 : vector<32x1xf32>
    %122 = vector.broadcast %121 : vector<32x1xf32> to vector<32x128xf32>
    %123 = arith.subf %117, %122 : vector<32x128xf32>
    %124 = arith.mulf %123, %123 : vector<32x128xf32>
    %cst_45 = arith.constant dense<0.000000e+00> : vector<32xf32>
    %125 = vector.multi_reduction <add>, %124, %cst_45 [1] : vector<32x128xf32> to vector<32xf32>
    %126 = vector.shape_cast %125 : vector<32xf32> to vector<32x1xf32>
    %cst_46 = arith.constant 1.280000e+02 : f32
    %127 = vector.broadcast %cst_46 : f32 to vector<32x1xf32>
    %128 = arith.divf %126, %127 : vector<32x1xf32>
    %129 = vector.broadcast %121 : vector<32x1xf32> to vector<32x128xf32>
    %130 = arith.subf %117, %129 : vector<32x128xf32>
    %cst_47 = arith.constant 9.99999997E-7 : f32
    %131 = vector.broadcast %cst_47 : f32 to vector<32x1xf32>
    %132 = arith.addf %128, %131 : vector<32x1xf32>
    %133 = math.rsqrt %132 : vector<32x1xf32>
    %134 = vector.broadcast %133 : vector<32x1xf32> to vector<32x128xf32>
    %135 = arith.mulf %130, %134 : vector<32x128xf32>
    %c0_48 = arith.constant 0 : index
    %c0_49 = arith.constant 0 : index
    %136 = vector.load %arg8[%c0_48, %c0_49] : memref<1x128xf32, #tpu.memory_space<vmem>>, vector<1x128xf32>
    %137 = vector.broadcast %136 : vector<1x128xf32> to vector<32x128xf32>
    %138 = arith.mulf %135, %137 : vector<32x128xf32>
    %c0_50 = arith.constant 0 : index
    %c0_51 = arith.constant 0 : index
    %139 = vector.load %arg9[%c0_50, %c0_51] : memref<1x128xf32, #tpu.memory_space<vmem>>, vector<1x128xf32>
    %140 = vector.broadcast %139 : vector<1x128xf32> to vector<32x128xf32>
    %141 = arith.addf %138, %140 : vector<32x128xf32>
    %142 = arith.truncf %141 : vector<32x128xf32> to vector<32x128xbf16>
    %cst_52 = arith.constant 0.000000e+00 : f32
    %143 = vector.broadcast %cst_52 : f32 to vector<32x128xf32>
    %c0_53 = arith.constant 0 : index
    %c0_54 = arith.constant 0 : index
    %144 = vector.load %arg10[%c0_53, %c0_54] : memref<128x768xbf16, #tpu.memory_space<vmem>>, vector<128x512xbf16>
    %cst_55 = arith.constant dense<0.000000e+00> : vector<32x512xf32>
    %145 = tpu.matmul %142, %144, %cst_55 {dimension_numbers = #tpu.dot_dimension_numbers<[1], [0], [0], [1], [0, 0, 1, 1], [], []>} : vector<32x128xbf16>, vector<128x512xbf16>, vector<32x512xf32> -> vector<32x512xf32>
    %c0_56 = arith.constant 0 : index
    %c0_57 = arith.constant 0 : index
    %146 = vector.load %arg11[%c0_56, %c0_57] : memref<1x768xf32, #tpu.memory_space<vmem>>, vector<1x512xf32>
    %147 = vector.broadcast %146 : vector<1x512xf32> to vector<32x512xf32>
    %148 = arith.addf %145, %147 : vector<32x512xf32>
    %cst_58 = arith.constant 5.000000e-01 : f32
    %149 = vector.broadcast %cst_58 : f32 to vector<32x512xf32>
    %150 = arith.mulf %149, %148 : vector<32x512xf32>
    %cst_59 = arith.constant 4.471500e-02 : f32
    %151 = vector.broadcast %cst_59 : f32 to vector<32x512xf32>
    %152 = arith.mulf %151, %148 : vector<32x512xf32>
    %153 = arith.mulf %152, %148 : vector<32x512xf32>
    %154 = arith.mulf %153, %148 : vector<32x512xf32>
    %155 = arith.addf %148, %154 : vector<32x512xf32>
    %cst_60 = arith.constant 0.797884583 : f32
    %156 = vector.broadcast %cst_60 : f32 to vector<32x512xf32>
    %157 = arith.mulf %156, %155 : vector<32x512xf32>
    %158 = math.tanh %157 : vector<32x512xf32>
    %cst_61 = arith.constant 1.000000e+00 : f32
    %159 = vector.broadcast %cst_61 : f32 to vector<32x512xf32>
    %160 = arith.addf %159, %158 : vector<32x512xf32>
    %161 = arith.mulf %150, %160 : vector<32x512xf32>
    %162 = arith.truncf %161 : vector<32x512xf32> to vector<32x512xbf16>
    %c0_62 = arith.constant 0 : index
    %c0_63 = arith.constant 0 : index
    %163 = vector.load %arg12[%c0_62, %c0_63] : memref<768x128xbf16, #tpu.memory_space<vmem>>, vector<512x128xbf16>
    %cst_64 = arith.constant dense<0.000000e+00> : vector<32x128xf32>
    %164 = tpu.matmul %162, %163, %cst_64 {dimension_numbers = #tpu.dot_dimension_numbers<[1], [0], [0], [1], [0, 0, 1, 1], [], []>} : vector<32x512xbf16>, vector<512x128xbf16>, vector<32x128xf32> -> vector<32x128xf32>
    %165 = arith.addf %143, %164 : vector<32x128xf32>
    %c0_65 = arith.constant 0 : index
    %c512 = arith.constant 512 : index
    %166 = vector.load %arg10[%c0_65, %c512] : memref<128x768xbf16, #tpu.memory_space<vmem>>, vector<128x256xbf16>
    %cst_66 = arith.constant dense<0.000000e+00> : vector<32x256xf32>
    %167 = tpu.matmul %142, %166, %cst_66 {dimension_numbers = #tpu.dot_dimension_numbers<[1], [0], [0], [1], [0, 0, 1, 1], [], []>} : vector<32x128xbf16>, vector<128x256xbf16>, vector<32x256xf32> -> vector<32x256xf32>
    %c0_67 = arith.constant 0 : index
    %c512_68 = arith.constant 512 : index
    %168 = vector.load %arg11[%c0_67, %c512_68] : memref<1x768xf32, #tpu.memory_space<vmem>>, vector<1x256xf32>
    %169 = vector.broadcast %168 : vector<1x256xf32> to vector<32x256xf32>
    %170 = arith.addf %167, %169 : vector<32x256xf32>
    %cst_69 = arith.constant 5.000000e-01 : f32
    %171 = vector.broadcast %cst_69 : f32 to vector<32x256xf32>
    %172 = arith.mulf %171, %170 : vector<32x256xf32>
    %cst_70 = arith.constant 4.471500e-02 : f32
    %173 = vector.broadcast %cst_70 : f32 to vector<32x256xf32>
    %174 = arith.mulf %173, %170 : vector<32x256xf32>
    %175 = arith.mulf %174, %170 : vector<32x256xf32>
    %176 = arith.mulf %175, %170 : vector<32x256xf32>
    %177 = arith.addf %170, %176 : vector<32x256xf32>
    %cst_71 = arith.constant 0.797884583 : f32
    %178 = vector.broadcast %cst_71 : f32 to vector<32x256xf32>
    %179 = arith.mulf %178, %177 : vector<32x256xf32>
    %180 = math.tanh %179 : vector<32x256xf32>
    %cst_72 = arith.constant 1.000000e+00 : f32
    %181 = vector.broadcast %cst_72 : f32 to vector<32x256xf32>
    %182 = arith.addf %181, %180 : vector<32x256xf32>
    %183 = arith.mulf %172, %182 : vector<32x256xf32>
    %184 = arith.truncf %183 : vector<32x256xf32> to vector<32x256xbf16>
    %c512_73 = arith.constant 512 : index
    %c0_74 = arith.constant 0 : index
    %185 = vector.load %arg12[%c512_73, %c0_74] : memref<768x128xbf16, #tpu.memory_space<vmem>>, vector<256x128xbf16>
    %cst_75 = arith.constant dense<0.000000e+00> : vector<32x128xf32>
    %186 = tpu.matmul %184, %185, %cst_75 {dimension_numbers = #tpu.dot_dimension_numbers<[1], [0], [0], [1], [0, 0, 1, 1], [], []>} : vector<32x256xbf16>, vector<256x128xbf16>, vector<32x128xf32> -> vector<32x128xf32>
    %187 = arith.addf %165, %186 : vector<32x128xf32>
    %188 = arith.addf %117, %187 : vector<32x128xf32>
    %c0_76 = arith.constant 0 : index
    %c0_77 = arith.constant 0 : index
    %189 = vector.load %arg13[%c0_76, %c0_77] : memref<1x128xf32, #tpu.memory_space<vmem>>, vector<1x128xf32>
    %190 = vector.broadcast %189 : vector<1x128xf32> to vector<32x128xf32>
    %191 = arith.addf %188, %190 : vector<32x128xf32>
    %c0_78 = arith.constant 0 : index
    %c0_79 = arith.constant 0 : index
    %c0_80 = arith.constant 0 : index
    %192 = vector.load %arg14[%c0_78, %c0_79, %c0_80] : memref<1x32x128xf32, #tpu.memory_space<vmem>>, vector<1x32x128xf32>
    %193 = vector.shape_cast %192 : vector<1x32x128xf32> to vector<32x128xf32>
    %194 = vector.shape_cast %191 : vector<32x128xf32> to vector<1x32x128xf32>
    tpu.vector_store %arg14[%c0_78, %c0_79, %c0_80], %194 {strides = array<i32>} : memref<1x32x128xf32, #tpu.memory_space<vmem>>, vector<1x32x128xf32>,
    return
  }
  func.func @transform_0(%arg0: i32) -> (i32, i32, i32) {
    %c0_i32 = arith.constant 0 : i32
    %c0_i32_0 = arith.constant 0 : i32
    %c0_i32_1 = arith.constant 0 : i32
    return %arg0, %c0_i32, %c0_i32_0 : i32, i32, i32
  }
  func.func @transform_1(%arg0: i32) -> (i32, i32) {
    %c0_i32 = arith.constant 0 : i32
    %c0_i32_0 = arith.constant 0 : i32
    %c0_i32_1 = arith.constant 0 : i32
    return %c0_i32, %c0_i32_0 : i32, i32
  }
  func.func @transform_2(%arg0: i32) -> (i32, i32) {
    %c0_i32 = arith.constant 0 : i32
    %c0_i32_0 = arith.constant 0 : i32
    %c0_i32_1 = arith.constant 0 : i32
    return %c0_i32, %c0_i32_0 : i32, i32
  }
  func.func @transform_3(%arg0: i32) -> (i32, i32) {
    %c0_i32 = arith.constant 0 : i32
    %c0_i32_0 = arith.constant 0 : i32
    %c0_i32_1 = arith.constant 0 : i32
    return %c0_i32, %c0_i32_0 : i32, i32
  }
  func.func @transform_4(%arg0: i32) -> (i32, i32) {
    %c0_i32 = arith.constant 0 : i32
    %c0_i32_0 = arith.constant 0 : i32
    %c0_i32_1 = arith.constant 0 : i32
    return %c0_i32, %c0_i32_0 : i32, i32
  }
  func.func @transform_5(%arg0: i32) -> (i32, i32) {
    %c0_i32 = arith.constant 0 : i32
    %c0_i32_0 = arith.constant 0 : i32
    %c0_i32_1 = arith.constant 0 : i32
    return %c0_i32, %c0_i32_0 : i32, i32
  }
  func.func @transform_6(%arg0: i32) -> (i32, i32) {
    %c0_i32 = arith.constant 0 : i32
    %c0_i32_0 = arith.constant 0 : i32
    %c0_i32_1 = arith.constant 0 : i32
    return %c0_i32, %c0_i32_0 : i32, i32
  }
  func.func @transform_7(%arg0: i32) -> (i32, i32) {
    %c0_i32 = arith.constant 0 : i32
    %c0_i32_0 = arith.constant 0 : i32
    %c0_i32_1 = arith.constant 0 : i32
    return %c0_i32, %c0_i32_0 : i32, i32
  }
  func.func @transform_8(%arg0: i32) -> (i32, i32) {
    %c0_i32 = arith.constant 0 : i32
    %c0_i32_0 = arith.constant 0 : i32
    %c0_i32_1 = arith.constant 0 : i32
    return %c0_i32, %c0_i32_0 : i32, i32
  }
  func.func @transform_9(%arg0: i32) -> (i32, i32) {
    %c0_i32 = arith.constant 0 : i32
    %c0_i32_0 = arith.constant 0 : i32
    %c0_i32_1 = arith.constant 0 : i32
    return %c0_i32, %c0_i32_0 : i32, i32
  }
  func.func @transform_10(%arg0: i32) -> (i32, i32) {
    %c0_i32 = arith.constant 0 : i32
    %c0_i32_0 = arith.constant 0 : i32
    %c0_i32_1 = arith.constant 0 : i32
    return %c0_i32, %c0_i32_0 : i32, i32
  }
  func.func @transform_11(%arg0: i32) -> (i32, i32) {
    %c0_i32 = arith.constant 0 : i32
    %c0_i32_0 = arith.constant 0 : i32
    %c0_i32_1 = arith.constant 0 : i32
    return %c0_i32, %c0_i32_0 : i32, i32
  }
  func.func @transform_12(%arg0: i32) -> (i32, i32) {
    %c0_i32 = arith.constant 0 : i32
    %c0_i32_0 = arith.constant 0 : i32
    %c0_i32_1 = arith.constant 0 : i32
    return %c0_i32, %c0_i32_0 : i32, i32
  }
  func.func @transform_13(%arg0: i32) -> (i32, i32, i32) {
    %c0_i32 = arith.constant 0 : i32
    %c0_i32_0 = arith.constant 0 : i32
    %c0_i32_1 = arith.constant 0 : i32
    return %arg0, %c0_i32, %c0_i32_0 : i32, i32, i32
  }
}

module attributes {stable_mosaic.version = 11 : i64} {
  func.func @_encoder_layer_kernel(%arg0: i32, %arg1: memref<1x32x128xf32, #tpu.memory_space<vmem>>, %arg2: memref<1x128xf32, #tpu.memory_space<vmem>>, %arg3: memref<1x128xf32, #tpu.memory_space<vmem>>, %arg4: memref<128x384xbf16, #tpu.memory_space<vmem>>, %arg5: memref<1x384xf32, #tpu.memory_space<vmem>>, %arg6: memref<128x128xbf16, #tpu.memory_space<vmem>>, %arg7: memref<1x128xf32, #tpu.memory_space<vmem>>, %arg8: memref<1x128xf32, #tpu.memory_space<vmem>>, %arg9: memref<1x128xf32, #tpu.memory_space<vmem>>, %arg10: memref<128x768xbf16, #tpu.memory_space<vmem>>, %arg11: memref<1x768xf32, #tpu.memory_space<vmem>>, %arg12: memref<768x128xbf16, #tpu.memory_space<vmem>>, %arg13: memref<1x128xf32, #tpu.memory_space<vmem>>, %arg14: memref<1x32x128xf32, #tpu.memory_space<vmem>>) attributes {dimension_semantics = [#tpu.dimension_semantics<parallel>], iteration_bounds = array<i64: 2>, scalar_prefetch = 0 : i64, scratch_operands = 0 : i64, tpu.core_type = #tpu.core_type<tc>, window_params = [{transform_indices = @transform_0, window_bounds = array<i64: 1, 32, 128>}, {pipeline_mode = #tpu.pipeline_mode<synchronous>, transform_indices = @transform_1, window_bounds = array<i64: 1, 128>}, {pipeline_mode = #tpu.pipeline_mode<synchronous>, transform_indices = @transform_2, window_bounds = array<i64: 1, 128>}, {pipeline_mode = #tpu.pipeline_mode<synchronous>, transform_indices = @transform_3, window_bounds = array<i64: 128, 384>}, {pipeline_mode = #tpu.pipeline_mode<synchronous>, transform_indices = @transform_4, window_bounds = array<i64: 1, 384>}, {pipeline_mode = #tpu.pipeline_mode<synchronous>, transform_indices = @transform_5, window_bounds = array<i64: 128, 128>}, {pipeline_mode = #tpu.pipeline_mode<synchronous>, transform_indices = @transform_6, window_bounds = array<i64: 1, 128>}, {pipeline_mode = #tpu.pipeline_mode<synchronous>, transform_indices = @transform_7, window_bounds = array<i64: 1, 128>}, {pipeline_mode = #tpu.pipeline_mode<synchronous>, transform_indices = @transform_8, window_bounds = array<i64: 1, 128>}, {pipeline_mode = #tpu.pipeline_mode<synchronous>, transform_indices = @transform_9, window_bounds = array<i64: 128, 768>}, {pipeline_mode = #tpu.pipeline_mode<synchronous>, transform_indices = @transform_10, window_bounds = array<i64: 1, 768>}, {pipeline_mode = #tpu.pipeline_mode<synchronous>, transform_indices = @transform_11, window_bounds = array<i64: 768, 128>}, {pipeline_mode = #tpu.pipeline_mode<synchronous>, transform_indices = @transform_12, window_bounds = array<i64: 1, 128>}, {transform_indices = @transform_13, window_bounds = array<i64: 1, 32, 128>}]} {
    %c0 = arith.constant 0 : index
    %c0_0 = arith.constant 0 : index
    %c0_1 = arith.constant 0 : index
    %0 = vector.load %arg1[%c0, %c0_0, %c0_1] : memref<1x32x128xf32, #tpu.memory_space<vmem>>, vector<1x32x128xf32>
    %1 = vector.shape_cast %0 : vector<1x32x128xf32> to vector<32x128xf32>
    %cst = arith.constant dense<0.000000e+00> : vector<32xf32>
    %2 = vector.multi_reduction <add>, %1, %cst [1] : vector<32x128xf32> to vector<32xf32>
    %3 = vector.shape_cast %2 : vector<32xf32> to vector<32x1xf32>
    %cst_2 = arith.constant 1.280000e+02 : f32
    %4 = vector.broadcast %cst_2 : f32 to vector<32x1xf32>
    %5 = arith.divf %3, %4 : vector<32x1xf32>
    %6 = vector.broadcast %5 : vector<32x1xf32> to vector<32x128xf32>
    %7 = arith.subf %1, %6 : vector<32x128xf32>
    %8 = arith.mulf %7, %7 : vector<32x128xf32>
    %cst_3 = arith.constant dense<0.000000e+00> : vector<32xf32>
    %9 = vector.multi_reduction <add>, %8, %cst_3 [1] : vector<32x128xf32> to vector<32xf32>
    %10 = vector.shape_cast %9 : vector<32xf32> to vector<32x1xf32>
    %cst_4 = arith.constant 1.280000e+02 : f32
    %11 = vector.broadcast %cst_4 : f32 to vector<32x1xf32>
    %12 = arith.divf %10, %11 : vector<32x1xf32>
    %13 = vector.broadcast %5 : vector<32x1xf32> to vector<32x128xf32>
    %14 = arith.subf %1, %13 : vector<32x128xf32>
    %cst_5 = arith.constant 9.99999997E-7 : f32
    %15 = vector.broadcast %cst_5 : f32 to vector<32x1xf32>
    %16 = arith.addf %12, %15 : vector<32x1xf32>
    %17 = math.rsqrt %16 : vector<32x1xf32>
    %18 = vector.broadcast %17 : vector<32x1xf32> to vector<32x128xf32>
    %19 = arith.mulf %14, %18 : vector<32x128xf32>
    %c0_6 = arith.constant 0 : index
    %c0_7 = arith.constant 0 : index
    %20 = vector.load %arg2[%c0_6, %c0_7] : memref<1x128xf32, #tpu.memory_space<vmem>>, vector<1x128xf32>
    %21 = vector.broadcast %20 : vector<1x128xf32> to vector<32x128xf32>
    %22 = arith.mulf %19, %21 : vector<32x128xf32>
    %c0_8 = arith.constant 0 : index
    %c0_9 = arith.constant 0 : index
    %23 = vector.load %arg3[%c0_8, %c0_9] : memref<1x128xf32, #tpu.memory_space<vmem>>, vector<1x128xf32>
    %24 = vector.broadcast %23 : vector<1x128xf32> to vector<32x128xf32>
    %25 = arith.addf %22, %24 : vector<32x128xf32>
    %26 = arith.truncf %25 : vector<32x128xf32> to vector<32x128xbf16>
    %c0_10 = arith.constant 0 : index
    %c0_11 = arith.constant 0 : index
    %27 = vector.load %arg4[%c0_10, %c0_11] : memref<128x384xbf16, #tpu.memory_space<vmem>>, vector<128x384xbf16>
    %cst_12 = arith.constant dense<0.000000e+00> : vector<32x384xf32>
    %28 = tpu.matmul %26, %27, %cst_12 {dimension_numbers = #tpu.dot_dimension_numbers<[1], [0], [0], [1], [0, 0, 1, 1], [], []>} : vector<32x128xbf16>, vector<128x384xbf16>, vector<32x384xf32> -> vector<32x384xf32>
    %c0_13 = arith.constant 0 : index
    %c0_14 = arith.constant 0 : index
    %29 = vector.load %arg5[%c0_13, %c0_14] : memref<1x384xf32, #tpu.memory_space<vmem>>, vector<1x384xf32>
    %30 = vector.broadcast %29 : vector<1x384xf32> to vector<32x384xf32>
    %31 = arith.addf %28, %30 : vector<32x384xf32>
    %32 = arith.truncf %31 : vector<32x384xf32> to vector<32x384xbf16>
    %cst_15 = arith.constant 0.000000e+00 : f32
    %33 = vector.broadcast %cst_15 : f32 to vector<32x128xf32>
    %34 = vector.extract_strided_slice %32 {offsets = [0, 0], sizes = [32, 32], strides = [1, 1]} : vector<32x384xbf16> to vector<32x32xbf16>
    %35 = vector.extract_strided_slice %32 {offsets = [0, 128], sizes = [32, 32], strides = [1, 1]} : vector<32x384xbf16> to vector<32x32xbf16>
    %36 = vector.extract_strided_slice %32 {offsets = [0, 256], sizes = [32, 32], strides = [1, 1]} : vector<32x384xbf16> to vector<32x32xbf16>
    %cst_16 = arith.constant dense<0.000000e+00> : vector<32x32xf32>
    %37 = tpu.matmul %34, %35, %cst_16 {dimension_numbers = #tpu.dot_dimension_numbers<[1], [1], [0], [0], [0, 0, 1, 0], [], []>} : vector<32x32xbf16>, vector<32x32xbf16>, vector<32x32xf32> -> vector<32x32xf32>
    %cst_17 = arith.constant dense<0xFF800000> : vector<32xf32>
    %38 = vector.multi_reduction <maximumf>, %37, %cst_17 [1] : vector<32x32xf32> to vector<32xf32>
    %39 = vector.shape_cast %38 : vector<32xf32> to vector<32x1xf32>
    %40 = vector.broadcast %39 : vector<32x1xf32> to vector<32x32xf32>
    %41 = arith.subf %37, %40 : vector<32x32xf32>
    %42 = math.exp %41 : vector<32x32xf32>
    %cst_18 = arith.constant dense<0.000000e+00> : vector<32xf32>
    %43 = vector.multi_reduction <add>, %42, %cst_18 [1] : vector<32x32xf32> to vector<32xf32>
    %44 = vector.shape_cast %43 : vector<32xf32> to vector<32x1xf32>
    %45 = tpu.reciprocal %44 {approx = true} : vector<32x1xf32> -> vector<32x1xf32>
    %46 = vector.broadcast %45 : vector<32x1xf32> to vector<32x32xf32>
    %47 = arith.mulf %42, %46 : vector<32x32xf32>
    %48 = arith.truncf %47 : vector<32x32xf32> to vector<32x32xbf16>
    %cst_19 = arith.constant dense<0.000000e+00> : vector<32x32xf32>
    %49 = tpu.matmul %48, %36, %cst_19 {dimension_numbers = #tpu.dot_dimension_numbers<[1], [0], [0], [1], [0, 0, 1, 1], [], []>} : vector<32x32xbf16>, vector<32x32xbf16>, vector<32x32xf32> -> vector<32x32xf32>
    %50 = arith.truncf %49 : vector<32x32xf32> to vector<32x32xbf16>
    %c0_20 = arith.constant 0 : index
    %c0_21 = arith.constant 0 : index
    %51 = vector.load %arg6[%c0_20, %c0_21] : memref<128x128xbf16, #tpu.memory_space<vmem>>, vector<32x128xbf16>
    %cst_22 = arith.constant dense<0.000000e+00> : vector<32x128xf32>
    %52 = tpu.matmul %50, %51, %cst_22 {dimension_numbers = #tpu.dot_dimension_numbers<[1], [0], [0], [1], [0, 0, 1, 1], [], []>} : vector<32x32xbf16>, vector<32x128xbf16>, vector<32x128xf32> -> vector<32x128xf32>
    %53 = arith.addf %33, %52 : vector<32x128xf32>
    %54 = vector.extract_strided_slice %32 {offsets = [0, 32], sizes = [32, 32], strides = [1, 1]} : vector<32x384xbf16> to vector<32x32xbf16>
    %55 = vector.extract_strided_slice %32 {offsets = [0, 160], sizes = [32, 32], strides = [1, 1]} : vector<32x384xbf16> to vector<32x32xbf16>
    %56 = vector.extract_strided_slice %32 {offsets = [0, 288], sizes = [32, 32], strides = [1, 1]} : vector<32x384xbf16> to vector<32x32xbf16>
    %cst_23 = arith.constant dense<0.000000e+00> : vector<32x32xf32>
    %57 = tpu.matmul %54, %55, %cst_23 {dimension_numbers = #tpu.dot_dimension_numbers<[1], [1], [0], [0], [0, 0, 1, 0], [], []>} : vector<32x32xbf16>, vector<32x32xbf16>, vector<32x32xf32> -> vector<32x32xf32>
    %cst_24 = arith.constant dense<0xFF800000> : vector<32xf32>
    %58 = vector.multi_reduction <maximumf>, %57, %cst_24 [1] : vector<32x32xf32> to vector<32xf32>
    %59 = vector.shape_cast %58 : vector<32xf32> to vector<32x1xf32>
    %60 = vector.broadcast %59 : vector<32x1xf32> to vector<32x32xf32>
    %61 = arith.subf %57, %60 : vector<32x32xf32>
    %62 = math.exp %61 : vector<32x32xf32>
    %cst_25 = arith.constant dense<0.000000e+00> : vector<32xf32>
    %63 = vector.multi_reduction <add>, %62, %cst_25 [1] : vector<32x32xf32> to vector<32xf32>
    %64 = vector.shape_cast %63 : vector<32xf32> to vector<32x1xf32>
    %65 = tpu.reciprocal %64 {approx = true} : vector<32x1xf32> -> vector<32x1xf32>
    %66 = vector.broadcast %65 : vector<32x1xf32> to vector<32x32xf32>
    %67 = arith.mulf %62, %66 : vector<32x32xf32>
    %68 = arith.truncf %67 : vector<32x32xf32> to vector<32x32xbf16>
    %cst_26 = arith.constant dense<0.000000e+00> : vector<32x32xf32>
    %69 = tpu.matmul %68, %56, %cst_26 {dimension_numbers = #tpu.dot_dimension_numbers<[1], [0], [0], [1], [0, 0, 1, 1], [], []>} : vector<32x32xbf16>, vector<32x32xbf16>, vector<32x32xf32> -> vector<32x32xf32>
    %70 = arith.truncf %69 : vector<32x32xf32> to vector<32x32xbf16>
    %c32 = arith.constant 32 : index
    %c0_27 = arith.constant 0 : index
    %71 = vector.load %arg6[%c32, %c0_27] : memref<128x128xbf16, #tpu.memory_space<vmem>>, vector<32x128xbf16>
    %cst_28 = arith.constant dense<0.000000e+00> : vector<32x128xf32>
    %72 = tpu.matmul %70, %71, %cst_28 {dimension_numbers = #tpu.dot_dimension_numbers<[1], [0], [0], [1], [0, 0, 1, 1], [], []>} : vector<32x32xbf16>, vector<32x128xbf16>, vector<32x128xf32> -> vector<32x128xf32>
    %73 = arith.addf %53, %72 : vector<32x128xf32>
    %74 = vector.extract_strided_slice %32 {offsets = [0, 64], sizes = [32, 32], strides = [1, 1]} : vector<32x384xbf16> to vector<32x32xbf16>
    %75 = vector.extract_strided_slice %32 {offsets = [0, 192], sizes = [32, 32], strides = [1, 1]} : vector<32x384xbf16> to vector<32x32xbf16>
    %76 = vector.extract_strided_slice %32 {offsets = [0, 320], sizes = [32, 32], strides = [1, 1]} : vector<32x384xbf16> to vector<32x32xbf16>
    %cst_29 = arith.constant dense<0.000000e+00> : vector<32x32xf32>
    %77 = tpu.matmul %74, %75, %cst_29 {dimension_numbers = #tpu.dot_dimension_numbers<[1], [1], [0], [0], [0, 0, 1, 0], [], []>} : vector<32x32xbf16>, vector<32x32xbf16>, vector<32x32xf32> -> vector<32x32xf32>
    %cst_30 = arith.constant dense<0xFF800000> : vector<32xf32>
    %78 = vector.multi_reduction <maximumf>, %77, %cst_30 [1] : vector<32x32xf32> to vector<32xf32>
    %79 = vector.shape_cast %78 : vector<32xf32> to vector<32x1xf32>
    %80 = vector.broadcast %79 : vector<32x1xf32> to vector<32x32xf32>
    %81 = arith.subf %77, %80 : vector<32x32xf32>
    %82 = math.exp %81 : vector<32x32xf32>
    %cst_31 = arith.constant dense<0.000000e+00> : vector<32xf32>
    %83 = vector.multi_reduction <add>, %82, %cst_31 [1] : vector<32x32xf32> to vector<32xf32>
    %84 = vector.shape_cast %83 : vector<32xf32> to vector<32x1xf32>
    %85 = tpu.reciprocal %84 {approx = true} : vector<32x1xf32> -> vector<32x1xf32>
    %86 = vector.broadcast %85 : vector<32x1xf32> to vector<32x32xf32>
    %87 = arith.mulf %82, %86 : vector<32x32xf32>
    %88 = arith.truncf %87 : vector<32x32xf32> to vector<32x32xbf16>
    %cst_32 = arith.constant dense<0.000000e+00> : vector<32x32xf32>
    %89 = tpu.matmul %88, %76, %cst_32 {dimension_numbers = #tpu.dot_dimension_numbers<[1], [0], [0], [1], [0, 0, 1, 1], [], []>} : vector<32x32xbf16>, vector<32x32xbf16>, vector<32x32xf32> -> vector<32x32xf32>
    %90 = arith.truncf %89 : vector<32x32xf32> to vector<32x32xbf16>
    %c64 = arith.constant 64 : index
    %c0_33 = arith.constant 0 : index
    %91 = vector.load %arg6[%c64, %c0_33] : memref<128x128xbf16, #tpu.memory_space<vmem>>, vector<32x128xbf16>
    %cst_34 = arith.constant dense<0.000000e+00> : vector<32x128xf32>
    %92 = tpu.matmul %90, %91, %cst_34 {dimension_numbers = #tpu.dot_dimension_numbers<[1], [0], [0], [1], [0, 0, 1, 1], [], []>} : vector<32x32xbf16>, vector<32x128xbf16>, vector<32x128xf32> -> vector<32x128xf32>
    %93 = arith.addf %73, %92 : vector<32x128xf32>
    %94 = vector.extract_strided_slice %32 {offsets = [0, 96], sizes = [32, 32], strides = [1, 1]} : vector<32x384xbf16> to vector<32x32xbf16>
    %95 = vector.extract_strided_slice %32 {offsets = [0, 224], sizes = [32, 32], strides = [1, 1]} : vector<32x384xbf16> to vector<32x32xbf16>
    %96 = vector.extract_strided_slice %32 {offsets = [0, 352], sizes = [32, 32], strides = [1, 1]} : vector<32x384xbf16> to vector<32x32xbf16>
    %cst_35 = arith.constant dense<0.000000e+00> : vector<32x32xf32>
    %97 = tpu.matmul %94, %95, %cst_35 {dimension_numbers = #tpu.dot_dimension_numbers<[1], [1], [0], [0], [0, 0, 1, 0], [], []>} : vector<32x32xbf16>, vector<32x32xbf16>, vector<32x32xf32> -> vector<32x32xf32>
    %cst_36 = arith.constant dense<0xFF800000> : vector<32xf32>
    %98 = vector.multi_reduction <maximumf>, %97, %cst_36 [1] : vector<32x32xf32> to vector<32xf32>
    %99 = vector.shape_cast %98 : vector<32xf32> to vector<32x1xf32>
    %100 = vector.broadcast %99 : vector<32x1xf32> to vector<32x32xf32>
    %101 = arith.subf %97, %100 : vector<32x32xf32>
    %102 = math.exp %101 : vector<32x32xf32>
    %cst_37 = arith.constant dense<0.000000e+00> : vector<32xf32>
    %103 = vector.multi_reduction <add>, %102, %cst_37 [1] : vector<32x32xf32> to vector<32xf32>
    %104 = vector.shape_cast %103 : vector<32xf32> to vector<32x1xf32>
    %105 = tpu.reciprocal %104 {approx = true} : vector<32x1xf32> -> vector<32x1xf32>
    %106 = vector.broadcast %105 : vector<32x1xf32> to vector<32x32xf32>
    %107 = arith.mulf %102, %106 : vector<32x32xf32>
    %108 = arith.truncf %107 : vector<32x32xf32> to vector<32x32xbf16>
    %cst_38 = arith.constant dense<0.000000e+00> : vector<32x32xf32>
    %109 = tpu.matmul %108, %96, %cst_38 {dimension_numbers = #tpu.dot_dimension_numbers<[1], [0], [0], [1], [0, 0, 1, 1], [], []>} : vector<32x32xbf16>, vector<32x32xbf16>, vector<32x32xf32> -> vector<32x32xf32>
    %110 = arith.truncf %109 : vector<32x32xf32> to vector<32x32xbf16>
    %c96 = arith.constant 96 : index
    %c0_39 = arith.constant 0 : index
    %111 = vector.load %arg6[%c96, %c0_39] : memref<128x128xbf16, #tpu.memory_space<vmem>>, vector<32x128xbf16>
    %cst_40 = arith.constant dense<0.000000e+00> : vector<32x128xf32>
    %112 = tpu.matmul %110, %111, %cst_40 {dimension_numbers = #tpu.dot_dimension_numbers<[1], [0], [0], [1], [0, 0, 1, 1], [], []>} : vector<32x32xbf16>, vector<32x128xbf16>, vector<32x128xf32> -> vector<32x128xf32>
    %113 = arith.addf %93, %112 : vector<32x128xf32>
    %114 = arith.addf %1, %113 : vector<32x128xf32>
    %c0_41 = arith.constant 0 : index
    %c0_42 = arith.constant 0 : index
    %115 = vector.load %arg7[%c0_41, %c0_42] : memref<1x128xf32, #tpu.memory_space<vmem>>, vector<1x128xf32>
    %116 = vector.broadcast %115 : vector<1x128xf32> to vector<32x128xf32>
    %117 = arith.addf %114, %116 : vector<32x128xf32>
    %cst_43 = arith.constant dense<0.000000e+00> : vector<32xf32>
    %118 = vector.multi_reduction <add>, %117, %cst_43 [1] : vector<32x128xf32> to vector<32xf32>
    %119 = vector.shape_cast %118 : vector<32xf32> to vector<32x1xf32>
    %cst_44 = arith.constant 1.280000e+02 : f32
    %120 = vector.broadcast %cst_44 : f32 to vector<32x1xf32>
    %121 = arith.divf %119, %120 : vector<32x1xf32>
    %122 = vector.broadcast %121 : vector<32x1xf32> to vector<32x128xf32>
    %123 = arith.subf %117, %122 : vector<32x128xf32>
    %124 = arith.mulf %123, %123 : vector<32x128xf32>
    %cst_45 = arith.constant dense<0.000000e+00> : vector<32xf32>
    %125 = vector.multi_reduction <add>, %124, %cst_45 [1] : vector<32x128xf32> to vector<32xf32>
    %126 = vector.shape_cast %125 : vector<32xf32> to vector<32x1xf32>
    %cst_46 = arith.constant 1.280000e+02 : f32
    %127 = vector.broadcast %cst_46 : f32 to vector<32x1xf32>
    %128 = arith.divf %126, %127 : vector<32x1xf32>
    %129 = vector.broadcast %121 : vector<32x1xf32> to vector<32x128xf32>
    %130 = arith.subf %117, %129 : vector<32x128xf32>
    %cst_47 = arith.constant 9.99999997E-7 : f32
    %131 = vector.broadcast %cst_47 : f32 to vector<32x1xf32>
    %132 = arith.addf %128, %131 : vector<32x1xf32>
    %133 = math.rsqrt %132 : vector<32x1xf32>
    %134 = vector.broadcast %133 : vector<32x1xf32> to vector<32x128xf32>
    %135 = arith.mulf %130, %134 : vector<32x128xf32>
    %c0_48 = arith.constant 0 : index
    %c0_49 = arith.constant 0 : index
    %136 = vector.load %arg8[%c0_48, %c0_49] : memref<1x128xf32, #tpu.memory_space<vmem>>, vector<1x128xf32>
    %137 = vector.broadcast %136 : vector<1x128xf32> to vector<32x128xf32>
    %138 = arith.mulf %135, %137 : vector<32x128xf32>
    %c0_50 = arith.constant 0 : index
    %c0_51 = arith.constant 0 : index
    %139 = vector.load %arg9[%c0_50, %c0_51] : memref<1x128xf32, #tpu.memory_space<vmem>>, vector<1x128xf32>
    %140 = vector.broadcast %139 : vector<1x128xf32> to vector<32x128xf32>
    %141 = arith.addf %138, %140 : vector<32x128xf32>
    %142 = arith.truncf %141 : vector<32x128xf32> to vector<32x128xbf16>
    %cst_52 = arith.constant 0.000000e+00 : f32
    %143 = vector.broadcast %cst_52 : f32 to vector<32x128xf32>
    %c0_53 = arith.constant 0 : index
    %c0_54 = arith.constant 0 : index
    %144 = vector.load %arg10[%c0_53, %c0_54] : memref<128x768xbf16, #tpu.memory_space<vmem>>, vector<128x512xbf16>
    %cst_55 = arith.constant dense<0.000000e+00> : vector<32x512xf32>
    %145 = tpu.matmul %142, %144, %cst_55 {dimension_numbers = #tpu.dot_dimension_numbers<[1], [0], [0], [1], [0, 0, 1, 1], [], []>} : vector<32x128xbf16>, vector<128x512xbf16>, vector<32x512xf32> -> vector<32x512xf32>
    %c0_56 = arith.constant 0 : index
    %c0_57 = arith.constant 0 : index
    %146 = vector.load %arg11[%c0_56, %c0_57] : memref<1x768xf32, #tpu.memory_space<vmem>>, vector<1x512xf32>
    %147 = vector.broadcast %146 : vector<1x512xf32> to vector<32x512xf32>
    %148 = arith.addf %145, %147 : vector<32x512xf32>
    %cst_58 = arith.constant 5.000000e-01 : f32
    %149 = vector.broadcast %cst_58 : f32 to vector<32x512xf32>
    %150 = arith.mulf %149, %148 : vector<32x512xf32>
    %cst_59 = arith.constant 4.471500e-02 : f32
    %151 = vector.broadcast %cst_59 : f32 to vector<32x512xf32>
    %152 = arith.mulf %151, %148 : vector<32x512xf32>
    %153 = arith.mulf %152, %148 : vector<32x512xf32>
    %154 = arith.mulf %153, %148 : vector<32x512xf32>
    %155 = arith.addf %148, %154 : vector<32x512xf32>
    %cst_60 = arith.constant 0.797884583 : f32
    %156 = vector.broadcast %cst_60 : f32 to vector<32x512xf32>
    %157 = arith.mulf %156, %155 : vector<32x512xf32>
    %158 = math.tanh %157 : vector<32x512xf32>
    %cst_61 = arith.constant 1.000000e+00 : f32
    %159 = vector.broadcast %cst_61 : f32 to vector<32x512xf32>
    %160 = arith.addf %159, %158 : vector<32x512xf32>
    %161 = arith.mulf %150, %160 : vector<32x512xf32>
    %162 = arith.truncf %161 : vector<32x512xf32> to vector<32x512xbf16>
    %c0_62 = arith.constant 0 : index
    %c0_63 = arith.constant 0 : index
    %163 = vector.load %arg12[%c0_62, %c0_63] : memref<768x128xbf16, #tpu.memory_space<vmem>>, vector<512x128xbf16>
    %cst_64 = arith.constant dense<0.000000e+00> : vector<32x128xf32>
    %164 = tpu.matmul %162, %163, %cst_64 {dimension_numbers = #tpu.dot_dimension_numbers<[1], [0], [0], [1], [0, 0, 1, 1], [], []>} : vector<32x512xbf16>, vector<512x128xbf16>, vector<32x128xf32> -> vector<32x128xf32>
    %165 = arith.addf %143, %164 : vector<32x128xf32>
    %c0_65 = arith.constant 0 : index
    %c512 = arith.constant 512 : index
    %166 = vector.load %arg10[%c0_65, %c512] : memref<128x768xbf16, #tpu.memory_space<vmem>>, vector<128x256xbf16>
    %cst_66 = arith.constant dense<0.000000e+00> : vector<32x256xf32>
    %167 = tpu.matmul %142, %166, %cst_66 {dimension_numbers = #tpu.dot_dimension_numbers<[1], [0], [0], [1], [0, 0, 1, 1], [], []>} : vector<32x128xbf16>, vector<128x256xbf16>, vector<32x256xf32> -> vector<32x256xf32>
    %c0_67 = arith.constant 0 : index
    %c512_68 = arith.constant 512 : index
    %168 = vector.load %arg11[%c0_67, %c512_68] : memref<1x768xf32, #tpu.memory_space<vmem>>, vector<1x256xf32>
    %169 = vector.broadcast %168 : vector<1x256xf32> to vector<32x256xf32>
    %170 = arith.addf %167, %169 : vector<32x256xf32>
    %cst_69 = arith.constant 5.000000e-01 : f32
    %171 = vector.broadcast %cst_69 : f32 to vector<32x256xf32>
    %172 = arith.mulf %171, %170 : vector<32x256xf32>
    %cst_70 = arith.constant 4.471500e-02 : f32
    %173 = vector.broadcast %cst_70 : f32 to vector<32x256xf32>
    %174 = arith.mulf %173, %170 : vector<32x256xf32>
    %175 = arith.mulf %174, %170 : vector<32x256xf32>
    %176 = arith.mulf %175, %170 : vector<32x256xf32>
    %177 = arith.addf %170, %176 : vector<32x256xf32>
    %cst_71 = arith.constant 0.797884583 : f32
    %178 = vector.broadcast %cst_71 : f32 to vector<32x256xf32>
    %179 = arith.mulf %178, %177 : vector<32x256xf32>
    %180 = math.tanh %179 : vector<32x256xf32>
    %cst_72 = arith.constant 1.000000e+00 : f32
    %181 = vector.broadcast %cst_72 : f32 to vector<32x256xf32>
    %182 = arith.addf %181, %180 : vector<32x256xf32>
    %183 = arith.mulf %172, %182 : vector<32x256xf32>
    %184 = arith.truncf %183 : vector<32x256xf32> to vector<32x256xbf16>
    %c512_73 = arith.constant 512 : index
    %c0_74 = arith.constant 0 : index
    %185 = vector.load %arg12[%c512_73, %c0_74] : memref<768x128xbf16, #tpu.memory_space<vmem>>, vector<256x128xbf16>
    %cst_75 = arith.constant dense<0.000000e+00> : vector<32x128xf32>
    %186 = tpu.matmul %184, %185, %cst_75 {dimension_numbers = #tpu.dot_dimension_numbers<[1], [0], [0], [1], [0, 0, 1, 1], [], []>} : vector<32x256xbf16>, vector<256x128xbf16>, vector<32x128xf32> -> vector<32x128xf32>
    %187 = arith.addf %165, %186 : vector<32x128xf32>
    %188 = arith.addf %117, %187 : vector<32x128xf32>
    %c0_76 = arith.constant 0 : index
    %c0_77 = arith.constant 0 : index
    %189 = vector.load %arg13[%c0_76, %c0_77] : memref<1x128xf32, #tpu.memory_space<vmem>>, vector<1x128xf32>
    %190 = vector.broadcast %189 : vector<1x128xf32> to vector<32x128xf32>
    %191 = arith.addf %188, %190 : vector<32x128xf32>
    %c0_78 = arith.constant 0 : index
    %c0_79 = arith.constant 0 : index
    %c0_80 = arith.constant 0 : index
    %192 = vector.load %arg14[%c0_78, %c0_79, %c0_80] : memref<1x32x128xf32, #tpu.memory_space<vmem>>, vector<1x32x128xf32>
    %193 = vector.shape_cast %192 : vector<1x32x128xf32> to vector<32x128xf32>
    %194 = vector.shape_cast %191 : vector<32x128xf32> to vector<1x32x128xf32>
    tpu.vector_store %arg14[%c0_78, %c0_79, %c0_80], %194 {strides = array<i32>} : memref<1x32x128xf32, #tpu.memory_space<vmem>>, vector<1x32x128xf32>,
    return
  }
  func.func @transform_0(%arg0: i32) -> (i32, i32, i32) {
    %c0_i32 = arith.constant 0 : i32
    %c0_i32_0 = arith.constant 0 : i32
    %c0_i32_1 = arith.constant 0 : i32
    return %arg0, %c0_i32, %c0_i32_0 : i32, i32, i32
  }
  func.func @transform_1(%arg0: i32) -> (i32, i32) {
    %c0_i32 = arith.constant 0 : i32
    %c0_i32_0 = arith.constant 0 : i32
    %c0_i32_1 = arith.constant 0 : i32
    return %c0_i32, %c0_i32_0 : i32, i32
  }
  func.func @transform_2(%arg0: i32) -> (i32, i32) {
    %c0_i32 = arith.constant 0 : i32
    %c0_i32_0 = arith.constant 0 : i32
    %c0_i32_1 = arith.constant 0 : i32
    return %c0_i32, %c0_i32_0 : i32, i32
  }
  func.func @transform_3(%arg0: i32) -> (i32, i32) {
    %c0_i32 = arith.constant 0 : i32
    %c0_i32_0 = arith.constant 0 : i32
    %c0_i32_1 = arith.constant 0 : i32
    return %c0_i32, %c0_i32_0 : i32, i32
  }
  func.func @transform_4(%arg0: i32) -> (i32, i32) {
    %c0_i32 = arith.constant 0 : i32
    %c0_i32_0 = arith.constant 0 : i32
    %c0_i32_1 = arith.constant 0 : i32
    return %c0_i32, %c0_i32_0 : i32, i32
  }
  func.func @transform_5(%arg0: i32) -> (i32, i32) {
    %c0_i32 = arith.constant 0 : i32
    %c0_i32_0 = arith.constant 0 : i32
    %c0_i32_1 = arith.constant 0 : i32
    return %c0_i32, %c0_i32_0 : i32, i32
  }
  func.func @transform_6(%arg0: i32) -> (i32, i32) {
    %c0_i32 = arith.constant 0 : i32
    %c0_i32_0 = arith.constant 0 : i32
    %c0_i32_1 = arith.constant 0 : i32
    return %c0_i32, %c0_i32_0 : i32, i32
  }
  func.func @transform_7(%arg0: i32) -> (i32, i32) {
    %c0_i32 = arith.constant 0 : i32
    %c0_i32_0 = arith.constant 0 : i32
    %c0_i32_1 = arith.constant 0 : i32
    return %c0_i32, %c0_i32_0 : i32, i32
  }
  func.func @transform_8(%arg0: i32) -> (i32, i32) {
    %c0_i32 = arith.constant 0 : i32
    %c0_i32_0 = arith.constant 0 : i32
    %c0_i32_1 = arith.constant 0 : i32
    return %c0_i32, %c0_i32_0 : i32, i32
  }
  func.func @transform_9(%arg0: i32) -> (i32, i32) {
    %c0_i32 = arith.constant 0 : i32
    %c0_i32_0 = arith.constant 0 : i32
    %c0_i32_1 = arith.constant 0 : i32
    return %c0_i32, %c0_i32_0 : i32, i32
  }
  func.func @transform_10(%arg0: i32) -> (i32, i32) {
    %c0_i32 = arith.constant 0 : i32
    %c0_i32_0 = arith.constant 0 : i32
    %c0_i32_1 = arith.constant 0 : i32
    return %c0_i32, %c0_i32_0 : i32, i32
  }
  func.func @transform_11(%arg0: i32) -> (i32, i32) {
    %c0_i32 = arith.constant 0 : i32
    %c0_i32_0 = arith.constant 0 : i32
    %c0_i32_1 = arith.constant 0 : i32
    return %c0_i32, %c0_i32_0 : i32, i32
  }
  func.func @transform_12(%arg0: i32) -> (i32, i32) {
    %c0_i32 = arith.constant 0 : i32
    %c0_i32_0 = arith.constant 0 : i32
    %c0_i32_1 = arith.constant 0 : i32
    return %c0_i32, %c0_i32_0 : i32, i32
  }
  func.func @transform_13(%arg0: i32) -> (i32, i32, i32) {
    %c0_i32 = arith.constant 0 : i32
    %c0_i32_0 = arith.constant 0 : i32
    %c0_i32_1 = arith.constant 0 : i32
    return %arg0, %c0_i32, %c0_i32_0 : i32, i32, i32
  }
}

</mosaic_0001>

<llo_original>
// kernel: tpu_custom_call.1
$region0: #{tpu_custom_call.1}
  #allocation0 [shape = 'u32[]', space=smem, size = 0x4, offset = 0x4, fixed_abs, tag = 'smem constant byte address 0x4 - core index']
  #allocation1 [shape = 'u32[72,128]{1,0:T(1,128)}', space=vmem, size = 0x9000, scoped, tag = 'internal scratch']
  %s0 = inlined_call_operand.hbm [shape: f32[2,32,128], index: 0, kind: input, shape index: {}]
  %s1 = inlined_call_operand.hbm [shape: f32[1,128], index: 1, kind: input, shape index: {}]
  %s2 = inlined_call_operand.hbm [shape: f32[1,128], index: 2, kind: input, shape index: {}]
  %s3 = inlined_call_operand.hbm [shape: bf16[128,384], index: 3, kind: input, shape index: {}]
  %s4 = inlined_call_operand.vmem [shape: f32[1,384], index: 4, kind: input, shape index: {}]
  %s5 = inlined_call_operand.hbm [shape: bf16[128,128], index: 5, kind: input, shape index: {}]
  %s6 = inlined_call_operand.hbm [shape: f32[1,128], index: 6, kind: input, shape index: {}]
  %s7 = inlined_call_operand.hbm [shape: f32[1,128], index: 7, kind: input, shape index: {}]
  %s8 = inlined_call_operand.hbm [shape: f32[1,128], index: 8, kind: input, shape index: {}]
  %s9 = inlined_call_operand.hbm [shape: bf16[128,768], index: 9, kind: input, shape index: {}]
  %s10 = inlined_call_operand.vmem [shape: f32[1,768], index: 10, kind: input, shape index: {}]
  %s11 = inlined_call_operand.hbm [shape: bf16[768,128], index: 11, kind: input, shape index: {}]
  %s12 = inlined_call_operand.vmem [shape: f32[1,128], index: 12, kind: input, shape index: {}]
  %s13 = inlined_call_operand.hbm [shape: f32[2,32,128], index: 13, kind: output, shape index: {}]
  %s14 = sld [smem:[#allocation0]]
  $region125: #{tpu_custom_call.1} parent=0
    _
  %s16 = ssub.s32 1, %s14
  %s17 = scalar_select 0, %s16, %s14
  $region1: #{tpu_custom_call.1} parent=0
    #allocation2 [shape = 'u8[32768]{0}', space=vmem, size = 0x8000, scoped, tag = 'input window, operand 0']
    #allocation3 [shape = 's32[2]{0}', space=sflag, size = 0x8, scoped, tag = 'scoped memory for tpu_custom_call.1']
    #allocation4 [shape = 's32[2]{0}', space=sflag, size = 0x8, scoped, tag = 'scoped memory for tpu_custom_call.1']
    #allocation5 [shape = 'u8[512]{0}', space=vmem, size = 0x400, scoped, tag = 'input window, operand 1, single buffered']
    #allocation6 [shape = 's32[1]{0}', space=sflag, size = 0x4, scoped, tag = 'scoped memory for tpu_custom_call.1']
    #allocation7 [shape = 'u8[512]{0}', space=vmem, size = 0x400, scoped, tag = 'input window, operand 2, single buffered']
    #allocation8 [shape = 'u8[98304]{0}', space=vmem, size = 0x18000, scoped, tag = 'input window, operand 3, single buffered']
    #allocation9 [shape = 's32[1]{0}', space=sflag, size = 0x4, scoped, tag = 'scoped memory for tpu_custom_call.1']
    #allocation10 [shape = 'u8[32768]{0}', space=vmem, size = 0x8000, scoped, tag = 'input window, operand 5, single buffered']
    #allocation11 [shape = 'u8[512]{0}', space=vmem, size = 0x400, scoped, tag = 'input window, operand 6, single buffered']
    #allocation12 [shape = 's32[1]{0}', space=sflag, size = 0x4, scoped, tag = 'scoped memory for tpu_custom_call.1']
    #allocation13 [shape = 'u8[512]{0}', space=vmem, size = 0x400, scoped, tag = 'input window, operand 7, single buffered']
    #allocation14 [shape = 'u8[512]{0}', space=vmem, size = 0x400, scoped, tag = 'input window, operand 8, single buffered']
    #allocation15 [shape = 's32[1]{0}', space=sflag, size = 0x4, scoped, tag = 'scoped memory for tpu_custom_call.1']
    #allocation16 [shape = 'u8[196608]{0}', space=vmem, size = 0x30000, scoped, tag = 'input window, operand 9, single buffered']
    #allocation17 [shape = 'u8[196608]{0}', space=vmem, size = 0x30000, scoped, tag = 'input window, operand 11, single buffered']
    #allocation18 [shape = 's32[1]{0}', space=sflag, size = 0x4, scoped, tag = 'scoped memory for tpu_custom_call.1']
    #allocation19 [shape = 'u8[32768]{0}', space=vmem, size = 0x8000, scoped, tag = 'output window, operand 0']
    %18 = vsyncpa [#allocation3], 0
    %s19 = scalar_lea.sflag [#allocation3], 1
    %20 = vsyncpa %s19, 0
    %21 = vsyncpa [#allocation6], 0
    %22 = vsyncpa [#allocation9], 0
    %23 = vsyncpa [#allocation12], 0
    %24 = vsyncpa [#allocation15], 0
    %25 = vsyncpa [#allocation18], 0
    %26 = vsyncpa [#allocation4], 0
    %s27 = scalar_lea.sflag [#allocation4], 1
    %28 = vsyncpa %s27, 0
    loop: start=0, step=1, limit=4
    $region2: #{tpu_custom_call.1} parent=1 // loop_pre_header
      _
    $region3: #{tpu_custom_call.1} parent=1 // loop_header
      %s30 = sphi 0, %s34
      %p31 = scmp.ge.s32.totalorder %s30, 4
      %s40 = sphi 0, %s42
      %s43 = sphi 0, %s40
      %s44 = sphi 0, %s43
      %s60 = sphi 0, %s44
      %s64 = sphi 0, %s64
      %s66 = sphi 0, %s64
      %s67 = sphi 0, %s66
      %s81 = sphi 0, %s67
      %s85 = sphi 0, %s85
      %s87 = sphi 0, %s85
      %s88 = sphi 0, %s87
      %s102 = sphi 0, %s88
      %s106 = sphi 0, %s106
      %s108 = sphi 0, %s106
      %s109 = sphi 0, %s108
      %s123 = sphi 0, %s109
      %s127 = sphi 0, %s127
      %s129 = sphi 0, %s127
      %s130 = sphi 0, %s129
      %s144 = sphi 0, %s130
      %s148 = sphi 0, %s148
      %s150 = sphi 0, %s148
      %s151 = sphi 0, %s150
      %s165 = sphi 0, %s151
      %s169 = sphi 0, %s169
      %s171 = sphi 0, %s169
      %s172 = sphi 0, %s171
      %s186 = sphi 0, %s172
      %s190 = sphi 0, %s190
      %s192 = sphi 0, %s190
      %s193 = sphi 0, %s192
      %s207 = sphi 0, %s193
      %s211 = sphi 0, %s211
      %s213 = sphi 0, %s211
      %s214 = sphi 0, %s213
      %s228 = sphi 0, %s214
      %s232 = sphi 0, %s232
      %s234 = sphi 0, %s232
      %s235 = sphi 0, %s234
      %s249 = sphi 0, %s235
      %s253 = sphi 0, %s253
      %s255 = sphi 0, %s253
      %s256 = sphi 0, %s255
      %s270 = sphi 0, %s256
      %s274 = sphi 0, %s274
      %s276 = sphi 0, %s274
      %s277 = sphi 0, %s276
      %s291 = sphi 0, %s277
      %s295 = sphi 0, %s295
      %s297 = sphi 0, %s295
      %s298 = sphi 0, %s297
      %s312 = sphi 0, %s298
      %s318 = sphi 0, %s320
      %s321 = sphi 0, %s318
      %s322 = sphi 0, %s321
      %s338 = sphi 0, %s322
    $region4: #{tpu_custom_call.1} parent=1 // loop_header_branch
      %33 = sbr.rel (%p31) target = $region8
    $region5: #{tpu_custom_call.1} parent=1 // loop_body
      %s35 = ssub.s32 %s30, 1
      %s36 = ssub.s32 %s30, 2
      %s37 = sadd.s32 %s30, 1
      %s38 = ssub.s32 %s30, %s37
      %p39 = scmp.eq.s32.totalorder %s38, 0
      %s41 = sadd.s32 %s40, 1
      %s42 = scalar_select %p39, %s40, %s41
      %p45 = pneg %p39
      %p46 = scmp.eq.s32.totalorder %s30, 1
      %p47 = por %p45, %p46
      %p48 = scmp.ne.s32.totalorder %s40, %s43
      %p49 = scmp.eq.s32.totalorder %s30, 0
      %p50 = por %p48, %p49
      %p51 = scmp.ne.s32.totalorder %s40, %s43
      %p52 = scmp.eq.s32.totalorder %s35, 1
      %p53 = por %p51, %p52
      %p54 = scmp.ne.s32.totalorder %s43, %s44
      %p55 = scmp.eq.s32.totalorder %s35, 0
      %p56 = por %p54, %p55
      %p57 = scmp.ne.s32.totalorder %s43, %s44
      %p58 = scmp.eq.s32.totalorder %s36, 1
      %p59 = por %p57, %p58
      %p61 = scmp.ne.s32.totalorder %s44, %s60
      %p62 = scmp.eq.s32.totalorder %s36, 0
      %p63 = por %p61, %p62
      %s65 = sadd.s32 %s64, 1
      %p68 = scmp.eq.s32.totalorder %s30, 1
      %p69 = scmp.ne.s32.totalorder %s64, %s66
      %p70 = scmp.eq.s32.totalorder %s30, 0
      %p71 = por %p69, %p70
      %p72 = scmp.ne.s32.totalorder %s64, %s66
      %p73 = scmp.eq.s32.totalorder %s35, 1
      %p74 = por %p72, %p73
      %p75 = scmp.ne.s32.totalorder %s66, %s67
      %p76 = scmp.eq.s32.totalorder %s35, 0
      %p77 = por %p75, %p76
      %p78 = scmp.ne.s32.totalorder %s66, %s67
      %p79 = scmp.eq.s32.totalorder %s36, 1
      %p80 = por %p78, %p79
      %p82 = scmp.ne.s32.totalorder %s67, %s81
      %p83 = scmp.eq.s32.totalorder %s36, 0
      %p84 = por %p82, %p83
      %s86 = sadd.s32 %s85, 1
      %p89 = scmp.eq.s32.totalorder %s30, 1
      %p90 = scmp.ne.s32.totalorder %s85, %s87
      %p91 = scmp.eq.s32.totalorder %s30, 0
      %p92 = por %p90, %p91
      %p93 = scmp.ne.s32.totalorder %s85, %s87
      %p94 = scmp.eq.s32.totalorder %s35, 1
      %p95 = por %p93, %p94
      %p96 = scmp.ne.s32.totalorder %s87, %s88
      %p97 = scmp.eq.s32.totalorder %s35, 0
      %p98 = por %p96, %p97
      %p99 = scmp.ne.s32.totalorder %s87, %s88
      %p100 = scmp.eq.s32.totalorder %s36, 1
      %p101 = por %p99, %p100
      %p103 = scmp.ne.s32.totalorder %s88, %s102
      %p104 = scmp.eq.s32.totalorder %s36, 0
      %p105 = por %p103, %p104
      %s107 = sadd.s32 %s106, 1
      %p110 = scmp.eq.s32.totalorder %s30, 1
      %p111 = scmp.ne.s32.totalorder %s106, %s108
      %p112 = scmp.eq.s32.totalorder %s30, 0
      %p113 = por %p111, %p112
      %p114 = scmp.ne.s32.totalorder %s106, %s108
      %p115 = scmp.eq.s32.totalorder %s35, 1
      %p116 = por %p114, %p115
      %p117 = scmp.ne.s32.totalorder %s108, %s109
      %p118 = scmp.eq.s32.totalorder %s35, 0
      %p119 = por %p117, %p118
      %p120 = scmp.ne.s32.totalorder %s108, %s109
      %p121 = scmp.eq.s32.totalorder %s36, 1
      %p122 = por %p120, %p121
      %p124 = scmp.ne.s32.totalorder %s109, %s123
      %p125 = scmp.eq.s32.totalorder %s36, 0
      %p126 = por %p124, %p125
      %s128 = sadd.s32 %s127, 1
      %p131 = scmp.eq.s32.totalorder %s30, 1
      %p132 = scmp.ne.s32.totalorder %s127, %s129
      %p133 = scmp.eq.s32.totalorder %s30, 0
      %p134 = por %p132, %p133
      %p135 = scmp.ne.s32.totalorder %s127, %s129
      %p136 = scmp.eq.s32.totalorder %s35, 1
      %p137 = por %p135, %p136
      %p138 = scmp.ne.s32.totalorder %s129, %s130
      %p139 = scmp.eq.s32.totalorder %s35, 0
      %p140 = por %p138, %p139
      %p141 = scmp.ne.s32.totalorder %s129, %s130
      %p142 = scmp.eq.s32.totalorder %s36, 1
      %p143 = por %p141, %p142
      %p145 = scmp.ne.s32.totalorder %s130, %s144
      %p146 = scmp.eq.s32.totalorder %s36, 0
      %p147 = por %p145, %p146
      %s149 = sadd.s32 %s148, 1
      %p152 = scmp.eq.s32.totalorder %s30, 1
      %p153 = scmp.ne.s32.totalorder %s148, %s150
      %p154 = scmp.eq.s32.totalorder %s30, 0
      %p155 = por %p153, %p154
      %p156 = scmp.ne.s32.totalorder %s148, %s150
      %p157 = scmp.eq.s32.totalorder %s35, 1
      %p158 = por %p156, %p157
      %p159 = scmp.ne.s32.totalorder %s150, %s151
      %p160 = scmp.eq.s32.totalorder %s35, 0
      %p161 = por %p159, %p160
      %p162 = scmp.ne.s32.totalorder %s150, %s151
      %p163 = scmp.eq.s32.totalorder %s36, 1
      %p164 = por %p162, %p163
      %p166 = scmp.ne.s32.totalorder %s151, %s165
      %p167 = scmp.eq.s32.totalorder %s36, 0
      %p168 = por %p166, %p167
      %s170 = sadd.s32 %s169, 1
      %p173 = scmp.eq.s32.totalorder %s30, 1
      %p174 = scmp.ne.s32.totalorder %s169, %s171
      %p175 = scmp.eq.s32.totalorder %s30, 0
      %p176 = por %p174, %p175
      %p177 = scmp.ne.s32.totalorder %s169, %s171
      %p178 = scmp.eq.s32.totalorder %s35, 1
      %p179 = por %p177, %p178
      %p180 = scmp.ne.s32.totalorder %s171, %s172
      %p181 = scmp.eq.s32.totalorder %s35, 0
      %p182 = por %p180, %p181
      %p183 = scmp.ne.s32.totalorder %s171, %s172
      %p184 = scmp.eq.s32.totalorder %s36, 1
      %p185 = por %p183, %p184
      %p187 = scmp.ne.s32.totalorder %s172, %s186
      %p188 = scmp.eq.s32.totalorder %s36, 0
      %p189 = por %p187, %p188
      %s191 = sadd.s32 %s190, 1
      %p194 = scmp.eq.s32.totalorder %s30, 1
      %p195 = scmp.ne.s32.totalorder %s190, %s192
      %p196 = scmp.eq.s32.totalorder %s30, 0
      %p197 = por %p195, %p196
      %p198 = scmp.ne.s32.totalorder %s190, %s192
      %p199 = scmp.eq.s32.totalorder %s35, 1
      %p200 = por %p198, %p199
      %p201 = scmp.ne.s32.totalorder %s192, %s193
      %p202 = scmp.eq.s32.totalorder %s35, 0
      %p203 = por %p201, %p202
      %p204 = scmp.ne.s32.totalorder %s192, %s193
      %p205 = scmp.eq.s32.totalorder %s36, 1
      %p206 = por %p204, %p205
      %p208 = scmp.ne.s32.totalorder %s193, %s207
      %p209 = scmp.eq.s32.totalorder %s36, 0
      %p210 = por %p208, %p209
      %s212 = sadd.s32 %s211, 1
      %p215 = scmp.eq.s32.totalorder %s30, 1
      %p216 = scmp.ne.s32.totalorder %s211, %s213
      %p217 = scmp.eq.s32.totalorder %s30, 0
      %p218 = por %p216, %p217
      %p219 = scmp.ne.s32.totalorder %s211, %s213
      %p220 = scmp.eq.s32.totalorder %s35, 1
      %p221 = por %p219, %p220
      %p222 = scmp.ne.s32.totalorder %s213, %s214
      %p223 = scmp.eq.s32.totalorder %s35, 0
      %p224 = por %p222, %p223
      %p225 = scmp.ne.s32.totalorder %s213, %s214
      %p226 = scmp.eq.s32.totalorder %s36, 1
      %p227 = por %p225, %p226
      %p229 = scmp.ne.s32.totalorder %s214, %s228
      %p230 = scmp.eq.s32.totalorder %s36, 0
      %p231 = por %p229, %p230
      %s233 = sadd.s32 %s232, 1
      %p236 = scmp.eq.s32.totalorder %s30, 1
      %p237 = scmp.ne.s32.totalorder %s232, %s234
      %p238 = scmp.eq.s32.totalorder %s30, 0
      %p239 = por %p237, %p238
      %p240 = scmp.ne.s32.totalorder %s232, %s234
      %p241 = scmp.eq.s32.totalorder %s35, 1
      %p242 = por %p240, %p241
      %p243 = scmp.ne.s32.totalorder %s234, %s235
      %p244 = scmp.eq.s32.totalorder %s35, 0
      %p245 = por %p243, %p244
      %p246 = scmp.ne.s32.totalorder %s234, %s235
      %p247 = scmp.eq.s32.totalorder %s36, 1
      %p248 = por %p246, %p247
      %p250 = scmp.ne.s32.totalorder %s235, %s249
      %p251 = scmp.eq.s32.totalorder %s36, 0
      %p252 = por %p250, %p251
      %s254 = sadd.s32 %s253, 1
      %p257 = scmp.eq.s32.totalorder %s30, 1
      %p258 = scmp.ne.s32.totalorder %s253, %s255
      %p259 = scmp.eq.s32.totalorder %s30, 0
      %p260 = por %p258, %p259
      %p261 = scmp.ne.s32.totalorder %s253, %s255
      %p262 = scmp.eq.s32.totalorder %s35, 1
      %p263 = por %p261, %p262
      %p264 = scmp.ne.s32.totalorder %s255, %s256
      %p265 = scmp.eq.s32.totalorder %s35, 0
      %p266 = por %p264, %p265
      %p267 = scmp.ne.s32.totalorder %s255, %s256
      %p268 = scmp.eq.s32.totalorder %s36, 1
      %p269 = por %p267, %p268
      %p271 = scmp.ne.s32.totalorder %s256, %s270
      %p272 = scmp.eq.s32.totalorder %s36, 0
      %p273 = por %p271, %p272
      %s275 = sadd.s32 %s274, 1
      %p278 = scmp.eq.s32.totalorder %s30, 1
      %p279 = scmp.ne.s32.totalorder %s274, %s276
      %p280 = scmp.eq.s32.totalorder %s30, 0
      %p281 = por %p279, %p280
      %p282 = scmp.ne.s32.totalorder %s274, %s276
      %p283 = scmp.eq.s32.totalorder %s35, 1
      %p284 = por %p282, %p283
      %p285 = scmp.ne.s32.totalorder %s276, %s277
      %p286 = scmp.eq.s32.totalorder %s35, 0
      %p287 = por %p285, %p286
      %p288 = scmp.ne.s32.totalorder %s276, %s277
      %p289 = scmp.eq.s32.totalorder %s36, 1
      %p290 = por %p288, %p289
      %p292 = scmp.ne.s32.totalorder %s277, %s291
      %p293 = scmp.eq.s32.totalorder %s36, 0
      %p294 = por %p292, %p293
      %s296 = sadd.s32 %s295, 1
      %p299 = scmp.eq.s32.totalorder %s30, 1
      %p300 = scmp.ne.s32.totalorder %s295, %s297
      %p301 = scmp.eq.s32.totalorder %s30, 0
      %p302 = por %p300, %p301
      %p303 = scmp.ne.s32.totalorder %s295, %s297
      %p304 = scmp.eq.s32.totalorder %s35, 1
      %p305 = por %p303, %p304
      %p306 = scmp.ne.s32.totalorder %s297, %s298
      %p307 = scmp.eq.s32.totalorder %s35, 0
      %p308 = por %p306, %p307
      %p309 = scmp.ne.s32.totalorder %s297, %s298
      %p310 = scmp.eq.s32.totalorder %s36, 1
      %p311 = por %p309, %p310
      %p313 = scmp.ne.s32.totalorder %s298, %s312
      %p314 = scmp.eq.s32.totalorder %s36, 0
      %p315 = por %p313, %p314
      %s316 = ssub.s32 %s30, %s37
      %p317 = scmp.eq.s32.totalorder %s316, 0
      %s319 = sadd.s32 %s318, 1
      %s320 = scalar_select %p317, %s318, %s319
      %p323 = pneg %p317
      %p324 = scmp.eq.s32.totalorder %s30, 1
      %p325 = por %p323, %p324
      %p326 = scmp.ne.s32.totalorder %s318, %s321
      %p327 = scmp.eq.s32.totalorder %s30, 0
      %p328 = por %p326, %p327
      %p329 = scmp.ne.s32.totalorder %s318, %s321
      %p330 = scmp.eq.s32.totalorder %s35, 1
      %p331 = por %p329, %p330
      %p332 = scmp.ne.s32.totalorder %s321, %s322
      %p333 = scmp.eq.s32.totalorder %s35, 0
      %p334 = por %p332, %p333
      %p335 = scmp.ne.s32.totalorder %s321, %s322
      %p336 = scmp.eq.s32.totalorder %s36, 1
      %p337 = por %p335, %p336
      %p339 = scmp.ne.s32.totalorder %s322, %s338
      %p340 = scmp.eq.s32.totalorder %s36, 0
      %p341 = por %p339, %p340
      %p342 = scmp.le.s32.totalorder 1, %s30
      %p343 = scmp.lt.s32.totalorder %s30, 3
      %p344 = pnand %p342, %p343
      %p345 = pneg %p344
      // Predicated region
      $region9: #{tpu_custom_call.1} parent=5 // pred_check
        _
      $region10: #{tpu_custom_call.1} parent=5 // pred_check_branch
        %347 = sbr.rel (%p344) target = $region12
      $region11: #{tpu_custom_call.1} parent=5 // pred_region
        %s348 = ssub.s32 %s30, 1
        // Predicated region
        $region13: #{tpu_custom_call.1} parent=11 // pred_check
          %p349 = pneg %p77
        $region14: #{tpu_custom_call.1} parent=11 // pred_check_branch
          %351 = sbr.rel (%p349) target = $region16
        $region15: #{tpu_custom_call.1} parent=11 // pred_region
          %353 = vsyncadd [#allocation6], 0
          %s355 = sshll.u32 %s1, 4
          %s356 = int_to_ptr.hbm [resolvable:$true] %s355
          %s357 = sshll.u32 [#allocation5], 4
          %s358 = int_to_ptr.vmem [resolvable:$true] %s357
          %360 = dma.hbm_to_vmem [thread:$0]  %s356, 16, %s358, [#allocation6]
        $region16: #{tpu_custom_call.1} parent=11 // pred_fallthru
          _
        // Predicated region
        $region17: #{tpu_custom_call.1} parent=11 // pred_check
          %p361 = pneg %p98
        $region18: #{tpu_custom_call.1} parent=11 // pred_check_branch
          %363 = sbr.rel (%p361) target = $region20
        $region19: #{tpu_custom_call.1} parent=11 // pred_region
          %365 = vsyncadd [#allocation6], 0
          %s367 = sshll.u32 %s2, 4
          %s368 = int_to_ptr.hbm [resolvable:$true] %s367
          %s369 = sshll.u32 [#allocation7], 4
          %s370 = int_to_ptr.vmem [resolvable:$true] %s369
          %372 = dma.hbm_to_vmem [thread:$0]  %s368, 16, %s370, [#allocation6]
        $region20: #{tpu_custom_call.1} parent=11 // pred_fallthru
          _
        // Predicated region
        $region21: #{tpu_custom_call.1} parent=11 // pred_check
          %p373 = pneg %p119
        $region22: #{tpu_custom_call.1} parent=11 // pred_check_branch
          %375 = sbr.rel (%p373) target = $region24
        $region23: #{tpu_custom_call.1} parent=11 // pred_region
          %377 = vsyncadd [#allocation9], 0
          %s378 = sshll.u32 %s3, 4
          %s379 = int_to_ptr.hbm [resolvable:$true] %s378
          %s380 = sshll.u32 [#allocation8], 4
          %s381 = int_to_ptr.vmem [resolvable:$true] %s380
          %386 = dma.hbm_to_vmem [thread:$0]  %s379, 3072, %s381, [#allocation9], 192, 192, 12
        $region24: #{tpu_custom_call.1} parent=11 // pred_fallthru
          _
        // Predicated region
        $region25: #{tpu_custom_call.1} parent=11 // pred_check
          %p387 = pneg %p140
        $region26: #{tpu_custom_call.1} parent=11 // pred_check_branch
          %389 = sbr.rel (%p387) target = $region28
        $region27: #{tpu_custom_call.1} parent=11 // pred_region
          _
        $region28: #{tpu_custom_call.1} parent=11 // pred_fallthru
          _
        // Predicated region
        $region29: #{tpu_custom_call.1} parent=11 // pred_check
          %p390 = pneg %p161
        $region30: #{tpu_custom_call.1} parent=11 // pred_check_branch
          %392 = sbr.rel (%p390) target = $region32
        $region31: #{tpu_custom_call.1} parent=11 // pred_region
          %394 = vsyncadd [#allocation9], 0
          %s395 = sshll.u32 %s5, 4
          %s396 = int_to_ptr.hbm [resolvable:$true] %s395
          %s397 = sshll.u32 [#allocation10], 4
          %s398 = int_to_ptr.vmem [resolvable:$true] %s397
          %403 = dma.hbm_to_vmem [thread:$0]  %s396, 1024, %s398, [#allocation9], 64, 64, 4
        $region32: #{tpu_custom_call.1} parent=11 // pred_fallthru
          _
        // Predicated region
        $region33: #{tpu_custom_call.1} parent=11 // pred_check
          %p404 = pneg %p182
        $region34: #{tpu_custom_call.1} parent=11 // pred_check_branch
          %406 = sbr.rel (%p404) target = $region36
        $region35: #{tpu_custom_call.1} parent=11 // pred_region
          %408 = vsyncadd [#allocation12], 0
          %s410 = sshll.u32 %s6, 4
          %s411 = int_to_ptr.hbm [resolvable:$true] %s410
          %s412 = sshll.u32 [#allocation11], 4
          %s413 = int_to_ptr.vmem [resolvable:$true] %s412
          %415 = dma.hbm_to_vmem [thread:$0]  %s411, 16, %s413, [#allocation12]
        $region36: #{tpu_custom_call.1} parent=11 // pred_fallthru
          _
        // Predicated region
        $region37: #{tpu_custom_call.1} parent=11 // pred_check
          %p416 = pneg %p203
        $region38: #{tpu_custom_call.1} parent=11 // pred_check_branch
          %418 = sbr.rel (%p416) target = $region40
        $region39: #{tpu_custom_call.1} parent=11 // pred_region
          %420 = vsyncadd [#allocation12], 0
          %s422 = sshll.u32 %s7, 4
          %s423 = int_to_ptr.hbm [resolvable:$true] %s422
          %s424 = sshll.u32 [#allocation13], 4
          %s425 = int_to_ptr.vmem [resolvable:$true] %s424
          %427 = dma.hbm_to_vmem [thread:$0]  %s423, 16, %s425, [#allocation12]
        $region40: #{tpu_custom_call.1} parent=11 // pred_fallthru
          _
        // Predicated region
        $region41: #{tpu_custom_call.1} parent=11 // pred_check
          %p428 = pneg %p224
        $region42: #{tpu_custom_call.1} parent=11 // pred_check_branch
          %430 = sbr.rel (%p428) target = $region44
        $region43: #{tpu_custom_call.1} parent=11 // pred_region
          %432 = vsyncadd [#allocation15], 0
          %s434 = sshll.u32 %s8, 4
          %s435 = int_to_ptr.hbm [resolvable:$true] %s434
          %s436 = sshll.u32 [#allocation14], 4
          %s437 = int_to_ptr.vmem [resolvable:$true] %s436
          %439 = dma.hbm_to_vmem [thread:$0]  %s435, 16, %s437, [#allocation15]
        $region44: #{tpu_custom_call.1} parent=11 // pred_fallthru
          _
        // Predicated region
        $region45: #{tpu_custom_call.1} parent=11 // pred_check
          %p440 = pneg %p245
        $region46: #{tpu_custom_call.1} parent=11 // pred_check_branch
          %442 = sbr.rel (%p440) target = $region48
        $region47: #{tpu_custom_call.1} parent=11 // pred_region
          %444 = vsyncadd [#allocation15], 0
          %s445 = sshll.u32 %s9, 4
          %s446 = int_to_ptr.hbm [resolvable:$true] %s445
          %s447 = sshll.u32 [#allocation16], 4
          %s448 = int_to_ptr.vmem [resolvable:$true] %s447
          %453 = dma.hbm_to_vmem [thread:$0]  %s446, 6144, %s448, [#allocation15], 384, 384, 24
        $region48: #{tpu_custom_call.1} parent=11 // pred_fallthru
          _
        // Predicated region
        $region49: #{tpu_custom_call.1} parent=11 // pred_check
          %p454 = pneg %p266
        $region50: #{tpu_custom_call.1} parent=11 // pred_check_branch
          %456 = sbr.rel (%p454) target = $region52
        $region51: #{tpu_custom_call.1} parent=11 // pred_region
          _
        $region52: #{tpu_custom_call.1} parent=11 // pred_fallthru
          _
        // Predicated region
        $region53: #{tpu_custom_call.1} parent=11 // pred_check
          %p457 = pneg %p287
        $region54: #{tpu_custom_call.1} parent=11 // pred_check_branch
          %459 = sbr.rel (%p457) target = $region56
        $region55: #{tpu_custom_call.1} parent=11 // pred_region
          %461 = vsyncadd [#allocation18], 0
          %s462 = sshll.u32 %s11, 4
          %s463 = int_to_ptr.hbm [resolvable:$true] %s462
          %s464 = sshll.u32 [#allocation17], 4
          %s465 = int_to_ptr.vmem [resolvable:$true] %s464
          %470 = dma.hbm_to_vmem [thread:$0]  %s463, 6144, %s465, [#allocation18], 64, 64, 4
        $region56: #{tpu_custom_call.1} parent=11 // pred_fallthru
          _
        // Predicated region
        $region57: #{tpu_custom_call.1} parent=11 // pred_check
          %p471 = pneg %p308
        $region58: #{tpu_custom_call.1} parent=11 // pred_check_branch
          %473 = sbr.rel (%p471) target = $region60
        $region59: #{tpu_custom_call.1} parent=11 // pred_region
          _
        $region60: #{tpu_custom_call.1} parent=11 // pred_fallthru
          _
      $region12: #{tpu_custom_call.1} parent=5 // pred_fallthru
        _
      %p474 = scmp.lt.s32.totalorder %s30, 2
      // Predicated region
      $region61: #{tpu_custom_call.1} parent=5 // pred_check
        %p475 = pneg %p474
      $region62: #{tpu_custom_call.1} parent=5 // pred_check_branch
        %477 = sbr.rel (%p475) target = $region64
      $region63: #{tpu_custom_call.1} parent=5 // pred_region
        // Predicated region
        $region65: #{tpu_custom_call.1} parent=63 // pred_check
          %p478 = pneg %p50
        $region66: #{tpu_custom_call.1} parent=63 // pred_check_branch
          %480 = sbr.rel (%p478) target = $region68
        $region67: #{tpu_custom_call.1} parent=63 // pred_region
          %s481 = sand.u32 %s40, 1
          %s482 = scalar_lea.sflag [#allocation3], %s481
          %s483 = sand.u32 %s40, 1
          %s484 = smul.addr %s483, 32
          %s485 = scalar_lea.vmem [#allocation2], %s484
          %487 = vsyncadd %s482, 0
          %s488 = smul.addr %s30, 4
          %s489 = smul.addr %s488, 8
          %s490 = scalar_lea.hbm %s0, %s489
          %s491 = sshll.u32 %s490, 4
          %s492 = int_to_ptr.hbm [resolvable:$true] %s491
          %s493 = sshll.u32 %s485, 4
          %s494 = int_to_ptr.vmem [resolvable:$true] %s493
          %499 = dma.hbm_to_vmem [thread:$0]  %s492, 512, %s494, %s482, 128, 128, 8
        $region68: #{tpu_custom_call.1} parent=63 // pred_fallthru
          _
      $region64: #{tpu_custom_call.1} parent=5 // pred_fallthru
        _
      %p500 = scmp.le.s32.totalorder 1, %s30
      %p501 = scmp.lt.s32.totalorder %s30, 3
      %p502 = pnand %p500, %p501
      %p503 = pneg %p502
      // Predicated region
      $region69: #{tpu_custom_call.1} parent=5 // pred_check
        _
      $region70: #{tpu_custom_call.1} parent=5 // pred_check_branch
        %505 = sbr.rel (%p502) target = $region72
      $region71: #{tpu_custom_call.1} parent=5 // pred_region
        %s506 = ssub.s32 %s30, 1
        %s507 = sand.u32 %s43, 1
        %s508 = scalar_lea.sflag [#allocation3], %s507
        %s509 = sand.u32 %s43, 1
        %s510 = smul.addr %s509, 32
        %s511 = scalar_lea.vmem [#allocation2], %s510
        // Predicated region
        $region73: #{tpu_custom_call.1} parent=71 // pred_check
          %p512 = pneg %p56
        $region74: #{tpu_custom_call.1} parent=71 // pred_check_branch
          %514 = sbr.rel (%p512) target = $region76
        $region75: #{tpu_custom_call.1} parent=71 // pred_region
          %516 = dma.done %s508, 512
        $region76: #{tpu_custom_call.1} parent=71 // pred_fallthru
          _
        // Predicated region
        $region77: #{tpu_custom_call.1} parent=71 // pred_check
          %p517 = pneg %p77
        $region78: #{tpu_custom_call.1} parent=71 // pred_check_branch
          %519 = sbr.rel (%p517) target = $region80
        $region79: #{tpu_custom_call.1} parent=71 // pred_region
          %521 = dma.done [#allocation6], 16
        $region80: #{tpu_custom_call.1} parent=71 // pred_fallthru
          _
        // Predicated region
        $region81: #{tpu_custom_call.1} parent=71 // pred_check
          %p522 = pneg %p98
        $region82: #{tpu_custom_call.1} parent=71 // pred_check_branch
          %524 = sbr.rel (%p522) target = $region84
        $region83: #{tpu_custom_call.1} parent=71 // pred_region
          %526 = dma.done [#allocation6], 16
        $region84: #{tpu_custom_call.1} parent=71 // pred_fallthru
          _
        // Predicated region
        $region85: #{tpu_custom_call.1} parent=71 // pred_check
          %p527 = pneg %p119
        $region86: #{tpu_custom_call.1} parent=71 // pred_check_branch
          %529 = sbr.rel (%p527) target = $region88
        $region87: #{tpu_custom_call.1} parent=71 // pred_region
          %531 = dma.done [#allocation9], 3072
        $region88: #{tpu_custom_call.1} parent=71 // pred_fallthru
          _
        // Predicated region
        $region89: #{tpu_custom_call.1} parent=71 // pred_check
          %p532 = pneg %p161
        $region90: #{tpu_custom_call.1} parent=71 // pred_check_branch
          %534 = sbr.rel (%p532) target = $region92
        $region91: #{tpu_custom_call.1} parent=71 // pred_region
          %536 = dma.done [#allocation9], 1024
        $region92: #{tpu_custom_call.1} parent=71 // pred_fallthru
          _
        // Predicated region
        $region93: #{tpu_custom_call.1} parent=71 // pred_check
          %p537 = pneg %p182
        $region94: #{tpu_custom_call.1} parent=71 // pred_check_branch
          %539 = sbr.rel (%p537) target = $region96
        $region95: #{tpu_custom_call.1} parent=71 // pred_region
          %541 = dma.done [#allocation12], 16
        $region96: #{tpu_custom_call.1} parent=71 // pred_fallthru
          _
        // Predicated region
        $region97: #{tpu_custom_call.1} parent=71 // pred_check
          %p542 = pneg %p203
        $region98: #{tpu_custom_call.1} parent=71 // pred_check_branch
          %544 = sbr.rel (%p542) target = $region100
        $region99: #{tpu_custom_call.1} parent=71 // pred_region
          %546 = dma.done [#allocation12], 16
        $region100: #{tpu_custom_call.1} parent=71 // pred_fallthru
          _
        // Predicated region
        $region101: #{tpu_custom_call.1} parent=71 // pred_check
          %p547 = pneg %p224
        $region102: #{tpu_custom_call.1} parent=71 // pred_check_branch
          %549 = sbr.rel (%p547) target = $region104
        $region103: #{tpu_custom_call.1} parent=71 // pred_region
          %551 = dma.done [#allocation15], 16
        $region104: #{tpu_custom_call.1} parent=71 // pred_fallthru
          _
        // Predicated region
        $region105: #{tpu_custom_call.1} parent=71 // pred_check
          %p552 = pneg %p245
        $region106: #{tpu_custom_call.1} parent=71 // pred_check_branch
          %554 = sbr.rel (%p552) target = $region108
        $region107: #{tpu_custom_call.1} parent=71 // pred_region
          %556 = dma.done [#allocation15], 6144
        $region108: #{tpu_custom_call.1} parent=71 // pred_fallthru
          _
        // Predicated region
        $region109: #{tpu_custom_call.1} parent=71 // pred_check
          %p557 = pneg %p287
        $region110: #{tpu_custom_call.1} parent=71 // pred_check_branch
          %559 = sbr.rel (%p557) target = $region112
        $region111: #{tpu_custom_call.1} parent=71 // pred_region
          %561 = dma.done [#allocation18], 6144
        $region112: #{tpu_custom_call.1} parent=71 // pred_fallthru
          _
        %s562 = sand.u32 %s43, 1
        %s563 = scalar_lea.sflag [#allocation3], %s562
        %s564 = sand.u32 %s43, 1
        %s565 = smul.addr %s564, 32
        %s566 = scalar_lea.vmem [#allocation2], %s565
        %p567 = pneg %p56
        %p568 = pneg %p53
        %p569 = pneg %p77
        %p570 = pneg %p74
        %p571 = pneg %p98
        %p572 = pneg %p95
        %p573 = pneg %p119
        %p574 = pneg %p116
        %p575 = pneg %p140
        %p576 = pneg %p137
        %p577 = pneg %p161
        %p578 = pneg %p158
        %p579 = pneg %p182
        %p580 = pneg %p179
        %p581 = pneg %p203
        %p582 = pneg %p200
        %p583 = pneg %p224
        %p584 = pneg %p221
        %p585 = pneg %p245
        %p586 = pneg %p242
        %p587 = pneg %p266
        %p588 = pneg %p263
        %p589 = pneg %p287
        %p590 = pneg %p284
        %p591 = pneg %p308
        %p592 = pneg %p305
        %p593 = pneg %p334
        %p594 = pneg %p331
        %s595 = sand.u32 %s321, 1
        %s596 = scalar_lea.sflag [#allocation4], %s595
        %s597 = sand.u32 %s321, 1
        %s598 = smul.addr %s597, 32
        %s599 = scalar_lea.vmem [#allocation19], %s598
        %v601 = vld [vmem:[%s511] sm:$0xff]
        %v602 = vld [vmem:[%s511 + $0x8] sm:$0xff]
        %v603 = vld [vmem:[%s511 + $0x10] sm:$0xff]
        %v604 = vld [vmem:[%s511 + $0x18] sm:$0xff]
        %605 = vadd.xlane.f32.xlu0 %v601
        %v606 = vpop.xlane.xlu0 %605
        %607 = vadd.xlane.f32.xlu0 %v602
        %v608 = vpop.xlane.xlu0 %607
        %609 = vadd.xlane.f32.xlu0 %v603
        %v610 = vpop.xlane.xlu0 %609
        %611 = vadd.xlane.f32.xlu0 %v604
        %v612 = vpop.xlane.xlu0 %611
        %v613 = vrcp.pop 128.0
        %v614 = vmul.f32 128.0, %v613
        %v615 = vsub.f32 1.0, %v614
        %v616 = vmul.f32 %v613, %v615
        %v617 = vadd.f32 %v613, %v616
        %vm618 = vweird.f32 %v613
        %v619 = vsel %vm618, %v613, %v617
        %v620 = vmul.f32 %v606, %v619
        %v621 = vmul.f32 %v608, %v619
        %v622 = vmul.f32 %v610, %v619
        %v623 = vmul.f32 %v612, %v619
        %v624 = vsub.f32 %v601, %v620
        %v625 = vsub.f32 %v602, %v621
        %v626 = vsub.f32 %v603, %v622
        %v627 = vsub.f32 %v604, %v623
        %v628 = vmul.f32 %v624, %v624
        %v629 = vmul.f32 %v625, %v625
        %v630 = vmul.f32 %v626, %v626
        %v631 = vmul.f32 %v627, %v627
        %632 = vadd.xlane.f32.xlu0 %v628
        %v633 = vpop.xlane.xlu0 %632
        %634 = vadd.xlane.f32.xlu0 %v629
        %v635 = vpop.xlane.xlu0 %634
        %636 = vadd.xlane.f32.xlu0 %v630
        %v637 = vpop.xlane.xlu0 %636
        %638 = vadd.xlane.f32.xlu0 %v631
        %v639 = vpop.xlane.xlu0 %638
        %v640 = vmul.f32 %v633, %v619
        %v641 = vmul.f32 %v635, %v619
        %v642 = vmul.f32 %v637, %v619
        %v643 = vmul.f32 %v639, %v619
        %v644 = vadd.f32 %v640, 1e-06
        %v645 = vadd.f32 %v641, 1e-06
        %v646 = vadd.f32 %v642, 1e-06
        %v647 = vadd.f32 %v643, 1e-06
        %v648 = vrsqrt.pop %v644
        %v649 = vmul.f32 %v648, %v644
        %v650 = vmul.f32 %v649, %v648
        %v651 = vmul.f32 0.5, %v650
        %v652 = vsub.f32 1.5, %v651
        %v653 = vmul.f32 %v648, %v652
        %vm654 = vweird.f32 %v644
        %vm655 = vweird.f32 %v648
        %vm656 = vmor %vm654, %vm655
        %v657 = vsel %vm656, %v648, %v653
        %v658 = vrsqrt.pop %v645
        %v659 = vmul.f32 %v658, %v645
        %v660 = vmul.f32 %v659, %v658
        %v661 = vmul.f32 0.5, %v660
        %v662 = vsub.f32 1.5, %v661
        %v663 = vmul.f32 %v658, %v662
        %vm664 = vweird.f32 %v645
        %vm665 = vweird.f32 %v658
        %vm666 = vmor %vm664, %vm665
        %v667 = vsel %vm666, %v658, %v663
        %v668 = vrsqrt.pop %v646
        %v669 = vmul.f32 %v668, %v646
        %v670 = vmul.f32 %v669, %v668
        %v671 = vmul.f32 0.5, %v670
        %v672 = vsub.f32 1.5, %v671
        %v673 = vmul.f32 %v668, %v672
        %vm674 = vweird.f32 %v646
        %vm675 = vweird.f32 %v668
        %vm676 = vmor %vm674, %vm675
        %v677 = vsel %vm676, %v668, %v673
        %v678 = vrsqrt.pop %v647
        %v679 = vmul.f32 %v678, %v647
        %v680 = vmul.f32 %v679, %v678
        %v681 = vmul.f32 0.5, %v680
        %v682 = vsub.f32 1.5, %v681
        %v683 = vmul.f32 %v678, %v682
        %vm684 = vweird.f32 %v647
        %vm685 = vweird.f32 %v678
        %vm686 = vmor %vm684, %vm685
        %v687 = vsel %vm686, %v678, %v683
        %v688 = vmul.f32 %v624, %v657
        %v689 = vmul.f32 %v625, %v667
        %v690 = vmul.f32 %v626, %v677
        %v691 = vmul.f32 %v627, %v687
        %v692 = vld [vmem:[#allocation5] sm:$0x1]
        %v694 = vperm.slane %v692, 0
        %v696 = vmul.f32 %v688, %v694
        %v697 = vmul.f32 %v689, %v694
        %v698 = vmul.f32 %v690, %v694
        %v699 = vmul.f32 %v691, %v694
        %v700 = vld [vmem:[#allocation7] sm:$0x1]
        %v702 = vperm.slane %v700, 0
        %v704 = vadd.f32 %v696, %v702
        %v705 = vadd.f32 %v697, %v702
        %v706 = vadd.f32 %v698, %v702
        %v707 = vadd.f32 %v699, %v702
        %v708 = vpack.c.bf16 %v705, %v704
        %v709 = vpack.c.bf16 %v707, %v706
        %v710 = vld [vmem:[#allocation8] sm:$0xff]
        %v711 = vld [vmem:[#allocation8 + $0x8] sm:$0xf]
        %v712 = vld [vmem:[#allocation8 + $0xc] sm:$0xff]
        %v713 = vld [vmem:[#allocation8 + $0x14] sm:$0xf]
        %v714 = vld [vmem:[#allocation8 + $0x18] sm:$0xff]
        %v715 = vld [vmem:[#allocation8 + $0x20] sm:$0xf]
        %v716 = vld [vmem:[#allocation8 + $0x24] sm:$0xff]
        %v717 = vld [vmem:[#allocation8 + $0x2c] sm:$0xf]
        %v718 = vld [vmem:[#allocation8 + $0x30] sm:$0xff]
        %v719 = vld [vmem:[#allocation8 + $0x38] sm:$0xf]
        %v720 = vld [vmem:[#allocation8 + $0x3c] sm:$0xff]
        %v721 = vld [vmem:[#allocation8 + $0x44] sm:$0xf]
        %v722 = vld [vmem:[#allocation8 + $0x48] sm:$0xff]
        %v723 = vld [vmem:[#allocation8 + $0x50] sm:$0xf]
        %v724 = vld [vmem:[#allocation8 + $0x54] sm:$0xff]
        %v725 = vld [vmem:[#allocation8 + $0x5c] sm:$0xf]
        %v726 = vld [vmem:[#allocation8 + $0x60] sm:$0xff]
        %v727 = vld [vmem:[#allocation8 + $0x68] sm:$0xf]
        %v728 = vld [vmem:[#allocation8 + $0x6c] sm:$0xff]
        %v729 = vld [vmem:[#allocation8 + $0x74] sm:$0xf]
        %v730 = vld [vmem:[#allocation8 + $0x78] sm:$0xff]
        %v731 = vld [vmem:[#allocation8 + $0x80] sm:$0xf]
        %v732 = vld [vmem:[#allocation8 + $0x84] sm:$0xff]
        %v733 = vld [vmem:[#allocation8 + $0x8c] sm:$0xf]
        %v734 = vld [vmem:[#allocation8 + $0x90] sm:$0xff]
        %v735 = vld [vmem:[#allocation8 + $0x98] sm:$0xf]
        %v736 = vld [vmem:[#allocation8 + $0x9c] sm:$0xff]
        %v737 = vld [vmem:[#allocation8 + $0xa4] sm:$0xf]
        %v738 = vld [vmem:[#allocation8 + $0xa8] sm:$0xff]
        %v739 = vld [vmem:[#allocation8 + $0xb0] sm:$0xf]
        %v740 = vld [vmem:[#allocation8 + $0xb4] sm:$0xff]
        %v741 = vld [vmem:[#allocation8 + $0xbc] sm:$0xf]
        %v742 = vld [vmem:[%s4] sm:$0x7]
        %v744 = vperm.slane %v742, 0
        %v745 = vperm.slane %v742, 1
        %v746 = vperm.slane %v742, 2
        %v782 = vunpack.c.l.b16 %v710
        %v783 = vunpack.c.h.b16 %v710
        %v784 = vunpack.c.l.b16 %v711
        %v785 = vunpack.c.l.b16 %v712
        %v786 = vunpack.c.h.b16 %v712
        %v787 = vunpack.c.l.b16 %v713
        %v788 = vunpack.c.l.b16 %v714
        %v789 = vunpack.c.h.b16 %v714
        %v790 = vunpack.c.l.b16 %v715
        %v791 = vunpack.c.l.b16 %v716
        %v792 = vunpack.c.h.b16 %v716
        %v793 = vunpack.c.l.b16 %v717
        %v794 = vunpack.c.l.b16 %v718
        %v795 = vunpack.c.h.b16 %v718
        %v796 = vunpack.c.l.b16 %v719
        %v797 = vunpack.c.l.b16 %v720
        %v798 = vunpack.c.h.b16 %v720
        %v799 = vunpack.c.l.b16 %v721
        %v800 = vunpack.c.l.b16 %v722
        %v801 = vunpack.c.h.b16 %v722
        %v802 = vunpack.c.l.b16 %v723
        %v803 = vunpack.c.l.b16 %v724
        %v804 = vunpack.c.h.b16 %v724
        %v805 = vunpack.c.l.b16 %v725
        %v806 = vunpack.c.l.b16 %v726
        %v807 = vunpack.c.h.b16 %v726
        %v808 = vunpack.c.l.b16 %v727
        %v809 = vunpack.c.l.b16 %v728
        %v810 = vunpack.c.h.b16 %v728
        %v811 = vunpack.c.l.b16 %v729
        %v812 = vunpack.c.l.b16 %v730
        %v813 = vunpack.c.h.b16 %v730
        %v814 = vunpack.c.l.b16 %v731
        %v815 = vunpack.c.l.b16 %v732
        %v816 = vunpack.c.h.b16 %v732
        %v817 = vunpack.c.l.b16 %v733
        %v818 = vunpack.c.l.b16 %v734
        %v819 = vunpack.c.h.b16 %v734
        %v820 = vunpack.c.l.b16 %v735
        %v821 = vunpack.c.l.b16 %v736
        %v822 = vunpack.c.h.b16 %v736
        %v823 = vunpack.c.l.b16 %v737
        %v824 = vunpack.c.l.b16 %v738
        %v825 = vunpack.c.h.b16 %v738
        %v826 = vunpack.c.l.b16 %v739
        %v827 = vunpack.c.l.b16 %v740
        %v828 = vunpack.c.h.b16 %v740
        %v829 = vunpack.c.l.b16 %v741
        %v830 = vpack.c.b16 %v785, %v782
        %v831 = vpack.c.b16 %v786, %v783
        %v832 = vpack.c.b16 %v787, %v784
        %v833 = vpack.c.b16 %v791, %v788
        %v834 = vpack.c.b16 %v792, %v789
        %v835 = vpack.c.b16 %v793, %v790
        %v836 = vpack.c.b16 %v797, %v794
        %v837 = vpack.c.b16 %v798, %v795
        %v838 = vpack.c.b16 %v799, %v796
        %v839 = vpack.c.b16 %v803, %v800
        %v840 = vpack.c.b16 %v804, %v801
        %v841 = vpack.c.b16 %v805, %v802
        %v842 = vpack.c.b16 %v809, %v806
        %v843 = vpack.c.b16 %v810, %v807
        %v844 = vpack.c.b16 %v811, %v808
        %v845 = vpack.c.b16 %v815, %v812
        %v846 = vpack.c.b16 %v816, %v813
        %v847 = vpack.c.b16 %v817, %v814
        %v848 = vpack.c.b16 %v821, %v818
        %v849 = vpack.c.b16 %v822, %v819
        %v850 = vpack.c.b16 %v823, %v820
        %v851 = vpack.c.b16 %v827, %v824
        %v852 = vpack.c.b16 %v828, %v825
        %v853 = vpack.c.b16 %v829, %v826
        %878 = vmatpush.bf16.msra.mxu0 %v851
        %879 = vmatpush.bf16.msra.mxu0 %v848
        %880 = vmatpush.bf16.msra.mxu0 %v845
        %881 = vmatpush.bf16.msra.mxu0 %v842
        %882 = vmatpush.bf16.msra.mxu0 %v839
        %883 = vmatpush.bf16.msra.mxu0 %v836
        %884 = vmatpush.bf16.msra.mxu0 %v833
        %885 = vmatpush.bf16.msra.mxu0 %v830
        %886 = vmatmul.bf16.gmra.mxu0 %v708
        %v887 = vpop.f32.mrf.mxu0
        %v888 = vadd.f32 %v744, %v887
        %v889 = vpop.f32.mrf.mxu0
        %v890 = vadd.f32 %v744, %v889
        %891 = vmatmul.bf16.gmra.mxu0 %v709
        %v892 = vpop.f32.mrf.mxu0
        %v893 = vadd.f32 %v744, %v892
        %v894 = vpop.f32.mrf.mxu0
        %v895 = vadd.f32 %v744, %v894
        %896 = vdwg.mxu0
        %897 = vmatpush.bf16.msra.mxu0 %v852
        %898 = vmatpush.bf16.msra.mxu0 %v849
        %899 = vmatpush.bf16.msra.mxu0 %v846
        %900 = vmatpush.bf16.msra.mxu0 %v843
        %901 = vmatpush.bf16.msra.mxu0 %v840
        %902 = vmatpush.bf16.msra.mxu0 %v837
        %903 = vmatpush.bf16.msra.mxu0 %v834
        %904 = vmatpush.bf16.msra.mxu0 %v831
        %905 = vmatmul.bf16.gmra.mxu0 %v708
        %v906 = vpop.f32.mrf.mxu0
        %v907 = vadd.f32 %v745, %v906
        %v908 = vpop.f32.mrf.mxu0
        %v909 = vadd.f32 %v745, %v908
        %910 = vmatmul.bf16.gmra.mxu0 %v709
        %v911 = vpop.f32.mrf.mxu0
        %v912 = vadd.f32 %v745, %v911
        %v913 = vpop.f32.mrf.mxu0
        %v914 = vadd.f32 %v745, %v913
        %915 = vdwg.mxu0
        %916 = vmatpush.bf16.msra.mxu0 %v853
        %917 = vmatpush.bf16.msra.mxu0 %v850
        %918 = vmatpush.bf16.msra.mxu0 %v847
        %919 = vmatpush.bf16.msra.mxu0 %v844
        %920 = vmatpush.bf16.msra.mxu0 %v841
        %921 = vmatpush.bf16.msra.mxu0 %v838
        %922 = vmatpush.bf16.msra.mxu0 %v835
        %923 = vmatpush.bf16.msra.mxu0 %v832
        %924 = vmatmul.bf16.gmra.mxu0 %v708
        %v925 = vpop.f32.mrf.mxu0
        %v926 = vadd.f32 %v746, %v925
        %v927 = vpop.f32.mrf.mxu0
        %v928 = vadd.f32 %v746, %v927
        %929 = vmatmul.bf16.gmra.mxu0 %v709
        %v930 = vpop.f32.mrf.mxu0
        %v931 = vadd.f32 %v746, %v930
        %v932 = vpop.f32.mrf.mxu0
        %v933 = vadd.f32 %v746, %v932
        %934 = vdwg.mxu0
        %v935 = vpack.c.bf16 %v907, %v888
        %v936 = vpack.c.bf16 %v926, %v926
        %v937 = vpack.c.bf16 %v909, %v890
        %v938 = vpack.c.bf16 %v928, %v928
        %v939 = vpack.c.bf16 %v912, %v893
        %v940 = vpack.c.bf16 %v931, %v931
        %v941 = vpack.c.bf16 %v914, %v895
        %v942 = vpack.c.bf16 %v933, %v933
        %v947 = vunpack.c.l.b16 %v935
        %v948 = vunpack.c.l.b16 %v937
        %v949 = vunpack.c.l.b16 %v939
        %v950 = vunpack.c.l.b16 %v941
        %v951 = vpack.c.b16 %v948, %v947
        %v952 = vpack.c.b16 %v950, %v949
        %v953 = vunpack.c.h.b16 %v935
        %v954 = vunpack.c.h.b16 %v937
        %v955 = vunpack.c.h.b16 %v939
        %v956 = vunpack.c.h.b16 %v941
        %v957 = vpack.c.b16 %v954, %v953
        %v958 = vpack.c.b16 %v956, %v955
        %vm959 = vcmask 261120
        %v961 = vsel %vm959, %v951, 0
        %v964 = vsel %vm959, %v952, 0
        %v967 = vsel %vm959, %v957, 0
        %v970 = vsel %vm959, %v958, 0
        %972 = vmatpush.bf16.xpose.msra.mxu0 0
        %973 = vmatpush.bf16.xpose.msra.mxu0 0
        %974 = vmatpush.bf16.xpose.msra.mxu0 0
        %975 = vmatpush.bf16.xpose.msra.mxu0 0
        %976 = vmatpush.bf16.xpose.msra.mxu0 0
        %977 = vmatpush.bf16.xpose.msra.mxu0 0
        %978 = vmatpush.bf16.xpose.msra.mxu0 %v970
        %979 = vmatpush.bf16.xpose.msra.mxu0 %v967
        %980 = vmatmul.bf16.gmra.mxu0 %v961
        %v981 = vpop.f32.mrf.mxu0
        %v982 = vadd.f32 0.0, %v981
        %v983 = vpop.f32.mrf.mxu0
        %v984 = vadd.f32 0.0, %v983
        %985 = vmatmul.bf16.gmra.mxu0 %v964
        %v986 = vpop.f32.mrf.mxu0
        %v987 = vadd.f32 0.0, %v986
        %v988 = vpop.f32.mrf.mxu0
        %v989 = vadd.f32 0.0, %v988
        %990 = vdwg.mxu0
        %v991 = vsel %vm959, %v982, -inf
        %992 = vmax.xlane.f32.xlu0 %v991
        %v993 = vpop.xlane.xlu0 %992
        %v994 = vsel %vm959, %v984, -inf
        %995 = vmax.xlane.f32.xlu0 %v994
        %v996 = vpop.xlane.xlu0 %995
        %v997 = vsel %vm959, %v987, -inf
        %998 = vmax.xlane.f32.xlu0 %v997
        %v999 = vpop.xlane.xlu0 %998
        %v1000 = vsel %vm959, %v989, -inf
        %1001 = vmax.xlane.f32.xlu0 %v1000
        %v1002 = vpop.xlane.xlu0 %1001
        %v1003 = vsub.f32 %v982, %v993
        %v1004 = vsub.f32 %v984, %v996
        %v1005 = vsub.f32 %v987, %v999
        %v1006 = vsub.f32 %v989, %v1002
        %v1007 = vmul.f32 %v1003, 1.442695
        %v1008 = vpow.pop %v1007
        %v1009 = vmul.f32 %v1004, 1.442695
        %v1010 = vpow.pop %v1009
        %v1011 = vmul.f32 %v1005, 1.442695
        %v1012 = vpow.pop %v1011
        %v1013 = vmul.f32 %v1006, 1.442695
        %v1014 = vpow.pop %v1013
        %v1015 = vsel %vm959, %v1008, 0.0
        %1016 = vadd.xlane.f32.xlu0 %v1015
        %v1017 = vpop.xlane.xlu0 %1016
        %v1018 = vsel %vm959, %v1010, 0.0
        %1019 = vadd.xlane.f32.xlu0 %v1018
        %v1020 = vpop.xlane.xlu0 %1019
        %v1021 = vsel %vm959, %v1012, 0.0
        %1022 = vadd.xlane.f32.xlu0 %v1021
        %v1023 = vpop.xlane.xlu0 %1022
        %v1024 = vsel %vm959, %v1014, 0.0
        %1025 = vadd.xlane.f32.xlu0 %v1024
        %v1026 = vpop.xlane.xlu0 %1025
        %v1027 = vrcp.pop %v1017
        %v1028 = vrcp.pop %v1020
        %v1029 = vrcp.pop %v1023
        %v1030 = vrcp.pop %v1026
        %v1031 = vmul.f32 %v1008, %v1027
        %v1032 = vmul.f32 %v1010, %v1028
        %v1033 = vmul.f32 %v1012, %v1029
        %v1034 = vmul.f32 %v1014, %v1030
        %v1035 = vpack.c.bf16 %v1032, %v1031
        %v1036 = vpack.c.bf16 %v1034, %v1033
        %v1041 = vunpack.c.l.b16 %v936
        %v1042 = vunpack.c.l.b16 %v938
        %v1043 = vunpack.c.l.b16 %v940
        %v1044 = vunpack.c.l.b16 %v942
        %v1045 = vpack.c.b16 %v1042, %v1041
        %v1046 = vpack.c.b16 %v1044, %v1043
        %v1050 = vsel %vm959, %v1035, 0
        %v1053 = vsel %vm959, %v1036, 0
        %1055 = vmatpush.bf16.msra.mxu0 0
        %1056 = vmatpush.bf16.msra.mxu0 0
        %1057 = vmatpush.bf16.msra.mxu0 0
        %1058 = vmatpush.bf16.msra.mxu0 0
        %1059 = vmatpush.bf16.msra.mxu0 0
        %1060 = vmatpush.bf16.msra.mxu0 0
        %1061 = vmatpush.bf16.msra.mxu0 %v1046
        %1062 = vmatpush.bf16.msra.mxu0 %v1045
        %1063 = vmatmul.bf16.gmra.mxu0 %v1050
        %v1064 = vpop.f32.mrf.mxu0
        %v1065 = vadd.f32 0.0, %v1064
        %v1066 = vpop.f32.mrf.mxu0
        %v1067 = vadd.f32 0.0, %v1066
        %1068 = vmatmul.bf16.gmra.mxu0 %v1053
        %v1069 = vpop.f32.mrf.mxu0
        %v1070 = vadd.f32 0.0, %v1069
        %v1071 = vpop.f32.mrf.mxu0
        %v1072 = vadd.f32 0.0, %v1071
        %1073 = vdwg.mxu0
        %v1074 = vpack.c.bf16 %v1067, %v1065
        %v1075 = vpack.c.bf16 %v1072, %v1070
        %v1076 = vld [vmem:[#allocation10] sm:$0xf]
        %v1077 = vld [vmem:[#allocation10 + $0x4] sm:$0xf]
        %v1078 = vld [vmem:[#allocation10 + $0x8] sm:$0xf]
        %v1079 = vld [vmem:[#allocation10 + $0xc] sm:$0xf]
        %1080 = vrot.lane.b32.xlu0 %v951, 96
        %v1081 = vpop.permute.xlu0 %1080
        %1082 = vrot.lane.b32.xlu0 %v952, 96
        %v1083 = vpop.permute.xlu0 %1082
        %1084 = vrot.lane.b32.xlu0 %v957, 96
        %v1085 = vpop.permute.xlu0 %1084
        %1086 = vrot.lane.b32.xlu0 %v958, 96
        %v1087 = vpop.permute.xlu0 %1086
        %v1089 = vsel %vm959, %v1081, 0
        %v1092 = vsel %vm959, %v1083, 0
        %v1095 = vsel %vm959, %v1085, 0
        %v1098 = vsel %vm959, %v1087, 0
        %1100 = vmatpush.bf16.xpose.msra.mxu0 0
        %1101 = vmatpush.bf16.xpose.msra.mxu0 0
        %1102 = vmatpush.bf16.xpose.msra.mxu0 0
        %1103 = vmatpush.bf16.xpose.msra.mxu0 0
        %1104 = vmatpush.bf16.xpose.msra.mxu0 0
        %1105 = vmatpush.bf16.xpose.msra.mxu0 0
        %1106 = vmatpush.bf16.xpose.msra.mxu0 %v1098
        %1107 = vmatpush.bf16.xpose.msra.mxu0 %v1095
        %1108 = vmatmul.bf16.gmra.mxu0 %v1089
        %v1109 = vpop.f32.mrf.mxu0
        %v1110 = vadd.f32 0.0, %v1109
        %v1111 = vpop.f32.mrf.mxu0
        %v1112 = vadd.f32 0.0, %v1111
        %1113 = vmatmul.bf16.gmra.mxu0 %v1092
        %v1114 = vpop.f32.mrf.mxu0
        %v1115 = vadd.f32 0.0, %v1114
        %v1116 = vpop.f32.mrf.mxu0
        %v1117 = vadd.f32 0.0, %v1116
        %1118 = vdwg.mxu0
        %v1119 = vsel %vm959, %v1110, -inf
        %1120 = vmax.xlane.f32.xlu0 %v1119
        %v1121 = vpop.xlane.xlu0 %1120
        %v1122 = vsel %vm959, %v1112, -inf
        %1123 = vmax.xlane.f32.xlu0 %v1122
        %v1124 = vpop.xlane.xlu0 %1123
        %v1125 = vsel %vm959, %v1115, -inf
        %1126 = vmax.xlane.f32.xlu0 %v1125
        %v1127 = vpop.xlane.xlu0 %1126
        %v1128 = vsel %vm959, %v1117, -inf
        %1129 = vmax.xlane.f32.xlu0 %v1128
        %v1130 = vpop.xlane.xlu0 %1129
        %v1131 = vsub.f32 %v1110, %v1121
        %v1132 = vsub.f32 %v1112, %v1124
        %v1133 = vsub.f32 %v1115, %v1127
        %v1134 = vsub.f32 %v1117, %v1130
        %v1135 = vmul.f32 %v1131, 1.442695
        %v1136 = vpow.pop %v1135
        %v1137 = vmul.f32 %v1132, 1.442695
        %v1138 = vpow.pop %v1137
        %v1139 = vmul.f32 %v1133, 1.442695
        %v1140 = vpow.pop %v1139
        %v1141 = vmul.f32 %v1134, 1.442695
        %v1142 = vpow.pop %v1141
        %v1143 = vsel %vm959, %v1136, 0.0
        %1144 = vadd.xlane.f32.xlu0 %v1143
        %v1145 = vpop.xlane.xlu0 %1144
        %v1146 = vsel %vm959, %v1138, 0.0
        %1147 = vadd.xlane.f32.xlu0 %v1146
        %v1148 = vpop.xlane.xlu0 %1147
        %v1149 = vsel %vm959, %v1140, 0.0
        %1150 = vadd.xlane.f32.xlu0 %v1149
        %v1151 = vpop.xlane.xlu0 %1150
        %v1152 = vsel %vm959, %v1142, 0.0
        %1153 = vadd.xlane.f32.xlu0 %v1152
        %v1154 = vpop.xlane.xlu0 %1153
        %v1155 = vrcp.pop %v1145
        %v1156 = vrcp.pop %v1148
        %v1157 = vrcp.pop %v1151
        %v1158 = vrcp.pop %v1154
        %v1159 = vmul.f32 %v1136, %v1155
        %v1160 = vmul.f32 %v1138, %v1156
        %v1161 = vmul.f32 %v1140, %v1157
        %v1162 = vmul.f32 %v1142, %v1158
        %v1163 = vpack.c.bf16 %v1160, %v1159
        %v1164 = vpack.c.bf16 %v1162, %v1161
        %1165 = vrot.lane.b32.xlu0 %v1045, 96
        %v1166 = vpop.permute.xlu0 %1165
        %1167 = vrot.lane.b32.xlu0 %v1046, 96
        %v1168 = vpop.permute.xlu0 %1167
        %v1172 = vsel %vm959, %v1163, 0
        %v1175 = vsel %vm959, %v1164, 0
        %1177 = vmatpush.bf16.msra.mxu0 0
        %1178 = vmatpush.bf16.msra.mxu0 0
        %1179 = vmatpush.bf16.msra.mxu0 0
        %1180 = vmatpush.bf16.msra.mxu0 0
        %1181 = vmatpush.bf16.msra.mxu0 0
        %1182 = vmatpush.bf16.msra.mxu0 0
        %1183 = vmatpush.bf16.msra.mxu0 %v1168
        %1184 = vmatpush.bf16.msra.mxu0 %v1166
        %1185 = vmatmul.bf16.gmra.mxu0 %v1172
        %v1186 = vpop.f32.mrf.mxu0
        %v1187 = vadd.f32 0.0, %v1186
        %v1188 = vpop.f32.mrf.mxu0
        %v1189 = vadd.f32 0.0, %v1188
        %1190 = vmatmul.bf16.gmra.mxu0 %v1175
        %v1191 = vpop.f32.mrf.mxu0
        %v1192 = vadd.f32 0.0, %v1191
        %v1193 = vpop.f32.mrf.mxu0
        %v1194 = vadd.f32 0.0, %v1193
        %1195 = vdwg.mxu0
        %v1196 = vpack.c.bf16 %v1189, %v1187
        %v1197 = vpack.c.bf16 %v1194, %v1192
        %v1198 = vld [vmem:[#allocation10 + $0x10] sm:$0xf]
        %v1199 = vld [vmem:[#allocation10 + $0x14] sm:$0xf]
        %v1200 = vld [vmem:[#allocation10 + $0x18] sm:$0xf]
        %v1201 = vld [vmem:[#allocation10 + $0x1c] sm:$0xf]
        %v1206 = vunpack.c.l.b16 %v1198
        %v1207 = vunpack.c.l.b16 %v1199
        %v1208 = vunpack.c.l.b16 %v1200
        %v1209 = vunpack.c.l.b16 %v1201
        %v1210 = vpack.c.b16 %v1207, %v1206
        %v1211 = vpack.c.b16 %v1209, %v1208
        %v1215 = vsel %vm959, %v1196, 0
        %v1218 = vsel %vm959, %v1197, 0
        %1220 = vmatpush.bf16.msra.mxu0 0
        %1221 = vmatpush.bf16.msra.mxu0 0
        %1222 = vmatpush.bf16.msra.mxu0 0
        %1223 = vmatpush.bf16.msra.mxu0 0
        %1224 = vmatpush.bf16.msra.mxu0 0
        %1225 = vmatpush.bf16.msra.mxu0 0
        %1226 = vmatpush.bf16.msra.mxu0 %v1211
        %1227 = vmatpush.bf16.msra.mxu0 %v1210
        %1228 = vmatmul.bf16.gmra.mxu0 %v1215
        %v1229 = vpop.f32.mrf.mxu0
        %v1230 = vadd.f32 0.0, %v1229
        %v1231 = vpop.f32.mrf.mxu0
        %v1232 = vadd.f32 0.0, %v1231
        %1233 = vmatmul.bf16.gmra.mxu0 %v1218
        %v1234 = vpop.f32.mrf.mxu0
        %v1235 = vadd.f32 0.0, %v1234
        %v1236 = vpop.f32.mrf.mxu0
        %v1237 = vadd.f32 0.0, %v1236
        %1238 = vdwg.mxu0
        %v1243 = vunpack.c.l.b16 %v1076
        %v1244 = vunpack.c.l.b16 %v1077
        %v1245 = vunpack.c.l.b16 %v1078
        %v1246 = vunpack.c.l.b16 %v1079
        %v1247 = vpack.c.b16 %v1244, %v1243
        %v1248 = vpack.c.b16 %v1246, %v1245
        %v1252 = vsel %vm959, %v1074, 0
        %v1255 = vsel %vm959, %v1075, 0
        %1257 = vmatpush.bf16.msra.mxu0 0
        %1258 = vmatpush.bf16.msra.mxu0 0
        %1259 = vmatpush.bf16.msra.mxu0 0
        %1260 = vmatpush.bf16.msra.mxu0 0
        %1261 = vmatpush.bf16.msra.mxu0 0
        %1262 = vmatpush.bf16.msra.mxu0 0
        %1263 = vmatpush.bf16.msra.mxu0 %v1248
        %1264 = vmatpush.bf16.msra.mxu0 %v1247
        %1265 = vmatmul.bf16.gmra.mxu0 %v1252
        %v1266 = vpop.f32.mrf.mxu0
        %v1267 = vadd.f32 %v1230, %v1266
        %v1268 = vpop.f32.mrf.mxu0
        %v1269 = vadd.f32 %v1232, %v1268
        %1270 = vmatmul.bf16.gmra.mxu0 %v1255
        %v1271 = vpop.f32.mrf.mxu0
        %v1272 = vadd.f32 %v1235, %v1271
        %v1273 = vpop.f32.mrf.mxu0
        %v1274 = vadd.f32 %v1237, %v1273
        %1275 = vdwg.mxu0
        %1276 = vrot.lane.b32.xlu0 %v951, 64
        %v1277 = vpop.permute.xlu0 %1276
        %1278 = vrot.lane.b32.xlu0 %v952, 64
        %v1279 = vpop.permute.xlu0 %1278
        %1280 = vrot.lane.b32.xlu0 %v957, 64
        %v1281 = vpop.permute.xlu0 %1280
        %1282 = vrot.lane.b32.xlu0 %v958, 64
        %v1283 = vpop.permute.xlu0 %1282
        %v1285 = vsel %vm959, %v1277, 0
        %v1288 = vsel %vm959, %v1279, 0
        %v1291 = vsel %vm959, %v1281, 0
        %v1294 = vsel %vm959, %v1283, 0
        %1296 = vmatpush.bf16.xpose.msra.mxu0 0
        %1297 = vmatpush.bf16.xpose.msra.mxu0 0
        %1298 = vmatpush.bf16.xpose.msra.mxu0 0
        %1299 = vmatpush.bf16.xpose.msra.mxu0 0
        %1300 = vmatpush.bf16.xpose.msra.mxu0 0
        %1301 = vmatpush.bf16.xpose.msra.mxu0 0
        %1302 = vmatpush.bf16.xpose.msra.mxu0 %v1294
        %1303 = vmatpush.bf16.xpose.msra.mxu0 %v1291
        %1304 = vmatmul.bf16.gmra.mxu0 %v1285
        %v1305 = vpop.f32.mrf.mxu0
        %v1306 = vadd.f32 0.0, %v1305
        %v1307 = vpop.f32.mrf.mxu0
        %v1308 = vadd.f32 0.0, %v1307
        %1309 = vmatmul.bf16.gmra.mxu0 %v1288
        %v1310 = vpop.f32.mrf.mxu0
        %v1311 = vadd.f32 0.0, %v1310
        %v1312 = vpop.f32.mrf.mxu0
        %v1313 = vadd.f32 0.0, %v1312
        %1314 = vdwg.mxu0
        %v1315 = vsel %vm959, %v1306, -inf
        %1316 = vmax.xlane.f32.xlu0 %v1315
        %v1317 = vpop.xlane.xlu0 %1316
        %v1318 = vsel %vm959, %v1308, -inf
        %1319 = vmax.xlane.f32.xlu0 %v1318
        %v1320 = vpop.xlane.xlu0 %1319
        %v1321 = vsel %vm959, %v1311, -inf
        %1322 = vmax.xlane.f32.xlu0 %v1321
        %v1323 = vpop.xlane.xlu0 %1322
        %v1324 = vsel %vm959, %v1313, -inf
        %1325 = vmax.xlane.f32.xlu0 %v1324
        %v1326 = vpop.xlane.xlu0 %1325
        %v1327 = vsub.f32 %v1306, %v1317
        %v1328 = vsub.f32 %v1308, %v1320
        %v1329 = vsub.f32 %v1311, %v1323
        %v1330 = vsub.f32 %v1313, %v1326
        %v1331 = vmul.f32 %v1327, 1.442695
        %v1332 = vpow.pop %v1331
        %v1333 = vmul.f32 %v1328, 1.442695
        %v1334 = vpow.pop %v1333
        %v1335 = vmul.f32 %v1329, 1.442695
        %v1336 = vpow.pop %v1335
        %v1337 = vmul.f32 %v1330, 1.442695
        %v1338 = vpow.pop %v1337
        %v1339 = vsel %vm959, %v1332, 0.0
        %1340 = vadd.xlane.f32.xlu0 %v1339
        %v1341 = vpop.xlane.xlu0 %1340
        %v1342 = vsel %vm959, %v1334, 0.0
        %1343 = vadd.xlane.f32.xlu0 %v1342
        %v1344 = vpop.xlane.xlu0 %1343
        %v1345 = vsel %vm959, %v1336, 0.0
        %1346 = vadd.xlane.f32.xlu0 %v1345
        %v1347 = vpop.xlane.xlu0 %1346
        %v1348 = vsel %vm959, %v1338, 0.0
        %1349 = vadd.xlane.f32.xlu0 %v1348
        %v1350 = vpop.xlane.xlu0 %1349
        %v1351 = vrcp.pop %v1341
        %v1352 = vrcp.pop %v1344
        %v1353 = vrcp.pop %v1347
        %v1354 = vrcp.pop %v1350
        %v1355 = vmul.f32 %v1332, %v1351
        %v1356 = vmul.f32 %v1334, %v1352
        %v1357 = vmul.f32 %v1336, %v1353
        %v1358 = vmul.f32 %v1338, %v1354
        %v1359 = vpack.c.bf16 %v1356, %v1355
        %v1360 = vpack.c.bf16 %v1358, %v1357
        %1361 = vrot.lane.b32.xlu0 %v1045, 64
        %v1362 = vpop.permute.xlu0 %1361
        %1363 = vrot.lane.b32.xlu0 %v1046, 64
        %v1364 = vpop.permute.xlu0 %1363
        %v1368 = vsel %vm959, %v1359, 0
        %v1371 = vsel %vm959, %v1360, 0
        %1373 = vmatpush.bf16.msra.mxu0 0
        %1374 = vmatpush.bf16.msra.mxu0 0
        %1375 = vmatpush.bf16.msra.mxu0 0
        %1376 = vmatpush.bf16.msra.mxu0 0
        %1377 = vmatpush.bf16.msra.mxu0 0
        %1378 = vmatpush.bf16.msra.mxu0 0
        %1379 = vmatpush.bf16.msra.mxu0 %v1364
        %1380 = vmatpush.bf16.msra.mxu0 %v1362
        %1381 = vmatmul.bf16.gmra.mxu0 %v1368
        %v1382 = vpop.f32.mrf.mxu0
        %v1383 = vadd.f32 0.0, %v1382
        %v1384 = vpop.f32.mrf.mxu0
        %v1385 = vadd.f32 0.0, %v1384
        %1386 = vmatmul.bf16.gmra.mxu0 %v1371
        %v1387 = vpop.f32.mrf.mxu0
        %v1388 = vadd.f32 0.0, %v1387
        %v1389 = vpop.f32.mrf.mxu0
        %v1390 = vadd.f32 0.0, %v1389
        %1391 = vdwg.mxu0
        %v1392 = vpack.c.bf16 %v1385, %v1383
        %v1393 = vpack.c.bf16 %v1390, %v1388
        %v1394 = vld [vmem:[#allocation10 + $0x20] sm:$0xf]
        %v1395 = vld [vmem:[#allocation10 + $0x24] sm:$0xf]
        %v1396 = vld [vmem:[#allocation10 + $0x28] sm:$0xf]
        %v1397 = vld [vmem:[#allocation10 + $0x2c] sm:$0xf]
        %v1402 = vunpack.c.l.b16 %v1394
        %v1403 = vunpack.c.l.b16 %v1395
        %v1404 = vunpack.c.l.b16 %v1396
        %v1405 = vunpack.c.l.b16 %v1397
        %v1406 = vpack.c.b16 %v1403, %v1402
        %v1407 = vpack.c.b16 %v1405, %v1404
        %v1411 = vsel %vm959, %v1392, 0
        %v1414 = vsel %vm959, %v1393, 0
        %1416 = vmatpush.bf16.msra.mxu0 0
        %1417 = vmatpush.bf16.msra.mxu0 0
        %1418 = vmatpush.bf16.msra.mxu0 0
        %1419 = vmatpush.bf16.msra.mxu0 0
        %1420 = vmatpush.bf16.msra.mxu0 0
        %1421 = vmatpush.bf16.msra.mxu0 0
        %1422 = vmatpush.bf16.msra.mxu0 %v1407
        %1423 = vmatpush.bf16.msra.mxu0 %v1406
        %1424 = vmatmul.bf16.gmra.mxu0 %v1411
        %v1425 = vpop.f32.mrf.mxu0
        %v1426 = vadd.f32 0.0, %v1425
        %v1427 = vpop.f32.mrf.mxu0
        %v1428 = vadd.f32 0.0, %v1427
        %1429 = vmatmul.bf16.gmra.mxu0 %v1414
        %v1430 = vpop.f32.mrf.mxu0
        %v1431 = vadd.f32 0.0, %v1430
        %v1432 = vpop.f32.mrf.mxu0
        %v1433 = vadd.f32 0.0, %v1432
        %1434 = vdwg.mxu0
        %v1435 = vadd.f32 %v1267, %v1426
        %v1436 = vadd.f32 %v1269, %v1428
        %v1437 = vadd.f32 %v1272, %v1431
        %v1438 = vadd.f32 %v1274, %v1433
        %1439 = vrot.lane.b32.xlu0 %v951, 32
        %v1440 = vpop.permute.xlu0 %1439
        %1441 = vrot.lane.b32.xlu0 %v952, 32
        %v1442 = vpop.permute.xlu0 %1441
        %1443 = vrot.lane.b32.xlu0 %v957, 32
        %v1444 = vpop.permute.xlu0 %1443
        %1445 = vrot.lane.b32.xlu0 %v958, 32
        %v1446 = vpop.permute.xlu0 %1445
        %v1448 = vsel %vm959, %v1440, 0
        %v1451 = vsel %vm959, %v1442, 0
        %v1454 = vsel %vm959, %v1444, 0
        %v1457 = vsel %vm959, %v1446, 0
        %1459 = vmatpush.bf16.xpose.msra.mxu0 0
        %1460 = vmatpush.bf16.xpose.msra.mxu0 0
        %1461 = vmatpush.bf16.xpose.msra.mxu0 0
        %1462 = vmatpush.bf16.xpose.msra.mxu0 0
        %1463 = vmatpush.bf16.xpose.msra.mxu0 0
        %1464 = vmatpush.bf16.xpose.msra.mxu0 0
        %1465 = vmatpush.bf16.xpose.msra.mxu0 %v1457
        %1466 = vmatpush.bf16.xpose.msra.mxu0 %v1454
        %1467 = vmatmul.bf16.gmra.mxu0 %v1448
        %v1468 = vpop.f32.mrf.mxu0
        %v1469 = vadd.f32 0.0, %v1468
        %v1470 = vpop.f32.mrf.mxu0
        %v1471 = vadd.f32 0.0, %v1470
        %1472 = vmatmul.bf16.gmra.mxu0 %v1451
        %v1473 = vpop.f32.mrf.mxu0
        %v1474 = vadd.f32 0.0, %v1473
        %v1475 = vpop.f32.mrf.mxu0
        %v1476 = vadd.f32 0.0, %v1475
        %1477 = vdwg.mxu0
        %v1478 = vsel %vm959, %v1469, -inf
        %1479 = vmax.xlane.f32.xlu0 %v1478
        %v1480 = vpop.xlane.xlu0 %1479
        %v1481 = vsel %vm959, %v1471, -inf
        %1482 = vmax.xlane.f32.xlu0 %v1481
        %v1483 = vpop.xlane.xlu0 %1482
        %v1484 = vsel %vm959, %v1474, -inf
        %1485 = vmax.xlane.f32.xlu0 %v1484
        %v1486 = vpop.xlane.xlu0 %1485
        %v1487 = vsel %vm959, %v1476, -inf
        %1488 = vmax.xlane.f32.xlu0 %v1487
        %v1489 = vpop.xlane.xlu0 %1488
        %v1490 = vsub.f32 %v1469, %v1480
        %v1491 = vsub.f32 %v1471, %v1483
        %v1492 = vsub.f32 %v1474, %v1486
        %v1493 = vsub.f32 %v1476, %v1489
        %v1494 = vmul.f32 %v1490, 1.442695
        %v1495 = vpow.pop %v1494
        %v1496 = vmul.f32 %v1491, 1.442695
        %v1497 = vpow.pop %v1496
        %v1498 = vmul.f32 %v1492, 1.442695
        %v1499 = vpow.pop %v1498
        %v1500 = vmul.f32 %v1493, 1.442695
        %v1501 = vpow.pop %v1500
        %v1502 = vsel %vm959, %v1495, 0.0
        %1503 = vadd.xlane.f32.xlu0 %v1502
        %v1504 = vpop.xlane.xlu0 %1503
        %v1505 = vsel %vm959, %v1497, 0.0
        %1506 = vadd.xlane.f32.xlu0 %v1505
        %v1507 = vpop.xlane.xlu0 %1506
        %v1508 = vsel %vm959, %v1499, 0.0
        %1509 = vadd.xlane.f32.xlu0 %v1508
        %v1510 = vpop.xlane.xlu0 %1509
        %v1511 = vsel %vm959, %v1501, 0.0
        %1512 = vadd.xlane.f32.xlu0 %v1511
        %v1513 = vpop.xlane.xlu0 %1512
        %v1514 = vrcp.pop %v1504
        %v1515 = vrcp.pop %v1507
        %v1516 = vrcp.pop %v1510
        %v1517 = vrcp.pop %v1513
        %v1518 = vmul.f32 %v1495, %v1514
        %v1519 = vmul.f32 %v1497, %v1515
        %v1520 = vmul.f32 %v1499, %v1516
        %v1521 = vmul.f32 %v1501, %v1517
        %v1522 = vpack.c.bf16 %v1519, %v1518
        %v1523 = vpack.c.bf16 %v1521, %v1520
        %1524 = vrot.lane.b32.xlu0 %v1045, 32
        %v1525 = vpop.permute.xlu0 %1524
        %1526 = vrot.lane.b32.xlu0 %v1046, 32
        %v1527 = vpop.permute.xlu0 %1526
        %v1531 = vsel %vm959, %v1522, 0
        %v1534 = vsel %vm959, %v1523, 0
        %1536 = vmatpush.bf16.msra.mxu0 0
        %1537 = vmatpush.bf16.msra.mxu0 0
        %1538 = vmatpush.bf16.msra.mxu0 0
        %1539 = vmatpush.bf16.msra.mxu0 0
        %1540 = vmatpush.bf16.msra.mxu0 0
        %1541 = vmatpush.bf16.msra.mxu0 0
        %1542 = vmatpush.bf16.msra.mxu0 %v1527
        %1543 = vmatpush.bf16.msra.mxu0 %v1525
        %1544 = vmatmul.bf16.gmra.mxu0 %v1531
        %v1545 = vpop.f32.mrf.mxu0
        %v1546 = vadd.f32 0.0, %v1545
        %v1547 = vpop.f32.mrf.mxu0
        %v1548 = vadd.f32 0.0, %v1547
        %1549 = vmatmul.bf16.gmra.mxu0 %v1534
        %v1550 = vpop.f32.mrf.mxu0
        %v1551 = vadd.f32 0.0, %v1550
        %v1552 = vpop.f32.mrf.mxu0
        %v1553 = vadd.f32 0.0, %v1552
        %1554 = vdwg.mxu0
        %v1555 = vpack.c.bf16 %v1548, %v1546
        %v1556 = vpack.c.bf16 %v1553, %v1551
        %v1557 = vld [vmem:[#allocation10 + $0x30] sm:$0xf]
        %v1558 = vld [vmem:[#allocation10 + $0x34] sm:$0xf]
        %v1559 = vld [vmem:[#allocation10 + $0x38] sm:$0xf]
        %v1560 = vld [vmem:[#allocation10 + $0x3c] sm:$0xf]
        %v1565 = vunpack.c.l.b16 %v1557
        %v1566 = vunpack.c.l.b16 %v1558
        %v1567 = vunpack.c.l.b16 %v1559
        %v1568 = vunpack.c.l.b16 %v1560
        %v1569 = vpack.c.b16 %v1566, %v1565
        %v1570 = vpack.c.b16 %v1568, %v1567
        %v1574 = vsel %vm959, %v1555, 0
        %v1577 = vsel %vm959, %v1556, 0
        %1579 = vmatpush.bf16.msra.mxu0 0
        %1580 = vmatpush.bf16.msra.mxu0 0
        %1581 = vmatpush.bf16.msra.mxu0 0
        %1582 = vmatpush.bf16.msra.mxu0 0
        %1583 = vmatpush.bf16.msra.mxu0 0
        %1584 = vmatpush.bf16.msra.mxu0 0
        %1585 = vmatpush.bf16.msra.mxu0 %v1570
        %1586 = vmatpush.bf16.msra.mxu0 %v1569
        %1587 = vmatmul.bf16.gmra.mxu0 %v1574
        %v1588 = vpop.f32.mrf.mxu0
        %v1589 = vadd.f32 0.0, %v1588
        %v1590 = vpop.f32.mrf.mxu0
        %v1591 = vadd.f32 0.0, %v1590
        %1592 = vmatmul.bf16.gmra.mxu0 %v1577
        %v1593 = vpop.f32.mrf.mxu0
        %v1594 = vadd.f32 0.0, %v1593
        %v1595 = vpop.f32.mrf.mxu0
        %v1596 = vadd.f32 0.0, %v1595
        %1597 = vdwg.mxu0
        %v1598 = vadd.f32 %v1435, %v1589
        %v1599 = vadd.f32 %v1436, %v1591
        %v1600 = vadd.f32 %v1437, %v1594
        %v1601 = vadd.f32 %v1438, %v1596
        %v1602 = vadd.f32 %v601, %v1598
        %v1603 = vadd.f32 %v602, %v1599
        %v1604 = vadd.f32 %v603, %v1600
        %v1605 = vadd.f32 %v604, %v1601
        %v1606 = vld [vmem:[#allocation11] sm:$0x1]
        %v1608 = vperm.slane %v1606, 0
        %v1610 = vadd.f32 %v1602, %v1608
        %v1611 = vadd.f32 %v1603, %v1608
        %v1612 = vadd.f32 %v1604, %v1608
        %v1613 = vadd.f32 %v1605, %v1608
        %1614 = vadd.xlane.f32.xlu0 %v1610
        %v1615 = vpop.xlane.xlu0 %1614
        %1616 = vadd.xlane.f32.xlu0 %v1611
        %v1617 = vpop.xlane.xlu0 %1616
        %1618 = vadd.xlane.f32.xlu0 %v1612
        %v1619 = vpop.xlane.xlu0 %1618
        %1620 = vadd.xlane.f32.xlu0 %v1613
        %v1621 = vpop.xlane.xlu0 %1620
        %v1622 = vmul.f32 %v1615, %v619
        %v1623 = vmul.f32 %v1617, %v619
        %v1624 = vmul.f32 %v1619, %v619
        %v1625 = vmul.f32 %v1621, %v619
        %v1626 = vsub.f32 %v1610, %v1622
        %v1627 = vsub.f32 %v1611, %v1623
        %v1628 = vsub.f32 %v1612, %v1624
        %v1629 = vsub.f32 %v1613, %v1625
        %v1630 = vmul.f32 %v1626, %v1626
        %v1631 = vmul.f32 %v1627, %v1627
        %v1632 = vmul.f32 %v1628, %v1628
        %v1633 = vmul.f32 %v1629, %v1629
        %1634 = vadd.xlane.f32.xlu0 %v1630
        %v1635 = vpop.xlane.xlu0 %1634
        %1636 = vadd.xlane.f32.xlu0 %v1631
        %v1637 = vpop.xlane.xlu0 %1636
        %1638 = vadd.xlane.f32.xlu0 %v1632
        %v1639 = vpop.xlane.xlu0 %1638
        %1640 = vadd.xlane.f32.xlu0 %v1633
        %v1641 = vpop.xlane.xlu0 %1640
        %v1642 = vmul.f32 %v1635, %v619
        %v1643 = vmul.f32 %v1637, %v619
        %v1644 = vmul.f32 %v1639, %v619
        %v1645 = vmul.f32 %v1641, %v619
        %v1646 = vadd.f32 %v1642, 1e-06
        %v1647 = vadd.f32 %v1643, 1e-06
        %v1648 = vadd.f32 %v1644, 1e-06
        %v1649 = vadd.f32 %v1645, 1e-06
        %v1650 = vrsqrt.pop %v1646
        %v1651 = vmul.f32 %v1650, %v1646
        %v1652 = vmul.f32 %v1651, %v1650
        %v1653 = vmul.f32 0.5, %v1652
        %v1654 = vsub.f32 1.5, %v1653
        %v1655 = vmul.f32 %v1650, %v1654
        %vm1656 = vweird.f32 %v1646
        %vm1657 = vweird.f32 %v1650
        %vm1658 = vmor %vm1656, %vm1657
        %v1659 = vsel %vm1658, %v1650, %v1655
        %v1660 = vrsqrt.pop %v1647
        %v1661 = vmul.f32 %v1660, %v1647
        %v1662 = vmul.f32 %v1661, %v1660
        %v1663 = vmul.f32 0.5, %v1662
        %v1664 = vsub.f32 1.5, %v1663
        %v1665 = vmul.f32 %v1660, %v1664
        %vm1666 = vweird.f32 %v1647
        %vm1667 = vweird.f32 %v1660
        %vm1668 = vmor %vm1666, %vm1667
        %v1669 = vsel %vm1668, %v1660, %v1665
        %v1670 = vrsqrt.pop %v1648
        %v1671 = vmul.f32 %v1670, %v1648
        %v1672 = vmul.f32 %v1671, %v1670
        %v1673 = vmul.f32 0.5, %v1672
        %v1674 = vsub.f32 1.5, %v1673
        %v1675 = vmul.f32 %v1670, %v1674
        %vm1676 = vweird.f32 %v1648
        %vm1677 = vweird.f32 %v1670
        %vm1678 = vmor %vm1676, %vm1677
        %v1679 = vsel %vm1678, %v1670, %v1675
        %v1680 = vrsqrt.pop %v1649
        %v1681 = vmul.f32 %v1680, %v1649
        %v1682 = vmul.f32 %v1681, %v1680
        %v1683 = vmul.f32 0.5, %v1682
        %v1684 = vsub.f32 1.5, %v1683
        %v1685 = vmul.f32 %v1680, %v1684
        %vm1686 = vweird.f32 %v1649
        %vm1687 = vweird.f32 %v1680
        %vm1688 = vmor %vm1686, %vm1687
        %v1689 = vsel %vm1688, %v1680, %v1685
        %v1690 = vmul.f32 %v1626, %v1659
        %v1691 = vmul.f32 %v1627, %v1669
        %v1692 = vmul.f32 %v1628, %v1679
        %v1693 = vmul.f32 %v1629, %v1689
        %v1694 = vld [vmem:[#allocation13] sm:$0x1]
        %v1696 = vperm.slane %v1694, 0
        %v1698 = vmul.f32 %v1690, %v1696
        %v1699 = vmul.f32 %v1691, %v1696
        %v1700 = vmul.f32 %v1692, %v1696
        %v1701 = vmul.f32 %v1693, %v1696
        %v1702 = vld [vmem:[#allocation14] sm:$0x1]
        %v1704 = vperm.slane %v1702, 0
        %v1706 = vadd.f32 %v1698, %v1704
        %v1707 = vadd.f32 %v1699, %v1704
        %v1708 = vadd.f32 %v1700, %v1704
        %v1709 = vadd.f32 %v1701, %v1704
        %v1710 = vpack.c.bf16 %v1707, %v1706
        %v1711 = vpack.c.bf16 %v1709, %v1708
        %v1712 = vld [vmem:[#allocation16] sm:$0xff]
        %v1713 = vld [vmem:[#allocation16 + $0x8] sm:$0xff]
        %v1714 = vld [vmem:[#allocation16 + $0x18] sm:$0xff]
        %v1715 = vld [vmem:[#allocation16 + $0x20] sm:$0xff]
        %v1716 = vld [vmem:[#allocation16 + $0x30] sm:$0xff]
        %v1717 = vld [vmem:[#allocation16 + $0x38] sm:$0xff]
        %v1718 = vld [vmem:[#allocation16 + $0x48] sm:$0xff]
        %v1719 = vld [vmem:[#allocation16 + $0x50] sm:$0xff]
        %v1720 = vld [vmem:[#allocation16 + $0x60] sm:$0xff]
        %v1721 = vld [vmem:[#allocation16 + $0x68] sm:$0xff]
        %v1722 = vld [vmem:[#allocation16 + $0x78] sm:$0xff]
        %v1723 = vld [vmem:[#allocation16 + $0x80] sm:$0xff]
        %v1724 = vld [vmem:[#allocation16 + $0x90] sm:$0xff]
        %v1725 = vld [vmem:[#allocation16 + $0x98] sm:$0xff]
        %v1726 = vld [vmem:[#allocation16 + $0xa8] sm:$0xff]
        %v1727 = vld [vmem:[#allocation16 + $0xb0] sm:$0xff]
        %v1728 = vld [vmem:[#allocation16 + $0xc0] sm:$0xff]
        %v1729 = vld [vmem:[#allocation16 + $0xc8] sm:$0xff]
        %v1730 = vld [vmem:[#allocation16 + $0xd8] sm:$0xff]
        %v1731 = vld [vmem:[#allocation16 + $0xe0] sm:$0xff]
        %v1732 = vld [vmem:[#allocation16 + $0xf0] sm:$0xff]
        %v1733 = vld [vmem:[#allocation16 + $0xf8] sm:$0xff]
        %v1734 = vld [vmem:[#allocation16 + $0x108] sm:$0xff]
        %v1735 = vld [vmem:[#allocation16 + $0x110] sm:$0xff]
        %v1736 = vld [vmem:[#allocation16 + $0x120] sm:$0xff]
        %v1737 = vld [vmem:[#allocation16 + $0x128] sm:$0xff]
        %v1738 = vld [vmem:[#allocation16 + $0x138] sm:$0xff]
        %v1739 = vld [vmem:[#allocation16 + $0x140] sm:$0xff]
        %v1740 = vld [vmem:[#allocation16 + $0x150] sm:$0xff]
        %v1741 = vld [vmem:[#allocation16 + $0x158] sm:$0xff]
        %v1742 = vld [vmem:[#allocation16 + $0x168] sm:$0xff]
        %v1743 = vld [vmem:[#allocation16 + $0x170] sm:$0xff]
        %v1744 = vld [vmem:[%s10] sm:$0xf]
        %v1746 = vperm.slane %v1744, 0
        %v1747 = vperm.slane %v1744, 1
        %v1748 = vperm.slane %v1744, 2
        %v1749 = vperm.slane %v1744, 3
        %v1786 = vunpack.c.l.b16 %v1712
        %v1787 = vunpack.c.h.b16 %v1712
        %v1788 = vunpack.c.l.b16 %v1713
        %v1789 = vunpack.c.h.b16 %v1713
        %v1790 = vunpack.c.l.b16 %v1714
        %v1791 = vunpack.c.h.b16 %v1714
        %v1792 = vunpack.c.l.b16 %v1715
        %v1793 = vunpack.c.h.b16 %v1715
        %v1794 = vunpack.c.l.b16 %v1716
        %v1795 = vunpack.c.h.b16 %v1716
        %v1796 = vunpack.c.l.b16 %v1717
        %v1797 = vunpack.c.h.b16 %v1717
        %v1798 = vunpack.c.l.b16 %v1718
        %v1799 = vunpack.c.h.b16 %v1718
        %v1800 = vunpack.c.l.b16 %v1719
        %v1801 = vunpack.c.h.b16 %v1719
        %v1802 = vunpack.c.l.b16 %v1720
        %v1803 = vunpack.c.h.b16 %v1720
        %v1804 = vunpack.c.l.b16 %v1721
        %v1805 = vunpack.c.h.b16 %v1721
        %v1806 = vunpack.c.l.b16 %v1722
        %v1807 = vunpack.c.h.b16 %v1722
        %v1808 = vunpack.c.l.b16 %v1723
        %v1809 = vunpack.c.h.b16 %v1723
        %v1810 = vunpack.c.l.b16 %v1724
        %v1811 = vunpack.c.h.b16 %v1724
        %v1812 = vunpack.c.l.b16 %v1725
        %v1813 = vunpack.c.h.b16 %v1725
        %v1814 = vunpack.c.l.b16 %v1726
        %v1815 = vunpack.c.h.b16 %v1726
        %v1816 = vunpack.c.l.b16 %v1727
        %v1817 = vunpack.c.h.b16 %v1727
        %v1818 = vunpack.c.l.b16 %v1728
        %v1819 = vunpack.c.h.b16 %v1728
        %v1820 = vunpack.c.l.b16 %v1729
        %v1821 = vunpack.c.h.b16 %v1729
        %v1822 = vunpack.c.l.b16 %v1730
        %v1823 = vunpack.c.h.b16 %v1730
        %v1824 = vunpack.c.l.b16 %v1731
        %v1825 = vunpack.c.h.b16 %v1731
        %v1826 = vunpack.c.l.b16 %v1732
        %v1827 = vunpack.c.h.b16 %v1732
        %v1828 = vunpack.c.l.b16 %v1733
        %v1829 = vunpack.c.h.b16 %v1733
        %v1830 = vunpack.c.l.b16 %v1734
        %v1831 = vunpack.c.h.b16 %v1734
        %v1832 = vunpack.c.l.b16 %v1735
        %v1833 = vunpack.c.h.b16 %v1735
        %v1834 = vunpack.c.l.b16 %v1736
        %v1835 = vunpack.c.h.b16 %v1736
        %v1836 = vunpack.c.l.b16 %v1737
        %v1837 = vunpack.c.h.b16 %v1737
        %v1838 = vunpack.c.l.b16 %v1738
        %v1839 = vunpack.c.h.b16 %v1738
        %v1840 = vunpack.c.l.b16 %v1739
        %v1841 = vunpack.c.h.b16 %v1739
        %v1842 = vunpack.c.l.b16 %v1740
        %v1843 = vunpack.c.h.b16 %v1740
        %v1844 = vunpack.c.l.b16 %v1741
        %v1845 = vunpack.c.h.b16 %v1741
        %v1846 = vunpack.c.l.b16 %v1742
        %v1847 = vunpack.c.h.b16 %v1742
        %v1848 = vunpack.c.l.b16 %v1743
        %v1849 = vunpack.c.h.b16 %v1743
        %v1850 = vpack.c.b16 %v1790, %v1786
        %v1851 = vpack.c.b16 %v1791, %v1787
        %v1852 = vpack.c.b16 %v1792, %v1788
        %v1853 = vpack.c.b16 %v1793, %v1789
        %v1854 = vpack.c.b16 %v1798, %v1794
        %v1855 = vpack.c.b16 %v1799, %v1795
        %v1856 = vpack.c.b16 %v1800, %v1796
        %v1857 = vpack.c.b16 %v1801, %v1797
        %v1858 = vpack.c.b16 %v1806, %v1802
        %v1859 = vpack.c.b16 %v1807, %v1803
        %v1860 = vpack.c.b16 %v1808, %v1804
        %v1861 = vpack.c.b16 %v1809, %v1805
        %v1862 = vpack.c.b16 %v1814, %v1810
        %v1863 = vpack.c.b16 %v1815, %v1811
        %v1864 = vpack.c.b16 %v1816, %v1812
        %v1865 = vpack.c.b16 %v1817, %v1813
        %v1866 = vpack.c.b16 %v1822, %v1818
        %v1867 = vpack.c.b16 %v1823, %v1819
        %v1868 = vpack.c.b16 %v1824, %v1820
        %v1869 = vpack.c.b16 %v1825, %v1821
        %v1870 = vpack.c.b16 %v1830, %v1826
        %v1871 = vpack.c.b16 %v1831, %v1827
        %v1872 = vpack.c.b16 %v1832, %v1828
        %v1873 = vpack.c.b16 %v1833, %v1829
        %v1874 = vpack.c.b16 %v1838, %v1834
        %v1875 = vpack.c.b16 %v1839, %v1835
        %v1876 = vpack.c.b16 %v1840, %v1836
        %v1877 = vpack.c.b16 %v1841, %v1837
        %v1878 = vpack.c.b16 %v1846, %v1842
        %v1879 = vpack.c.b16 %v1847, %v1843
        %v1880 = vpack.c.b16 %v1848, %v1844
        %v1881 = vpack.c.b16 %v1849, %v1845
        %1914 = vmatpush.bf16.msra.mxu0 %v1878
        %1915 = vmatpush.bf16.msra.mxu0 %v1874
        %1916 = vmatpush.bf16.msra.mxu0 %v1870
        %1917 = vmatpush.bf16.msra.mxu0 %v1866
        %1918 = vmatpush.bf16.msra.mxu0 %v1862
        %1919 = vmatpush.bf16.msra.mxu0 %v1858
        %1920 = vmatpush.bf16.msra.mxu0 %v1854
        %1921 = vmatpush.bf16.msra.mxu0 %v1850
        %1922 = vmatmul.bf16.gmra.mxu0 %v1710
        %v1923 = vpop.f32.mrf.mxu0
        %v1924 = vadd.f32 %v1746, %v1923
        %v1925 = vpop.f32.mrf.mxu0
        %v1926 = vadd.f32 %v1746, %v1925
        %1927 = vmatmul.bf16.gmra.mxu0 %v1711
        %v1928 = vpop.f32.mrf.mxu0
        %v1929 = vadd.f32 %v1746, %v1928
        %v1930 = vpop.f32.mrf.mxu0
        %v1931 = vadd.f32 %v1746, %v1930
        %1932 = vdwg.mxu0
        %1933 = vmatpush.bf16.msra.mxu0 %v1879
        %1934 = vmatpush.bf16.msra.mxu0 %v1875
        %1935 = vmatpush.bf16.msra.mxu0 %v1871
        %1936 = vmatpush.bf16.msra.mxu0 %v1867
        %1937 = vmatpush.bf16.msra.mxu0 %v1863
        %1938 = vmatpush.bf16.msra.mxu0 %v1859
        %1939 = vmatpush.bf16.msra.mxu0 %v1855
        %1940 = vmatpush.bf16.msra.mxu0 %v1851
        %1941 = vmatmul.bf16.gmra.mxu0 %v1710
        %v1942 = vpop.f32.mrf.mxu0
        %v1943 = vadd.f32 %v1747, %v1942
        %v1944 = vpop.f32.mrf.mxu0
        %v1945 = vadd.f32 %v1747, %v1944
        %1946 = vmatmul.bf16.gmra.mxu0 %v1711
        %v1947 = vpop.f32.mrf.mxu0
        %v1948 = vadd.f32 %v1747, %v1947
        %v1949 = vpop.f32.mrf.mxu0
        %v1950 = vadd.f32 %v1747, %v1949
        %1951 = vdwg.mxu0
        %1952 = vmatpush.bf16.msra.mxu0 %v1880
        %1953 = vmatpush.bf16.msra.mxu0 %v1876
        %1954 = vmatpush.bf16.msra.mxu0 %v1872
        %1955 = vmatpush.bf16.msra.mxu0 %v1868
        %1956 = vmatpush.bf16.msra.mxu0 %v1864
        %1957 = vmatpush.bf16.msra.mxu0 %v1860
        %1958 = vmatpush.bf16.msra.mxu0 %v1856
        %1959 = vmatpush.bf16.msra.mxu0 %v1852
        %1960 = vmatmul.bf16.gmra.mxu0 %v1710
        %v1961 = vpop.f32.mrf.mxu0
        %v1962 = vadd.f32 %v1748, %v1961
        %v1963 = vpop.f32.mrf.mxu0
        %v1964 = vadd.f32 %v1748, %v1963
        %1965 = vmatmul.bf16.gmra.mxu0 %v1711
        %v1966 = vpop.f32.mrf.mxu0
        %v1967 = vadd.f32 %v1748, %v1966
        %v1968 = vpop.f32.mrf.mxu0
        %v1969 = vadd.f32 %v1748, %v1968
        %1970 = vdwg.mxu0
        %1971 = vmatpush.bf16.msra.mxu0 %v1881
        %1972 = vmatpush.bf16.msra.mxu0 %v1877
        %1973 = vmatpush.bf16.msra.mxu0 %v1873
        %1974 = vmatpush.bf16.msra.mxu0 %v1869
        %1975 = vmatpush.bf16.msra.mxu0 %v1865
        %1976 = vmatpush.bf16.msra.mxu0 %v1861
        %1977 = vmatpush.bf16.msra.mxu0 %v1857
        %1978 = vmatpush.bf16.msra.mxu0 %v1853
        %1979 = vmatmul.bf16.gmra.mxu0 %v1710
        %v1980 = vpop.f32.mrf.mxu0
        %v1981 = vadd.f32 %v1749, %v1980
        %v1982 = vpop.f32.mrf.mxu0
        %v1983 = vadd.f32 %v1749, %v1982
        %1984 = vmatmul.bf16.gmra.mxu0 %v1711
        %v1985 = vpop.f32.mrf.mxu0
        %v1986 = vadd.f32 %v1749, %v1985
        %v1987 = vpop.f32.mrf.mxu0
        %v1988 = vadd.f32 %v1749, %v1987
        %1989 = vdwg.mxu0
        %v1990 = vmul.f32 %v1924, 0.5
        %v1991 = vmul.f32 %v1943, 0.5
        %v1992 = vmul.f32 %v1962, 0.5
        %v1993 = vmul.f32 %v1981, 0.5
        %v1994 = vmul.f32 %v1926, 0.5
        %v1995 = vmul.f32 %v1945, 0.5
        %v1996 = vmul.f32 %v1964, 0.5
        %v1997 = vmul.f32 %v1983, 0.5
        %v1998 = vmul.f32 %v1929, 0.5
        %v1999 = vmul.f32 %v1948, 0.5
        %v2000 = vmul.f32 %v1967, 0.5
        %v2001 = vmul.f32 %v1986, 0.5
        %v2002 = vmul.f32 %v1931, 0.5
        %v2003 = vmul.f32 %v1950, 0.5
        %v2004 = vmul.f32 %v1969, 0.5
        %v2005 = vmul.f32 %v1988, 0.5
        %v2006 = vmul.f32 %v1924, 0.044715
        %v2007 = vmul.f32 %v1943, 0.044715
        %v2008 = vmul.f32 %v1962, 0.044715
        %v2009 = vmul.f32 %v1981, 0.044715
        %v2010 = vmul.f32 %v1926, 0.044715
        %v2011 = vmul.f32 %v1945, 0.044715
        %v2012 = vmul.f32 %v1964, 0.044715
        %v2013 = vmul.f32 %v1983, 0.044715
        %v2014 = vmul.f32 %v1929, 0.044715
        %v2015 = vmul.f32 %v1948, 0.044715
        %v2016 = vmul.f32 %v1967, 0.044715
        %v2017 = vmul.f32 %v1986, 0.044715
        %v2018 = vmul.f32 %v1931, 0.044715
        %v2019 = vmul.f32 %v1950, 0.044715
        %v2020 = vmul.f32 %v1969, 0.044715
        %v2021 = vmul.f32 %v1988, 0.044715
        %v2022 = vmul.f32 %v2006, %v1924
        %v2023 = vmul.f32 %v2007, %v1943
        %v2024 = vmul.f32 %v2008, %v1962
        %v2025 = vmul.f32 %v2009, %v1981
        %v2026 = vmul.f32 %v2010, %v1926
        %v2027 = vmul.f32 %v2011, %v1945
        %v2028 = vmul.f32 %v2012, %v1964
        %v2029 = vmul.f32 %v2013, %v1983
        %v2030 = vmul.f32 %v2014, %v1929
        %v2031 = vmul.f32 %v2015, %v1948
        %v2032 = vmul.f32 %v2016, %v1967
        %v2033 = vmul.f32 %v2017, %v1986
        %v2034 = vmul.f32 %v2018, %v1931
        %v2035 = vmul.f32 %v2019, %v1950
        %v2036 = vmul.f32 %v2020, %v1969
        %v2037 = vmul.f32 %v2021, %v1988
        %v2038 = vmul.f32 %v2022, %v1924
        %v2039 = vmul.f32 %v2023, %v1943
        %v2040 = vmul.f32 %v2024, %v1962
        %v2041 = vmul.f32 %v2025, %v1981
        %v2042 = vmul.f32 %v2026, %v1926
        %v2043 = vmul.f32 %v2027, %v1945
        %v2044 = vmul.f32 %v2028, %v1964
        %v2045 = vmul.f32 %v2029, %v1983
        %v2046 = vmul.f32 %v2030, %v1929
        %v2047 = vmul.f32 %v2031, %v1948
        %v2048 = vmul.f32 %v2032, %v1967
        %v2049 = vmul.f32 %v2033, %v1986
        %v2050 = vmul.f32 %v2034, %v1931
        %v2051 = vmul.f32 %v2035, %v1950
        %v2052 = vmul.f32 %v2036, %v1969
        %v2053 = vmul.f32 %v2037, %v1988
        %v2054 = vadd.f32 %v1924, %v2038
        %v2055 = vadd.f32 %v1943, %v2039
        %v2056 = vadd.f32 %v1962, %v2040
        %v2057 = vadd.f32 %v1981, %v2041
        %v2058 = vadd.f32 %v1926, %v2042
        %v2059 = vadd.f32 %v1945, %v2043
        %v2060 = vadd.f32 %v1964, %v2044
        %v2061 = vadd.f32 %v1983, %v2045
        %v2062 = vadd.f32 %v1929, %v2046
        %v2063 = vadd.f32 %v1948, %v2047
        %v2064 = vadd.f32 %v1967, %v2048
        %v2065 = vadd.f32 %v1986, %v2049
        %v2066 = vadd.f32 %v1931, %v2050
        %v2067 = vadd.f32 %v1950, %v2051
        %v2068 = vadd.f32 %v1969, %v2052
        %v2069 = vadd.f32 %v1988, %v2053
        %v2070 = vmul.f32 %v2054, 0.7978846
        %v2071 = vmul.f32 %v2055, 0.7978846
        %v2072 = vmul.f32 %v2056, 0.7978846
        %v2073 = vmul.f32 %v2057, 0.7978846
        %v2074 = vmul.f32 %v2058, 0.7978846
        %v2075 = vmul.f32 %v2059, 0.7978846
        %v2076 = vmul.f32 %v2060, 0.7978846
        %v2077 = vmul.f32 %v2061, 0.7978846
        %v2078 = vmul.f32 %v2062, 0.7978846
        %v2079 = vmul.f32 %v2063, 0.7978846
        %v2080 = vmul.f32 %v2064, 0.7978846
        %v2081 = vmul.f32 %v2065, 0.7978846
        %v2082 = vmul.f32 %v2066, 0.7978846
        %v2083 = vmul.f32 %v2067, 0.7978846
        %v2084 = vmul.f32 %v2068, 0.7978846
        %v2085 = vmul.f32 %v2069, 0.7978846
        %v2086 = vtanh.pop %v2070
        %v2087 = vtanh.pop %v2071
        %v2088 = vtanh.pop %v2072
        %v2089 = vtanh.pop %v2073
        %v2090 = vtanh.pop %v2074
        %v2091 = vtanh.pop %v2075
        %v2092 = vtanh.pop %v2076
        %v2093 = vtanh.pop %v2077
        %v2094 = vtanh.pop %v2078
        %v2095 = vtanh.pop %v2079
        %v2096 = vtanh.pop %v2080
        %v2097 = vtanh.pop %v2081
        %v2098 = vtanh.pop %v2082
        %v2099 = vtanh.pop %v2083
        %v2100 = vtanh.pop %v2084
        %v2101 = vtanh.pop %v2085
        %v2102 = vadd.f32 %v2086, 1.0
        %v2103 = vadd.f32 %v2087, 1.0
        %v2104 = vadd.f32 %v2088, 1.0
        %v2105 = vadd.f32 %v2089, 1.0
        %v2106 = vadd.f32 %v2090, 1.0
        %v2107 = vadd.f32 %v2091, 1.0
        %v2108 = vadd.f32 %v2092, 1.0
        %v2109 = vadd.f32 %v2093, 1.0
        %v2110 = vadd.f32 %v2094, 1.0
        %v2111 = vadd.f32 %v2095, 1.0
        %v2112 = vadd.f32 %v2096, 1.0
        %v2113 = vadd.f32 %v2097, 1.0
        %v2114 = vadd.f32 %v2098, 1.0
        %v2115 = vadd.f32 %v2099, 1.0
        %v2116 = vadd.f32 %v2100, 1.0
        %v2117 = vadd.f32 %v2101, 1.0
        %v2118 = vmul.f32 %v1990, %v2102
        %v2119 = vmul.f32 %v1991, %v2103
        %v2120 = vmul.f32 %v1992, %v2104
        %v2121 = vmul.f32 %v1993, %v2105
        %v2122 = vmul.f32 %v1994, %v2106
        %v2123 = vmul.f32 %v1995, %v2107
        %v2124 = vmul.f32 %v1996, %v2108
        %v2125 = vmul.f32 %v1997, %v2109
        %v2126 = vmul.f32 %v1998, %v2110
        %v2127 = vmul.f32 %v1999, %v2111
        %v2128 = vmul.f32 %v2000, %v2112
        %v2129 = vmul.f32 %v2001, %v2113
        %v2130 = vmul.f32 %v2002, %v2114
        %v2131 = vmul.f32 %v2003, %v2115
        %v2132 = vmul.f32 %v2004, %v2116
        %v2133 = vmul.f32 %v2005, %v2117
        %v2134 = vpack.c.bf16 %v2122, %v2118
        %v2135 = vpack.c.bf16 %v2123, %v2119
        %v2136 = vpack.c.bf16 %v2124, %v2120
        %v2137 = vpack.c.bf16 %v2125, %v2121
        %v2138 = vpack.c.bf16 %v2130, %v2126
        %v2139 = vpack.c.bf16 %v2131, %v2127
        %v2140 = vpack.c.bf16 %v2132, %v2128
        %v2141 = vpack.c.bf16 %v2133, %v2129
        %v2142 = vld [vmem:[#allocation17] sm:$0xf]
        %v2143 = vld [vmem:[#allocation17 + $0x4] sm:$0xf]
        %v2144 = vld [vmem:[#allocation17 + $0x8] sm:$0xf]
        %v2145 = vld [vmem:[#allocation17 + $0xc] sm:$0xf]
        %v2146 = vld [vmem:[#allocation17 + $0x10] sm:$0xf]
        %v2147 = vld [vmem:[#allocation17 + $0x14] sm:$0xf]
        %v2148 = vld [vmem:[#allocation17 + $0x18] sm:$0xf]
        %v2149 = vld [vmem:[#allocation17 + $0x1c] sm:$0xf]
        %v2150 = vld [vmem:[#allocation17 + $0x20] sm:$0xf]
        %v2151 = vld [vmem:[#allocation17 + $0x24] sm:$0xf]
        %v2152 = vld [vmem:[#allocation17 + $0x28] sm:$0xf]
        %v2153 = vld [vmem:[#allocation17 + $0x2c] sm:$0xf]
        %v2154 = vld [vmem:[#allocation17 + $0x30] sm:$0xf]
        %v2155 = vld [vmem:[#allocation17 + $0x34] sm:$0xf]
        %v2156 = vld [vmem:[#allocation17 + $0x38] sm:$0xf]
        %v2157 = vld [vmem:[#allocation17 + $0x3c] sm:$0xf]
        %v2158 = vld [vmem:[#allocation17 + $0x40] sm:$0xf]
        %v2159 = vld [vmem:[#allocation17 + $0x44] sm:$0xf]
        %v2160 = vld [vmem:[#allocation17 + $0x48] sm:$0xf]
        %v2161 = vld [vmem:[#allocation17 + $0x4c] sm:$0xf]
        %v2162 = vld [vmem:[#allocation17 + $0x50] sm:$0xf]
        %v2163 = vld [vmem:[#allocation17 + $0x54] sm:$0xf]
        %v2164 = vld [vmem:[#allocation17 + $0x58] sm:$0xf]
        %v2165 = vld [vmem:[#allocation17 + $0x5c] sm:$0xf]
        %v2166 = vld [vmem:[#allocation17 + $0x60] sm:$0xf]
        %v2167 = vld [vmem:[#allocation17 + $0x64] sm:$0xf]
        %v2168 = vld [vmem:[#allocation17 + $0x68] sm:$0xf]
        %v2169 = vld [vmem:[#allocation17 + $0x6c] sm:$0xf]
        %v2170 = vld [vmem:[#allocation17 + $0x70] sm:$0xf]
        %v2171 = vld [vmem:[#allocation17 + $0x74] sm:$0xf]
        %v2172 = vld [vmem:[#allocation17 + $0x78] sm:$0xf]
        %v2173 = vld [vmem:[#allocation17 + $0x7c] sm:$0xf]
        %v2174 = vld [vmem:[#allocation17 + $0x80] sm:$0xf]
        %v2175 = vld [vmem:[#allocation17 + $0x84] sm:$0xf]
        %v2176 = vld [vmem:[#allocation17 + $0x88] sm:$0xf]
        %v2177 = vld [vmem:[#allocation17 + $0x8c] sm:$0xf]
        %v2178 = vld [vmem:[#allocation17 + $0x90] sm:$0xf]
        %v2179 = vld [vmem:[#allocation17 + $0x94] sm:$0xf]
        %v2180 = vld [vmem:[#allocation17 + $0x98] sm:$0xf]
        %v2181 = vld [vmem:[#allocation17 + $0x9c] sm:$0xf]
        %v2182 = vld [vmem:[#allocation17 + $0xa0] sm:$0xf]
        %v2183 = vld [vmem:[#allocation17 + $0xa4] sm:$0xf]
        %v2184 = vld [vmem:[#allocation17 + $0xa8] sm:$0xf]
        %v2185 = vld [vmem:[#allocation17 + $0xac] sm:$0xf]
        %v2186 = vld [vmem:[#allocation17 + $0xb0] sm:$0xf]
        %v2187 = vld [vmem:[#allocation17 + $0xb4] sm:$0xf]
        %v2188 = vld [vmem:[#allocation17 + $0xb8] sm:$0xf]
        %v2189 = vld [vmem:[#allocation17 + $0xbc] sm:$0xf]
        %v2190 = vld [vmem:[#allocation17 + $0xc0] sm:$0xf]
        %v2191 = vld [vmem:[#allocation17 + $0xc4] sm:$0xf]
        %v2192 = vld [vmem:[#allocation17 + $0xc8] sm:$0xf]
        %v2193 = vld [vmem:[#allocation17 + $0xcc] sm:$0xf]
        %v2194 = vld [vmem:[#allocation17 + $0xd0] sm:$0xf]
        %v2195 = vld [vmem:[#allocation17 + $0xd4] sm:$0xf]
        %v2196 = vld [vmem:[#allocation17 + $0xd8] sm:$0xf]
        %v2197 = vld [vmem:[#allocation17 + $0xdc] sm:$0xf]
        %v2198 = vld [vmem:[#allocation17 + $0xe0] sm:$0xf]
        %v2199 = vld [vmem:[#allocation17 + $0xe4] sm:$0xf]
        %v2200 = vld [vmem:[#allocation17 + $0xe8] sm:$0xf]
        %v2201 = vld [vmem:[#allocation17 + $0xec] sm:$0xf]
        %v2202 = vld [vmem:[#allocation17 + $0xf0] sm:$0xf]
        %v2203 = vld [vmem:[#allocation17 + $0xf4] sm:$0xf]
        %v2204 = vld [vmem:[#allocation17 + $0xf8] sm:$0xf]
        %v2205 = vld [vmem:[#allocation17 + $0xfc] sm:$0xf]
        %v2206 = vld [vmem:[#allocation16 + $0x10] sm:$0xff]
        %v2207 = vld [vmem:[#allocation16 + $0x28] sm:$0xff]
        %v2208 = vld [vmem:[#allocation16 + $0x40] sm:$0xff]
        %v2209 = vld [vmem:[#allocation16 + $0x58] sm:$0xff]
        %v2210 = vld [vmem:[#allocation16 + $0x70] sm:$0xff]
        %v2211 = vld [vmem:[#allocation16 + $0x88] sm:$0xff]
        %v2212 = vld [vmem:[#allocation16 + $0xa0] sm:$0xff]
        %v2213 = vld [vmem:[#allocation16 + $0xb8] sm:$0xff]
        %v2214 = vld [vmem:[#allocation16 + $0xd0] sm:$0xff]
        %v2215 = vld [vmem:[#allocation16 + $0xe8] sm:$0xff]
        %v2216 = vld [vmem:[#allocation16 + $0x100] sm:$0xff]
        %v2217 = vld [vmem:[#allocation16 + $0x118] sm:$0xff]
        %v2218 = vld [vmem:[#allocation16 + $0x130] sm:$0xff]
        %v2219 = vld [vmem:[#allocation16 + $0x148] sm:$0xff]
        %v2220 = vld [vmem:[#allocation16 + $0x160] sm:$0xff]
        %v2221 = vld [vmem:[#allocation16 + $0x178] sm:$0xff]
        %v2222 = vld [vmem:[%s10 + $0x4] sm:$0x3]
        %v2224 = vperm.slane %v2222, 0
        %v2225 = vperm.slane %v2222, 1
        %v2244 = vunpack.c.l.b16 %v2206
        %v2245 = vunpack.c.h.b16 %v2206
        %v2246 = vunpack.c.l.b16 %v2207
        %v2247 = vunpack.c.h.b16 %v2207
        %v2248 = vunpack.c.l.b16 %v2208
        %v2249 = vunpack.c.h.b16 %v2208
        %v2250 = vunpack.c.l.b16 %v2209
        %v2251 = vunpack.c.h.b16 %v2209
        %v2252 = vunpack.c.l.b16 %v2210
        %v2253 = vunpack.c.h.b16 %v2210
        %v2254 = vunpack.c.l.b16 %v2211
        %v2255 = vunpack.c.h.b16 %v2211
        %v2256 = vunpack.c.l.b16 %v2212
        %v2257 = vunpack.c.h.b16 %v2212
        %v2258 = vunpack.c.l.b16 %v2213
        %v2259 = vunpack.c.h.b16 %v2213
        %v2260 = vunpack.c.l.b16 %v2214
        %v2261 = vunpack.c.h.b16 %v2214
        %v2262 = vunpack.c.l.b16 %v2215
        %v2263 = vunpack.c.h.b16 %v2215
        %v2264 = vunpack.c.l.b16 %v2216
        %v2265 = vunpack.c.h.b16 %v2216
        %v2266 = vunpack.c.l.b16 %v2217
        %v2267 = vunpack.c.h.b16 %v2217
        %v2268 = vunpack.c.l.b16 %v2218
        %v2269 = vunpack.c.h.b16 %v2218
        %v2270 = vunpack.c.l.b16 %v2219
        %v2271 = vunpack.c.h.b16 %v2219
        %v2272 = vunpack.c.l.b16 %v2220
        %v2273 = vunpack.c.h.b16 %v2220
        %v2274 = vunpack.c.l.b16 %v2221
        %v2275 = vunpack.c.h.b16 %v2221
        %v2276 = vpack.c.b16 %v2246, %v2244
        %v2277 = vpack.c.b16 %v2247, %v2245
        %v2278 = vpack.c.b16 %v2250, %v2248
        %v2279 = vpack.c.b16 %v2251, %v2249
        %v2280 = vpack.c.b16 %v2254, %v2252
        %v2281 = vpack.c.b16 %v2255, %v2253
        %v2282 = vpack.c.b16 %v2258, %v2256
        %v2283 = vpack.c.b16 %v2259, %v2257
        %v2284 = vpack.c.b16 %v2262, %v2260
        %v2285 = vpack.c.b16 %v2263, %v2261
        %v2286 = vpack.c.b16 %v2266, %v2264
        %v2287 = vpack.c.b16 %v2267, %v2265
        %v2288 = vpack.c.b16 %v2270, %v2268
        %v2289 = vpack.c.b16 %v2271, %v2269
        %v2290 = vpack.c.b16 %v2274, %v2272
        %v2291 = vpack.c.b16 %v2275, %v2273
        %2308 = vmatpush.bf16.msra.mxu0 %v2290
        %2309 = vmatpush.bf16.msra.mxu0 %v2288
        %2310 = vmatpush.bf16.msra.mxu0 %v2286
        %2311 = vmatpush.bf16.msra.mxu0 %v2284
        %2312 = vmatpush.bf16.msra.mxu0 %v2282
        %2313 = vmatpush.bf16.msra.mxu0 %v2280
        %2314 = vmatpush.bf16.msra.mxu0 %v2278
        %2315 = vmatpush.bf16.msra.mxu0 %v2276
        %2316 = vmatmul.bf16.gmra.mxu0 %v1710
        %v2317 = vpop.f32.mrf.mxu0
        %v2318 = vadd.f32 %v2224, %v2317
        %v2319 = vpop.f32.mrf.mxu0
        %v2320 = vadd.f32 %v2224, %v2319
        %2321 = vmatmul.bf16.gmra.mxu0 %v1711
        %v2322 = vpop.f32.mrf.mxu0
        %v2323 = vadd.f32 %v2224, %v2322
        %v2324 = vpop.f32.mrf.mxu0
        %v2325 = vadd.f32 %v2224, %v2324
        %2326 = vdwg.mxu0
        %2327 = vmatpush.bf16.msra.mxu0 %v2291
        %2328 = vmatpush.bf16.msra.mxu0 %v2289
        %2329 = vmatpush.bf16.msra.mxu0 %v2287
        %2330 = vmatpush.bf16.msra.mxu0 %v2285
        %2331 = vmatpush.bf16.msra.mxu0 %v2283
        %2332 = vmatpush.bf16.msra.mxu0 %v2281
        %2333 = vmatpush.bf16.msra.mxu0 %v2279
        %2334 = vmatpush.bf16.msra.mxu0 %v2277
        %2335 = vmatmul.bf16.gmra.mxu0 %v1710
        %v2336 = vpop.f32.mrf.mxu0
        %v2337 = vadd.f32 %v2225, %v2336
        %v2338 = vpop.f32.mrf.mxu0
        %v2339 = vadd.f32 %v2225, %v2338
        %2340 = vmatmul.bf16.gmra.mxu0 %v1711
        %v2341 = vpop.f32.mrf.mxu0
        %v2342 = vadd.f32 %v2225, %v2341
        %v2343 = vpop.f32.mrf.mxu0
        %v2344 = vadd.f32 %v2225, %v2343
        %2345 = vdwg.mxu0
        %v2346 = vmul.f32 %v2318, 0.5
        %v2347 = vmul.f32 %v2337, 0.5
        %v2348 = vmul.f32 %v2320, 0.5
        %v2349 = vmul.f32 %v2339, 0.5
        %v2350 = vmul.f32 %v2323, 0.5
        %v2351 = vmul.f32 %v2342, 0.5
        %v2352 = vmul.f32 %v2325, 0.5
        %v2353 = vmul.f32 %v2344, 0.5
        %v2354 = vmul.f32 %v2318, 0.044715
        %v2355 = vmul.f32 %v2337, 0.044715
        %v2356 = vmul.f32 %v2320, 0.044715
        %v2357 = vmul.f32 %v2339, 0.044715
        %v2358 = vmul.f32 %v2323, 0.044715
        %v2359 = vmul.f32 %v2342, 0.044715
        %v2360 = vmul.f32 %v2325, 0.044715
        %v2361 = vmul.f32 %v2344, 0.044715
        %v2362 = vmul.f32 %v2354, %v2318
        %v2363 = vmul.f32 %v2355, %v2337
        %v2364 = vmul.f32 %v2356, %v2320
        %v2365 = vmul.f32 %v2357, %v2339
        %v2366 = vmul.f32 %v2358, %v2323
        %v2367 = vmul.f32 %v2359, %v2342
        %v2368 = vmul.f32 %v2360, %v2325
        %v2369 = vmul.f32 %v2361, %v2344
        %v2370 = vmul.f32 %v2362, %v2318
        %v2371 = vmul.f32 %v2363, %v2337
        %v2372 = vmul.f32 %v2364, %v2320
        %v2373 = vmul.f32 %v2365, %v2339
        %v2374 = vmul.f32 %v2366, %v2323
        %v2375 = vmul.f32 %v2367, %v2342
        %v2376 = vmul.f32 %v2368, %v2325
        %v2377 = vmul.f32 %v2369, %v2344
        %v2378 = vadd.f32 %v2318, %v2370
        %v2379 = vadd.f32 %v2337, %v2371
        %v2380 = vadd.f32 %v2320, %v2372
        %v2381 = vadd.f32 %v2339, %v2373
        %v2382 = vadd.f32 %v2323, %v2374
        %v2383 = vadd.f32 %v2342, %v2375
        %v2384 = vadd.f32 %v2325, %v2376
        %v2385 = vadd.f32 %v2344, %v2377
        %v2386 = vmul.f32 %v2378, 0.7978846
        %v2387 = vmul.f32 %v2379, 0.7978846
        %v2388 = vmul.f32 %v2380, 0.7978846
        %v2389 = vmul.f32 %v2381, 0.7978846
        %v2390 = vmul.f32 %v2382, 0.7978846
        %v2391 = vmul.f32 %v2383, 0.7978846
        %v2392 = vmul.f32 %v2384, 0.7978846
        %v2393 = vmul.f32 %v2385, 0.7978846
        %v2394 = vtanh.pop %v2386
        %v2395 = vtanh.pop %v2387
        %v2396 = vtanh.pop %v2388
        %v2397 = vtanh.pop %v2389
        %v2398 = vtanh.pop %v2390
        %v2399 = vtanh.pop %v2391
        %v2400 = vtanh.pop %v2392
        %v2401 = vtanh.pop %v2393
        %v2402 = vadd.f32 %v2394, 1.0
        %v2403 = vadd.f32 %v2395, 1.0
        %v2404 = vadd.f32 %v2396, 1.0
        %v2405 = vadd.f32 %v2397, 1.0
        %v2406 = vadd.f32 %v2398, 1.0
        %v2407 = vadd.f32 %v2399, 1.0
        %v2408 = vadd.f32 %v2400, 1.0
        %v2409 = vadd.f32 %v2401, 1.0
        %v2410 = vmul.f32 %v2346, %v2402
        %v2411 = vmul.f32 %v2347, %v2403
        %v2412 = vmul.f32 %v2348, %v2404
        %v2413 = vmul.f32 %v2349, %v2405
        %v2414 = vmul.f32 %v2350, %v2406
        %v2415 = vmul.f32 %v2351, %v2407
        %v2416 = vmul.f32 %v2352, %v2408
        %v2417 = vmul.f32 %v2353, %v2409
        %v2418 = vpack.c.bf16 %v2412, %v2410
        %v2419 = vpack.c.bf16 %v2413, %v2411
        %v2420 = vpack.c.bf16 %v2416, %v2414
        %v2421 = vpack.c.bf16 %v2417, %v2415
        %v2422 = vld [vmem:[#allocation17 + $0x100] sm:$0xf]
        %v2423 = vld [vmem:[#allocation17 + $0x104] sm:$0xf]
        %v2424 = vld [vmem:[#allocation17 + $0x108] sm:$0xf]
        %v2425 = vld [vmem:[#allocation17 + $0x10c] sm:$0xf]
        %v2426 = vld [vmem:[#allocation17 + $0x110] sm:$0xf]
        %v2427 = vld [vmem:[#allocation17 + $0x114] sm:$0xf]
        %v2428 = vld [vmem:[#allocation17 + $0x118] sm:$0xf]
        %v2429 = vld [vmem:[#allocation17 + $0x11c] sm:$0xf]
        %v2430 = vld [vmem:[#allocation17 + $0x120] sm:$0xf]
        %v2431 = vld [vmem:[#allocation17 + $0x124] sm:$0xf]
        %v2432 = vld [vmem:[#allocation17 + $0x128] sm:$0xf]
        %v2433 = vld [vmem:[#allocation17 + $0x12c] sm:$0xf]
        %v2434 = vld [vmem:[#allocation17 + $0x130] sm:$0xf]
        %v2435 = vld [vmem:[#allocation17 + $0x134] sm:$0xf]
        %v2436 = vld [vmem:[#allocation17 + $0x138] sm:$0xf]
        %v2437 = vld [vmem:[#allocation17 + $0x13c] sm:$0xf]
        %v2438 = vld [vmem:[#allocation17 + $0x140] sm:$0xf]
        %v2439 = vld [vmem:[#allocation17 + $0x144] sm:$0xf]
        %v2440 = vld [vmem:[#allocation17 + $0x148] sm:$0xf]
        %v2441 = vld [vmem:[#allocation17 + $0x14c] sm:$0xf]
        %v2442 = vld [vmem:[#allocation17 + $0x150] sm:$0xf]
        %v2443 = vld [vmem:[#allocation17 + $0x154] sm:$0xf]
        %v2444 = vld [vmem:[#allocation17 + $0x158] sm:$0xf]
        %v2445 = vld [vmem:[#allocation17 + $0x15c] sm:$0xf]
        %v2446 = vld [vmem:[#allocation17 + $0x160] sm:$0xf]
        %v2447 = vld [vmem:[#allocation17 + $0x164] sm:$0xf]
        %v2448 = vld [vmem:[#allocation17 + $0x168] sm:$0xf]
        %v2449 = vld [vmem:[#allocation17 + $0x16c] sm:$0xf]
        %v2450 = vld [vmem:[#allocation17 + $0x170] sm:$0xf]
        %v2451 = vld [vmem:[#allocation17 + $0x174] sm:$0xf]
        %v2452 = vld [vmem:[#allocation17 + $0x178] sm:$0xf]
        %v2453 = vld [vmem:[#allocation17 + $0x17c] sm:$0xf]
        %v2486 = vunpack.c.l.b16 %v2422
        %v2487 = vunpack.c.l.b16 %v2423
        %v2488 = vunpack.c.l.b16 %v2424
        %v2489 = vunpack.c.l.b16 %v2425
        %v2490 = vunpack.c.l.b16 %v2426
        %v2491 = vunpack.c.l.b16 %v2427
        %v2492 = vunpack.c.l.b16 %v2428
        %v2493 = vunpack.c.l.b16 %v2429
        %v2494 = vunpack.c.l.b16 %v2430
        %v2495 = vunpack.c.l.b16 %v2431
        %v2496 = vunpack.c.l.b16 %v2432
        %v2497 = vunpack.c.l.b16 %v2433
        %v2498 = vunpack.c.l.b16 %v2434
        %v2499 = vunpack.c.l.b16 %v2435
        %v2500 = vunpack.c.l.b16 %v2436
        %v2501 = vunpack.c.l.b16 %v2437
        %v2502 = vunpack.c.l.b16 %v2438
        %v2503 = vunpack.c.l.b16 %v2439
        %v2504 = vunpack.c.l.b16 %v2440
        %v2505 = vunpack.c.l.b16 %v2441
        %v2506 = vunpack.c.l.b16 %v2442
        %v2507 = vunpack.c.l.b16 %v2443
        %v2508 = vunpack.c.l.b16 %v2444
        %v2509 = vunpack.c.l.b16 %v2445
        %v2510 = vunpack.c.l.b16 %v2446
        %v2511 = vunpack.c.l.b16 %v2447
        %v2512 = vunpack.c.l.b16 %v2448
        %v2513 = vunpack.c.l.b16 %v2449
        %v2514 = vunpack.c.l.b16 %v2450
        %v2515 = vunpack.c.l.b16 %v2451
        %v2516 = vunpack.c.l.b16 %v2452
        %v2517 = vunpack.c.l.b16 %v2453
        %v2518 = vpack.c.b16 %v2487, %v2486
        %v2519 = vpack.c.b16 %v2489, %v2488
        %v2520 = vpack.c.b16 %v2491, %v2490
        %v2521 = vpack.c.b16 %v2493, %v2492
        %v2522 = vpack.c.b16 %v2495, %v2494
        %v2523 = vpack.c.b16 %v2497, %v2496
        %v2524 = vpack.c.b16 %v2499, %v2498
        %v2525 = vpack.c.b16 %v2501, %v2500
        %v2526 = vpack.c.b16 %v2503, %v2502
        %v2527 = vpack.c.b16 %v2505, %v2504
        %v2528 = vpack.c.b16 %v2507, %v2506
        %v2529 = vpack.c.b16 %v2509, %v2508
        %v2530 = vpack.c.b16 %v2511, %v2510
        %v2531 = vpack.c.b16 %v2513, %v2512
        %v2532 = vpack.c.b16 %v2515, %v2514
        %v2533 = vpack.c.b16 %v2517, %v2516
        %2550 = vmatpush.bf16.msra.mxu0 %v2525
        %2551 = vmatpush.bf16.msra.mxu0 %v2524
        %2552 = vmatpush.bf16.msra.mxu0 %v2523
        %2553 = vmatpush.bf16.msra.mxu0 %v2522
        %2554 = vmatpush.bf16.msra.mxu0 %v2521
        %2555 = vmatpush.bf16.msra.mxu0 %v2520
        %2556 = vmatpush.bf16.msra.mxu0 %v2519
        %2557 = vmatpush.bf16.msra.mxu0 %v2518
        %2558 = vmatmul.bf16.gmra.mxu0 %v2418
        %v2559 = vpop.f32.mrf.mxu0
        %v2560 = vadd.f32 0.0, %v2559
        %v2561 = vpop.f32.mrf.mxu0
        %v2562 = vadd.f32 0.0, %v2561
        %2563 = vmatmul.bf16.gmra.mxu0 %v2420
        %v2564 = vpop.f32.mrf.mxu0
        %v2565 = vadd.f32 0.0, %v2564
        %v2566 = vpop.f32.mrf.mxu0
        %v2567 = vadd.f32 0.0, %v2566
        %2568 = vdwg.mxu0
        %2569 = vmatpush.bf16.msra.mxu0 %v2533
        %2570 = vmatpush.bf16.msra.mxu0 %v2532
        %2571 = vmatpush.bf16.msra.mxu0 %v2531
        %2572 = vmatpush.bf16.msra.mxu0 %v2530
        %2573 = vmatpush.bf16.msra.mxu0 %v2529
        %2574 = vmatpush.bf16.msra.mxu0 %v2528
        %2575 = vmatpush.bf16.msra.mxu0 %v2527
        %2576 = vmatpush.bf16.msra.mxu0 %v2526
        %2577 = vmatmul.bf16.gmra.mxu0 %v2419
        %v2578 = vpop.f32.mrf.mxu0
        %v2579 = vadd.f32 %v2560, %v2578
        %v2580 = vpop.f32.mrf.mxu0
        %v2581 = vadd.f32 %v2562, %v2580
        %2582 = vmatmul.bf16.gmra.mxu0 %v2421
        %v2583 = vpop.f32.mrf.mxu0
        %v2584 = vadd.f32 %v2565, %v2583
        %v2585 = vpop.f32.mrf.mxu0
        %v2586 = vadd.f32 %v2567, %v2585
        %2587 = vdwg.mxu0
        %v2652 = vunpack.c.l.b16 %v2142
        %v2653 = vunpack.c.l.b16 %v2143
        %v2654 = vunpack.c.l.b16 %v2144
        %v2655 = vunpack.c.l.b16 %v2145
        %v2656 = vunpack.c.l.b16 %v2146
        %v2657 = vunpack.c.l.b16 %v2147
        %v2658 = vunpack.c.l.b16 %v2148
        %v2659 = vunpack.c.l.b16 %v2149
        %v2660 = vunpack.c.l.b16 %v2150
        %v2661 = vunpack.c.l.b16 %v2151
        %v2662 = vunpack.c.l.b16 %v2152
        %v2663 = vunpack.c.l.b16 %v2153
        %v2664 = vunpack.c.l.b16 %v2154
        %v2665 = vunpack.c.l.b16 %v2155
        %v2666 = vunpack.c.l.b16 %v2156
        %v2667 = vunpack.c.l.b16 %v2157
        %v2668 = vunpack.c.l.b16 %v2158
        %v2669 = vunpack.c.l.b16 %v2159
        %v2670 = vunpack.c.l.b16 %v2160
        %v2671 = vunpack.c.l.b16 %v2161
        %v2672 = vunpack.c.l.b16 %v2162
        %v2673 = vunpack.c.l.b16 %v2163
        %v2674 = vunpack.c.l.b16 %v2164
        %v2675 = vunpack.c.l.b16 %v2165
        %v2676 = vunpack.c.l.b16 %v2166
        %v2677 = vunpack.c.l.b16 %v2167
        %v2678 = vunpack.c.l.b16 %v2168
        %v2679 = vunpack.c.l.b16 %v2169
        %v2680 = vunpack.c.l.b16 %v2170
        %v2681 = vunpack.c.l.b16 %v2171
        %v2682 = vunpack.c.l.b16 %v2172
        %v2683 = vunpack.c.l.b16 %v2173
        %v2684 = vunpack.c.l.b16 %v2174
        %v2685 = vunpack.c.l.b16 %v2175
        %v2686 = vunpack.c.l.b16 %v2176
        %v2687 = vunpack.c.l.b16 %v2177
        %v2688 = vunpack.c.l.b16 %v2178
        %v2689 = vunpack.c.l.b16 %v2179
        %v2690 = vunpack.c.l.b16 %v2180
        %v2691 = vunpack.c.l.b16 %v2181
        %v2692 = vunpack.c.l.b16 %v2182
        %v2693 = vunpack.c.l.b16 %v2183
        %v2694 = vunpack.c.l.b16 %v2184
        %v2695 = vunpack.c.l.b16 %v2185
        %v2696 = vunpack.c.l.b16 %v2186
        %v2697 = vunpack.c.l.b16 %v2187
        %v2698 = vunpack.c.l.b16 %v2188
        %v2699 = vunpack.c.l.b16 %v2189
        %v2700 = vunpack.c.l.b16 %v2190
        %v2701 = vunpack.c.l.b16 %v2191
        %v2702 = vunpack.c.l.b16 %v2192
        %v2703 = vunpack.c.l.b16 %v2193
        %v2704 = vunpack.c.l.b16 %v2194
        %v2705 = vunpack.c.l.b16 %v2195
        %v2706 = vunpack.c.l.b16 %v2196
        %v2707 = vunpack.c.l.b16 %v2197
        %v2708 = vunpack.c.l.b16 %v2198
        %v2709 = vunpack.c.l.b16 %v2199
        %v2710 = vunpack.c.l.b16 %v2200
        %v2711 = vunpack.c.l.b16 %v2201
        %v2712 = vunpack.c.l.b16 %v2202
        %v2713 = vunpack.c.l.b16 %v2203
        %v2714 = vunpack.c.l.b16 %v2204
        %v2715 = vunpack.c.l.b16 %v2205
        %v2716 = vpack.c.b16 %v2653, %v2652
        %v2717 = vpack.c.b16 %v2655, %v2654
        %v2718 = vpack.c.b16 %v2657, %v2656
        %v2719 = vpack.c.b16 %v2659, %v2658
        %v2720 = vpack.c.b16 %v2661, %v2660
        %v2721 = vpack.c.b16 %v2663, %v2662
        %v2722 = vpack.c.b16 %v2665, %v2664
        %v2723 = vpack.c.b16 %v2667, %v2666
        %v2724 = vpack.c.b16 %v2669, %v2668
        %v2725 = vpack.c.b16 %v2671, %v2670
        %v2726 = vpack.c.b16 %v2673, %v2672
        %v2727 = vpack.c.b16 %v2675, %v2674
        %v2728 = vpack.c.b16 %v2677, %v2676
        %v2729 = vpack.c.b16 %v2679, %v2678
        %v2730 = vpack.c.b16 %v2681, %v2680
        %v2731 = vpack.c.b16 %v2683, %v2682
        %v2732 = vpack.c.b16 %v2685, %v2684
        %v2733 = vpack.c.b16 %v2687, %v2686
        %v2734 = vpack.c.b16 %v2689, %v2688
        %v2735 = vpack.c.b16 %v2691, %v2690
        %v2736 = vpack.c.b16 %v2693, %v2692
        %v2737 = vpack.c.b16 %v2695, %v2694
        %v2738 = vpack.c.b16 %v2697, %v2696
        %v2739 = vpack.c.b16 %v2699, %v2698
        %v2740 = vpack.c.b16 %v2701, %v2700
        %v2741 = vpack.c.b16 %v2703, %v2702
        %v2742 = vpack.c.b16 %v2705, %v2704
        %v2743 = vpack.c.b16 %v2707, %v2706
        %v2744 = vpack.c.b16 %v2709, %v2708
        %v2745 = vpack.c.b16 %v2711, %v2710
        %v2746 = vpack.c.b16 %v2713, %v2712
        %v2747 = vpack.c.b16 %v2715, %v2714
        %2780 = vmatpush.bf16.msra.mxu0 %v2723
        %2781 = vmatpush.bf16.msra.mxu0 %v2722
        %2782 = vmatpush.bf16.msra.mxu0 %v2721
        %2783 = vmatpush.bf16.msra.mxu0 %v2720
        %2784 = vmatpush.bf16.msra.mxu0 %v2719
        %2785 = vmatpush.bf16.msra.mxu0 %v2718
        %2786 = vmatpush.bf16.msra.mxu0 %v2717
        %2787 = vmatpush.bf16.msra.mxu0 %v2716
        %2788 = vmatmul.bf16.gmra.mxu0 %v2134
        %v2789 = vpop.f32.mrf.mxu0
        %v2790 = vadd.f32 %v2579, %v2789
        %v2791 = vpop.f32.mrf.mxu0
        %v2792 = vadd.f32 %v2581, %v2791
        %2793 = vmatmul.bf16.gmra.mxu0 %v2138
        %v2794 = vpop.f32.mrf.mxu0
        %v2795 = vadd.f32 %v2584, %v2794
        %v2796 = vpop.f32.mrf.mxu0
        %v2797 = vadd.f32 %v2586, %v2796
        %2798 = vdwg.mxu0
        %2799 = vmatpush.bf16.msra.mxu0 %v2731
        %2800 = vmatpush.bf16.msra.mxu0 %v2730
        %2801 = vmatpush.bf16.msra.mxu0 %v2729
        %2802 = vmatpush.bf16.msra.mxu0 %v2728
        %2803 = vmatpush.bf16.msra.mxu0 %v2727
        %2804 = vmatpush.bf16.msra.mxu0 %v2726
        %2805 = vmatpush.bf16.msra.mxu0 %v2725
        %2806 = vmatpush.bf16.msra.mxu0 %v2724
        %2807 = vmatmul.bf16.gmra.mxu0 %v2135
        %v2808 = vpop.f32.mrf.mxu0
        %v2809 = vadd.f32 %v2790, %v2808
        %v2810 = vpop.f32.mrf.mxu0
        %v2811 = vadd.f32 %v2792, %v2810
        %2812 = vmatmul.bf16.gmra.mxu0 %v2139
        %v2813 = vpop.f32.mrf.mxu0
        %v2814 = vadd.f32 %v2795, %v2813
        %v2815 = vpop.f32.mrf.mxu0
        %v2816 = vadd.f32 %v2797, %v2815
        %2817 = vdwg.mxu0
        %2818 = vmatpush.bf16.msra.mxu0 %v2739
        %2819 = vmatpush.bf16.msra.mxu0 %v2738
        %2820 = vmatpush.bf16.msra.mxu0 %v2737
        %2821 = vmatpush.bf16.msra.mxu0 %v2736
        %2822 = vmatpush.bf16.msra.mxu0 %v2735
        %2823 = vmatpush.bf16.msra.mxu0 %v2734
        %2824 = vmatpush.bf16.msra.mxu0 %v2733
        %2825 = vmatpush.bf16.msra.mxu0 %v2732
        %2826 = vmatmul.bf16.gmra.mxu0 %v2136
        %v2827 = vpop.f32.mrf.mxu0
        %v2828 = vadd.f32 %v2809, %v2827
        %v2829 = vpop.f32.mrf.mxu0
        %v2830 = vadd.f32 %v2811, %v2829
        %2831 = vmatmul.bf16.gmra.mxu0 %v2140
        %v2832 = vpop.f32.mrf.mxu0
        %v2833 = vadd.f32 %v2814, %v2832
        %v2834 = vpop.f32.mrf.mxu0
        %v2835 = vadd.f32 %v2816, %v2834
        %2836 = vdwg.mxu0
        %2837 = vmatpush.bf16.msra.mxu0 %v2747
        %2838 = vmatpush.bf16.msra.mxu0 %v2746
        %2839 = vmatpush.bf16.msra.mxu0 %v2745
        %2840 = vmatpush.bf16.msra.mxu0 %v2744
        %2841 = vmatpush.bf16.msra.mxu0 %v2743
        %2842 = vmatpush.bf16.msra.mxu0 %v2742
        %2843 = vmatpush.bf16.msra.mxu0 %v2741
        %2844 = vmatpush.bf16.msra.mxu0 %v2740
        %2845 = vmatmul.bf16.gmra.mxu0 %v2137
        %v2846 = vpop.f32.mrf.mxu0
        %v2847 = vadd.f32 %v2828, %v2846
        %v2848 = vpop.f32.mrf.mxu0
        %v2849 = vadd.f32 %v2830, %v2848
        %2850 = vmatmul.bf16.gmra.mxu0 %v2141
        %v2851 = vpop.f32.mrf.mxu0
        %v2852 = vadd.f32 %v2833, %v2851
        %v2853 = vpop.f32.mrf.mxu0
        %v2854 = vadd.f32 %v2835, %v2853
        %2855 = vdwg.mxu0
        %v2856 = vadd.f32 %v1610, %v2847
        %v2857 = vadd.f32 %v1611, %v2849
        %v2858 = vadd.f32 %v1612, %v2852
        %v2859 = vadd.f32 %v1613, %v2854
        %v2860 = vld [vmem:[%s12] sm:$0x1]
        %v2862 = vperm.slane %v2860, 0
        %v2864 = vadd.f32 %v2856, %v2862
        %v2865 = vadd.f32 %v2857, %v2862
        %v2866 = vadd.f32 %v2858, %v2862
        %v2867 = vadd.f32 %v2859, %v2862
        %2868 = vst [vmem:[%s599] sm:$0xff] %v2864
        %2869 = vst [vmem:[%s599 + $0x8] sm:$0xff] %v2865
        %2870 = vst [vmem:[%s599 + $0x10] sm:$0xff] %v2866
        %2871 = vst [vmem:[%s599 + $0x18] sm:$0xff] %v2867
        %s2872 = sand.u32 %s321, 1
        %s2873 = scalar_lea.sflag [#allocation4], %s2872
        %s2874 = sand.u32 %s321, 1
        %s2875 = smul.addr %s2874, 32
        %s2876 = scalar_lea.vmem [#allocation19], %s2875
        // Predicated region
        $region113: #{tpu_custom_call.1} parent=71 // pred_check
          %p2877 = pneg %p331
        $region114: #{tpu_custom_call.1} parent=71 // pred_check_branch
          %2879 = sbr.rel (%p2877) target = $region116
        $region115: #{tpu_custom_call.1} parent=71 // pred_region
          %2881 = vsyncadd %s2873, 0
          %s2882 = smul.addr %s35, 4
          %s2883 = smul.addr %s2882, 8
          %s2884 = scalar_lea.hbm %s13, %s2883
          %s2885 = sshll.u32 %s2876, 4
          %s2886 = int_to_ptr.vmem [resolvable:$true] %s2885
          %s2887 = sshll.u32 %s2884, 4
          %s2888 = int_to_ptr.hbm [resolvable:$true] %s2887
          %2893 = dma.vmem_to_hbm [thread:$0]  %s2886, 512, %s2888, %s2873, 128, 128, 8
        $region116: #{tpu_custom_call.1} parent=71 // pred_fallthru
          _
      $region72: #{tpu_custom_call.1} parent=5 // pred_fallthru
        _
      %p2894 = scmp.le.s32.totalorder 2, %s30
      // Predicated region
      $region117: #{tpu_custom_call.1} parent=5 // pred_check
        %p2895 = pneg %p2894
      $region118: #{tpu_custom_call.1} parent=5 // pred_check_branch
        %2897 = sbr.rel (%p2895) target = $region120
      $region119: #{tpu_custom_call.1} parent=5 // pred_region
        %s2898 = ssub.s32 %s30, 2
        // Predicated region
        $region121: #{tpu_custom_call.1} parent=119 // pred_check
          %p2899 = pneg %p337
        $region122: #{tpu_custom_call.1} parent=119 // pred_check_branch
          %2901 = sbr.rel (%p2899) target = $region124
        $region123: #{tpu_custom_call.1} parent=119 // pred_region
          %s2902 = sand.u32 %s322, 1
          %s2903 = scalar_lea.sflag [#allocation4], %s2902
          %s2904 = sand.u32 %s322, 1
          %s2905 = smul.addr %s2904, 32
          %s2906 = scalar_lea.vmem [#allocation19], %s2905
          %2908 = dma.done %s2903, 512
        $region124: #{tpu_custom_call.1} parent=119 // pred_fallthru
          _
      $region120: #{tpu_custom_call.1} parent=5 // pred_fallthru
        _
    $region6: #{tpu_custom_call.1} parent=1 // loop_footer
      %s34 = sadd.s32 1, %s30
    $region7: #{tpu_custom_call.1} parent=1 // loop_footer_branch
      %29 = sbr.rel target = $region3
    $region8: #{tpu_custom_call.1} parent=1 // loop_exit
      _
    %2909 = vsyncpa [#allocation3], 1
    %s2910 = scalar_lea.sflag [#allocation3], 1
    %2911 = vsyncpa %s2910, 1
    %2912 = vsyncpa [#allocation6], 1
    %2913 = vsyncpa [#allocation9], 1
    %2914 = vsyncpa [#allocation12], 1
    %2915 = vsyncpa [#allocation15], 1
    %2916 = vsyncpa [#allocation18], 1
    %2917 = vsyncpa [#allocation4], 1
    %s2918 = scalar_lea.sflag [#allocation4], 1
    %2919 = vsyncpa %s2918, 1

// kernel: tpu_custom_call.1
$region0: #{tpu_custom_call.1}
  #allocation0 [shape = 'u32[]', space=smem, size = 0x4, offset = 0x4, fixed_abs, tag = 'smem constant byte address 0x4 - core index']
  #allocation1 [shape = 'u32[72,128]{1,0:T(1,128)}', space=vmem, size = 0x9000, scoped, tag = 'internal scratch']
  %s0 = inlined_call_operand.hbm [shape: f32[2,32,128], index: 0, kind: input, shape index: {}]
  %s1 = inlined_call_operand.hbm [shape: f32[1,128], index: 1, kind: input, shape index: {}]
  %s2 = inlined_call_operand.hbm [shape: f32[1,128], index: 2, kind: input, shape index: {}]
  %s3 = inlined_call_operand.hbm [shape: bf16[128,384], index: 3, kind: input, shape index: {}]
  %s4 = inlined_call_operand.vmem [shape: f32[1,384], index: 4, kind: input, shape index: {}]
  %s5 = inlined_call_operand.hbm [shape: bf16[128,128], index: 5, kind: input, shape index: {}]
  %s6 = inlined_call_operand.hbm [shape: f32[1,128], index: 6, kind: input, shape index: {}]
  %s7 = inlined_call_operand.hbm [shape: f32[1,128], index: 7, kind: input, shape index: {}]
  %s8 = inlined_call_operand.hbm [shape: f32[1,128], index: 8, kind: input, shape index: {}]
  %s9 = inlined_call_operand.hbm [shape: bf16[128,768], index: 9, kind: input, shape index: {}]
  %s10 = inlined_call_operand.vmem [shape: f32[1,768], index: 10, kind: input, shape index: {}]
  %s11 = inlined_call_operand.hbm [shape: bf16[768,128], index: 11, kind: input, shape index: {}]
  %s12 = inlined_call_operand.vmem [shape: f32[1,128], index: 12, kind: input, shape index: {}]
  %s13 = inlined_call_operand.hbm [shape: f32[2,32,128], index: 13, kind: output, shape index: {}]
  %s14 = sld [smem:[#allocation0]]
  $region125: #{tpu_custom_call.1} parent=0
    _
  %s16 = ssub.s32 1, %s14
  %s17 = scalar_select 0, %s16, %s14
  $region1: #{tpu_custom_call.1} parent=0
    #allocation2 [shape = 'u8[32768]{0}', space=vmem, size = 0x8000, scoped, tag = 'input window, operand 0']
    #allocation3 [shape = 's32[2]{0}', space=sflag, size = 0x8, scoped, tag = 'scoped memory for tpu_custom_call.1']
    #allocation4 [shape = 's32[2]{0}', space=sflag, size = 0x8, scoped, tag = 'scoped memory for tpu_custom_call.1']
    #allocation5 [shape = 'u8[512]{0}', space=vmem, size = 0x400, scoped, tag = 'input window, operand 1, single buffered']
    #allocation6 [shape = 's32[1]{0}', space=sflag, size = 0x4, scoped, tag = 'scoped memory for tpu_custom_call.1']
    #allocation7 [shape = 'u8[512]{0}', space=vmem, size = 0x400, scoped, tag = 'input window, operand 2, single buffered']
    #allocation8 [shape = 'u8[98304]{0}', space=vmem, size = 0x18000, scoped, tag = 'input window, operand 3, single buffered']
    #allocation9 [shape = 's32[1]{0}', space=sflag, size = 0x4, scoped, tag = 'scoped memory for tpu_custom_call.1']
    #allocation10 [shape = 'u8[32768]{0}', space=vmem, size = 0x8000, scoped, tag = 'input window, operand 5, single buffered']
    #allocation11 [shape = 'u8[512]{0}', space=vmem, size = 0x400, scoped, tag = 'input window, operand 6, single buffered']
    #allocation12 [shape = 's32[1]{0}', space=sflag, size = 0x4, scoped, tag = 'scoped memory for tpu_custom_call.1']
    #allocation13 [shape = 'u8[512]{0}', space=vmem, size = 0x400, scoped, tag = 'input window, operand 7, single buffered']
    #allocation14 [shape = 'u8[512]{0}', space=vmem, size = 0x400, scoped, tag = 'input window, operand 8, single buffered']
    #allocation15 [shape = 's32[1]{0}', space=sflag, size = 0x4, scoped, tag = 'scoped memory for tpu_custom_call.1']
    #allocation16 [shape = 'u8[196608]{0}', space=vmem, size = 0x30000, scoped, tag = 'input window, operand 9, single buffered']
    #allocation17 [shape = 'u8[196608]{0}', space=vmem, size = 0x30000, scoped, tag = 'input window, operand 11, single buffered']
    #allocation18 [shape = 's32[1]{0}', space=sflag, size = 0x4, scoped, tag = 'scoped memory for tpu_custom_call.1']
    #allocation19 [shape = 'u8[32768]{0}', space=vmem, size = 0x8000, scoped, tag = 'output window, operand 0']
    %18 = vsyncpa [#allocation3], 0
    %s19 = scalar_lea.sflag [#allocation3], 1
    %20 = vsyncpa %s19, 0
    %21 = vsyncpa [#allocation6], 0
    %22 = vsyncpa [#allocation9], 0
    %23 = vsyncpa [#allocation12], 0
    %24 = vsyncpa [#allocation15], 0
    %25 = vsyncpa [#allocation18], 0
    %26 = vsyncpa [#allocation4], 0
    %s27 = scalar_lea.sflag [#allocation4], 1
    %28 = vsyncpa %s27, 0
    loop: start=0, step=1, limit=4
    $region2: #{tpu_custom_call.1} parent=1 // loop_pre_header
      _
    $region3: #{tpu_custom_call.1} parent=1 // loop_header
      %s30 = sphi 0, %s34
      %p31 = scmp.ge.s32.totalorder %s30, 4
      %s40 = sphi 0, %s42
      %s43 = sphi 0, %s40
      %s44 = sphi 0, %s43
      %s60 = sphi 0, %s44
      %s64 = sphi 0, %s64
      %s66 = sphi 0, %s64
      %s67 = sphi 0, %s66
      %s81 = sphi 0, %s67
      %s85 = sphi 0, %s85
      %s87 = sphi 0, %s85
      %s88 = sphi 0, %s87
      %s102 = sphi 0, %s88
      %s106 = sphi 0, %s106
      %s108 = sphi 0, %s106
      %s109 = sphi 0, %s108
      %s123 = sphi 0, %s109
      %s127 = sphi 0, %s127
      %s129 = sphi 0, %s127
      %s130 = sphi 0, %s129
      %s144 = sphi 0, %s130
      %s148 = sphi 0, %s148
      %s150 = sphi 0, %s148
      %s151 = sphi 0, %s150
      %s165 = sphi 0, %s151
      %s169 = sphi 0, %s169
      %s171 = sphi 0, %s169
      %s172 = sphi 0, %s171
      %s186 = sphi 0, %s172
      %s190 = sphi 0, %s190
      %s192 = sphi 0, %s190
      %s193 = sphi 0, %s192
      %s207 = sphi 0, %s193
      %s211 = sphi 0, %s211
      %s213 = sphi 0, %s211
      %s214 = sphi 0, %s213
      %s228 = sphi 0, %s214
      %s232 = sphi 0, %s232
      %s234 = sphi 0, %s232
      %s235 = sphi 0, %s234
      %s249 = sphi 0, %s235
      %s253 = sphi 0, %s253
      %s255 = sphi 0, %s253
      %s256 = sphi 0, %s255
      %s270 = sphi 0, %s256
      %s274 = sphi 0, %s274
      %s276 = sphi 0, %s274
      %s277 = sphi 0, %s276
      %s291 = sphi 0, %s277
      %s295 = sphi 0, %s295
      %s297 = sphi 0, %s295
      %s298 = sphi 0, %s297
      %s312 = sphi 0, %s298
      %s318 = sphi 0, %s320
      %s321 = sphi 0, %s318
      %s322 = sphi 0, %s321
      %s338 = sphi 0, %s322
    $region4: #{tpu_custom_call.1} parent=1 // loop_header_branch
      %33 = sbr.rel (%p31) target = $region8
    $region5: #{tpu_custom_call.1} parent=1 // loop_body
      %s35 = ssub.s32 %s30, 1
      %s36 = ssub.s32 %s30, 2
      %s37 = sadd.s32 %s30, 1
      %s38 = ssub.s32 %s30, %s37
      %p39 = scmp.eq.s32.totalorder %s38, 0
      %s41 = sadd.s32 %s40, 1
      %s42 = scalar_select %p39, %s40, %s41
      %p45 = pneg %p39
      %p46 = scmp.eq.s32.totalorder %s30, 1
      %p47 = por %p45, %p46
      %p48 = scmp.ne.s32.totalorder %s40, %s43
      %p49 = scmp.eq.s32.totalorder %s30, 0
      %p50 = por %p48, %p49
      %p51 = scmp.ne.s32.totalorder %s40, %s43
      %p52 = scmp.eq.s32.totalorder %s35, 1
      %p53 = por %p51, %p52
      %p54 = scmp.ne.s32.totalorder %s43, %s44
      %p55 = scmp.eq.s32.totalorder %s35, 0
      %p56 = por %p54, %p55
      %p57 = scmp.ne.s32.totalorder %s43, %s44
      %p58 = scmp.eq.s32.totalorder %s36, 1
      %p59 = por %p57, %p58
      %p61 = scmp.ne.s32.totalorder %s44, %s60
      %p62 = scmp.eq.s32.totalorder %s36, 0
      %p63 = por %p61, %p62
      %s65 = sadd.s32 %s64, 1
      %p68 = scmp.eq.s32.totalorder %s30, 1
      %p69 = scmp.ne.s32.totalorder %s64, %s66
      %p70 = scmp.eq.s32.totalorder %s30, 0
      %p71 = por %p69, %p70
      %p72 = scmp.ne.s32.totalorder %s64, %s66
      %p73 = scmp.eq.s32.totalorder %s35, 1
      %p74 = por %p72, %p73
      %p75 = scmp.ne.s32.totalorder %s66, %s67
      %p76 = scmp.eq.s32.totalorder %s35, 0
      %p77 = por %p75, %p76
      %p78 = scmp.ne.s32.totalorder %s66, %s67
      %p79 = scmp.eq.s32.totalorder %s36, 1
      %p80 = por %p78, %p79
      %p82 = scmp.ne.s32.totalorder %s67, %s81
      %p83 = scmp.eq.s32.totalorder %s36, 0
      %p84 = por %p82, %p83
      %s86 = sadd.s32 %s85, 1
      %p89 = scmp.eq.s32.totalorder %s30, 1
      %p90 = scmp.ne.s32.totalorder %s85, %s87
      %p91 = scmp.eq.s32.totalorder %s30, 0
      %p92 = por %p90, %p91
      %p93 = scmp.ne.s32.totalorder %s85, %s87
      %p94 = scmp.eq.s32.totalorder %s35, 1
      %p95 = por %p93, %p94
      %p96 = scmp.ne.s32.totalorder %s87, %s88
      %p97 = scmp.eq.s32.totalorder %s35, 0
      %p98 = por %p96, %p97
      %p99 = scmp.ne.s32.totalorder %s87, %s88
      %p100 = scmp.eq.s32.totalorder %s36, 1
      %p101 = por %p99, %p100
      %p103 = scmp.ne.s32.totalorder %s88, %s102
      %p104 = scmp.eq.s32.totalorder %s36, 0
      %p105 = por %p103, %p104
      %s107 = sadd.s32 %s106, 1
      %p110 = scmp.eq.s32.totalorder %s30, 1
      %p111 = scmp.ne.s32.totalorder %s106, %s108
      %p112 = scmp.eq.s32.totalorder %s30, 0
      %p113 = por %p111, %p112
      %p114 = scmp.ne.s32.totalorder %s106, %s108
      %p115 = scmp.eq.s32.totalorder %s35, 1
      %p116 = por %p114, %p115
      %p117 = scmp.ne.s32.totalorder %s108, %s109
      %p118 = scmp.eq.s32.totalorder %s35, 0
      %p119 = por %p117, %p118
      %p120 = scmp.ne.s32.totalorder %s108, %s109
      %p121 = scmp.eq.s32.totalorder %s36, 1
      %p122 = por %p120, %p121
      %p124 = scmp.ne.s32.totalorder %s109, %s123
      %p125 = scmp.eq.s32.totalorder %s36, 0
      %p126 = por %p124, %p125
      %s128 = sadd.s32 %s127, 1
      %p131 = scmp.eq.s32.totalorder %s30, 1
      %p132 = scmp.ne.s32.totalorder %s127, %s129
      %p133 = scmp.eq.s32.totalorder %s30, 0
      %p134 = por %p132, %p133
      %p135 = scmp.ne.s32.totalorder %s127, %s129
      %p136 = scmp.eq.s32.totalorder %s35, 1
      %p137 = por %p135, %p136
      %p138 = scmp.ne.s32.totalorder %s129, %s130
      %p139 = scmp.eq.s32.totalorder %s35, 0
      %p140 = por %p138, %p139
      %p141 = scmp.ne.s32.totalorder %s129, %s130
      %p142 = scmp.eq.s32.totalorder %s36, 1
      %p143 = por %p141, %p142
      %p145 = scmp.ne.s32.totalorder %s130, %s144
      %p146 = scmp.eq.s32.totalorder %s36, 0
      %p147 = por %p145, %p146
      %s149 = sadd.s32 %s148, 1
      %p152 = scmp.eq.s32.totalorder %s30, 1
      %p153 = scmp.ne.s32.totalorder %s148, %s150
      %p154 = scmp.eq.s32.totalorder %s30, 0
      %p155 = por %p153, %p154
      %p156 = scmp.ne.s32.totalorder %s148, %s150
      %p157 = scmp.eq.s32.totalorder %s35, 1
      %p158 = por %p156, %p157
      %p159 = scmp.ne.s32.totalorder %s150, %s151
      %p160 = scmp.eq.s32.totalorder %s35, 0
      %p161 = por %p159, %p160
      %p162 = scmp.ne.s32.totalorder %s150, %s151
      %p163 = scmp.eq.s32.totalorder %s36, 1
      %p164 = por %p162, %p163
      %p166 = scmp.ne.s32.totalorder %s151, %s165
      %p167 = scmp.eq.s32.totalorder %s36, 0
      %p168 = por %p166, %p167
      %s170 = sadd.s32 %s169, 1
      %p173 = scmp.eq.s32.totalorder %s30, 1
      %p174 = scmp.ne.s32.totalorder %s169, %s171
      %p175 = scmp.eq.s32.totalorder %s30, 0
      %p176 = por %p174, %p175
      %p177 = scmp.ne.s32.totalorder %s169, %s171
      %p178 = scmp.eq.s32.totalorder %s35, 1
      %p179 = por %p177, %p178
      %p180 = scmp.ne.s32.totalorder %s171, %s172
      %p181 = scmp.eq.s32.totalorder %s35, 0
      %p182 = por %p180, %p181
      %p183 = scmp.ne.s32.totalorder %s171, %s172
      %p184 = scmp.eq.s32.totalorder %s36, 1
      %p185 = por %p183, %p184
      %p187 = scmp.ne.s32.totalorder %s172, %s186
      %p188 = scmp.eq.s32.totalorder %s36, 0
      %p189 = por %p187, %p188
      %s191 = sadd.s32 %s190, 1
      %p194 = scmp.eq.s32.totalorder %s30, 1
      %p195 = scmp.ne.s32.totalorder %s190, %s192
      %p196 = scmp.eq.s32.totalorder %s30, 0
      %p197 = por %p195, %p196
      %p198 = scmp.ne.s32.totalorder %s190, %s192
      %p199 = scmp.eq.s32.totalorder %s35, 1
      %p200 = por %p198, %p199
      %p201 = scmp.ne.s32.totalorder %s192, %s193
      %p202 = scmp.eq.s32.totalorder %s35, 0
      %p203 = por %p201, %p202
      %p204 = scmp.ne.s32.totalorder %s192, %s193
      %p205 = scmp.eq.s32.totalorder %s36, 1
      %p206 = por %p204, %p205
      %p208 = scmp.ne.s32.totalorder %s193, %s207
      %p209 = scmp.eq.s32.totalorder %s36, 0
      %p210 = por %p208, %p209
      %s212 = sadd.s32 %s211, 1
      %p215 = scmp.eq.s32.totalorder %s30, 1
      %p216 = scmp.ne.s32.totalorder %s211, %s213
      %p217 = scmp.eq.s32.totalorder %s30, 0
      %p218 = por %p216, %p217
      %p219 = scmp.ne.s32.totalorder %s211, %s213
      %p220 = scmp.eq.s32.totalorder %s35, 1
      %p221 = por %p219, %p220
      %p222 = scmp.ne.s32.totalorder %s213, %s214
      %p223 = scmp.eq.s32.totalorder %s35, 0
      %p224 = por %p222, %p223
      %p225 = scmp.ne.s32.totalorder %s213, %s214
      %p226 = scmp.eq.s32.totalorder %s36, 1
      %p227 = por %p225, %p226
      %p229 = scmp.ne.s32.totalorder %s214, %s228
      %p230 = scmp.eq.s32.totalorder %s36, 0
      %p231 = por %p229, %p230
      %s233 = sadd.s32 %s232, 1
      %p236 = scmp.eq.s32.totalorder %s30, 1
      %p237 = scmp.ne.s32.totalorder %s232, %s234
      %p238 = scmp.eq.s32.totalorder %s30, 0
      %p239 = por %p237, %p238
      %p240 = scmp.ne.s32.totalorder %s232, %s234
      %p241 = scmp.eq.s32.totalorder %s35, 1
      %p242 = por %p240, %p241
      %p243 = scmp.ne.s32.totalorder %s234, %s235
      %p244 = scmp.eq.s32.totalorder %s35, 0
      %p245 = por %p243, %p244
      %p246 = scmp.ne.s32.totalorder %s234, %s235
      %p247 = scmp.eq.s32.totalorder %s36, 1
      %p248 = por %p246, %p247
      %p250 = scmp.ne.s32.totalorder %s235, %s249
      %p251 = scmp.eq.s32.totalorder %s36, 0
      %p252 = por %p250, %p251
      %s254 = sadd.s32 %s253, 1
      %p257 = scmp.eq.s32.totalorder %s30, 1
      %p258 = scmp.ne.s32.totalorder %s253, %s255
      %p259 = scmp.eq.s32.totalorder %s30, 0
      %p260 = por %p258, %p259
      %p261 = scmp.ne.s32.totalorder %s253, %s255
      %p262 = scmp.eq.s32.totalorder %s35, 1
      %p263 = por %p261, %p262
      %p264 = scmp.ne.s32.totalorder %s255, %s256
      %p265 = scmp.eq.s32.totalorder %s35, 0
      %p266 = por %p264, %p265
      %p267 = scmp.ne.s32.totalorder %s255, %s256
      %p268 = scmp.eq.s32.totalorder %s36, 1
      %p269 = por %p267, %p268
      %p271 = scmp.ne.s32.totalorder %s256, %s270
      %p272 = scmp.eq.s32.totalorder %s36, 0
      %p273 = por %p271, %p272
      %s275 = sadd.s32 %s274, 1
      %p278 = scmp.eq.s32.totalorder %s30, 1
      %p279 = scmp.ne.s32.totalorder %s274, %s276
      %p280 = scmp.eq.s32.totalorder %s30, 0
      %p281 = por %p279, %p280
      %p282 = scmp.ne.s32.totalorder %s274, %s276
      %p283 = scmp.eq.s32.totalorder %s35, 1
      %p284 = por %p282, %p283
      %p285 = scmp.ne.s32.totalorder %s276, %s277
      %p286 = scmp.eq.s32.totalorder %s35, 0
      %p287 = por %p285, %p286
      %p288 = scmp.ne.s32.totalorder %s276, %s277
      %p289 = scmp.eq.s32.totalorder %s36, 1
      %p290 = por %p288, %p289
      %p292 = scmp.ne.s32.totalorder %s277, %s291
      %p293 = scmp.eq.s32.totalorder %s36, 0
      %p294 = por %p292, %p293
      %s296 = sadd.s32 %s295, 1
      %p299 = scmp.eq.s32.totalorder %s30, 1
      %p300 = scmp.ne.s32.totalorder %s295, %s297
      %p301 = scmp.eq.s32.totalorder %s30, 0
      %p302 = por %p300, %p301
      %p303 = scmp.ne.s32.totalorder %s295, %s297
      %p304 = scmp.eq.s32.totalorder %s35, 1
      %p305 = por %p303, %p304
      %p306 = scmp.ne.s32.totalorder %s297, %s298
      %p307 = scmp.eq.s32.totalorder %s35, 0
      %p308 = por %p306, %p307
      %p309 = scmp.ne.s32.totalorder %s297, %s298
      %p310 = scmp.eq.s32.totalorder %s36, 1
      %p311 = por %p309, %p310
      %p313 = scmp.ne.s32.totalorder %s298, %s312
      %p314 = scmp.eq.s32.totalorder %s36, 0
      %p315 = por %p313, %p314
      %s316 = ssub.s32 %s30, %s37
      %p317 = scmp.eq.s32.totalorder %s316, 0
      %s319 = sadd.s32 %s318, 1
      %s320 = scalar_select %p317, %s318, %s319
      %p323 = pneg %p317
      %p324 = scmp.eq.s32.totalorder %s30, 1
      %p325 = por %p323, %p324
      %p326 = scmp.ne.s32.totalorder %s318, %s321
      %p327 = scmp.eq.s32.totalorder %s30, 0
      %p328 = por %p326, %p327
      %p329 = scmp.ne.s32.totalorder %s318, %s321
      %p330 = scmp.eq.s32.totalorder %s35, 1
      %p331 = por %p329, %p330
      %p332 = scmp.ne.s32.totalorder %s321, %s322
      %p333 = scmp.eq.s32.totalorder %s35, 0
      %p334 = por %p332, %p333
      %p335 = scmp.ne.s32.totalorder %s321, %s322
      %p336 = scmp.eq.s32.totalorder %s36, 1
      %p337 = por %p335, %p336
      %p339 = scmp.ne.s32.totalorder %s322, %s338
      %p340 = scmp.eq.s32.totalorder %s36, 0
      %p341 = por %p339, %p340
      %p342 = scmp.le.s32.totalorder 1, %s30
      %p343 = scmp.lt.s32.totalorder %s30, 3
      %p344 = pnand %p342, %p343
      %p345 = pneg %p344
      // Predicated region
      $region9: #{tpu_custom_call.1} parent=5 // pred_check
        _
      $region10: #{tpu_custom_call.1} parent=5 // pred_check_branch
        %347 = sbr.rel (%p344) target = $region12
      $region11: #{tpu_custom_call.1} parent=5 // pred_region
        %s348 = ssub.s32 %s30, 1
        // Predicated region
        $region13: #{tpu_custom_call.1} parent=11 // pred_check
          %p349 = pneg %p77
        $region14: #{tpu_custom_call.1} parent=11 // pred_check_branch
          %351 = sbr.rel (%p349) target = $region16
        $region15: #{tpu_custom_call.1} parent=11 // pred_region
          %353 = vsyncadd [#allocation6], 0
          %s355 = sshll.u32 %s1, 4
          %s356 = int_to_ptr.hbm [resolvable:$true] %s355
          %s357 = sshll.u32 [#allocation5], 4
          %s358 = int_to_ptr.vmem [resolvable:$true] %s357
          %360 = dma.hbm_to_vmem [thread:$0]  %s356, 16, %s358, [#allocation6]
        $region16: #{tpu_custom_call.1} parent=11 // pred_fallthru
          _
        // Predicated region
        $region17: #{tpu_custom_call.1} parent=11 // pred_check
          %p361 = pneg %p98
        $region18: #{tpu_custom_call.1} parent=11 // pred_check_branch
          %363 = sbr.rel (%p361) target = $region20
        $region19: #{tpu_custom_call.1} parent=11 // pred_region
          %365 = vsyncadd [#allocation6], 0
          %s367 = sshll.u32 %s2, 4
          %s368 = int_to_ptr.hbm [resolvable:$true] %s367
          %s369 = sshll.u32 [#allocation7], 4
          %s370 = int_to_ptr.vmem [resolvable:$true] %s369
          %372 = dma.hbm_to_vmem [thread:$0]  %s368, 16, %s370, [#allocation6]
        $region20: #{tpu_custom_call.1} parent=11 // pred_fallthru
          _
        // Predicated region
        $region21: #{tpu_custom_call.1} parent=11 // pred_check
          %p373 = pneg %p119
        $region22: #{tpu_custom_call.1} parent=11 // pred_check_branch
          %375 = sbr.rel (%p373) target = $region24
        $region23: #{tpu_custom_call.1} parent=11 // pred_region
          %377 = vsyncadd [#allocation9], 0
          %s378 = sshll.u32 %s3, 4
          %s379 = int_to_ptr.hbm [resolvable:$true] %s378
          %s380 = sshll.u32 [#allocation8], 4
          %s381 = int_to_ptr.vmem [resolvable:$true] %s380
          %386 = dma.hbm_to_vmem [thread:$0]  %s379, 3072, %s381, [#allocation9], 192, 192, 12
        $region24: #{tpu_custom_call.1} parent=11 // pred_fallthru
          _
        // Predicated region
        $region25: #{tpu_custom_call.1} parent=11 // pred_check
          %p387 = pneg %p140
        $region26: #{tpu_custom_call.1} parent=11 // pred_check_branch
          %389 = sbr.rel (%p387) target = $region28
        $region27: #{tpu_custom_call.1} parent=11 // pred_region
          _
        $region28: #{tpu_custom_call.1} parent=11 // pred_fallthru
          _
        // Predicated region
        $region29: #{tpu_custom_call.1} parent=11 // pred_check
          %p390 = pneg %p161
        $region30: #{tpu_custom_call.1} parent=11 // pred_check_branch
          %392 = sbr.rel (%p390) target = $region32
        $region31: #{tpu_custom_call.1} parent=11 // pred_region
          %394 = vsyncadd [#allocation9], 0
          %s395 = sshll.u32 %s5, 4
          %s396 = int_to_ptr.hbm [resolvable:$true] %s395
          %s397 = sshll.u32 [#allocation10], 4
          %s398 = int_to_ptr.vmem [resolvable:$true] %s397
          %403 = dma.hbm_to_vmem [thread:$0]  %s396, 1024, %s398, [#allocation9], 64, 64, 4
        $region32: #{tpu_custom_call.1} parent=11 // pred_fallthru
          _
        // Predicated region
        $region33: #{tpu_custom_call.1} parent=11 // pred_check
          %p404 = pneg %p182
        $region34: #{tpu_custom_call.1} parent=11 // pred_check_branch
          %406 = sbr.rel (%p404) target = $region36
        $region35: #{tpu_custom_call.1} parent=11 // pred_region
          %408 = vsyncadd [#allocation12], 0
          %s410 = sshll.u32 %s6, 4
          %s411 = int_to_ptr.hbm [resolvable:$true] %s410
          %s412 = sshll.u32 [#allocation11], 4
          %s413 = int_to_ptr.vmem [resolvable:$true] %s412
          %415 = dma.hbm_to_vmem [thread:$0]  %s411, 16, %s413, [#allocation12]
        $region36: #{tpu_custom_call.1} parent=11 // pred_fallthru
          _
        // Predicated region
        $region37: #{tpu_custom_call.1} parent=11 // pred_check
          %p416 = pneg %p203
        $region38: #{tpu_custom_call.1} parent=11 // pred_check_branch
          %418 = sbr.rel (%p416) target = $region40
        $region39: #{tpu_custom_call.1} parent=11 // pred_region
          %420 = vsyncadd [#allocation12], 0
          %s422 = sshll.u32 %s7, 4
          %s423 = int_to_ptr.hbm [resolvable:$true] %s422
          %s424 = sshll.u32 [#allocation13], 4
          %s425 = int_to_ptr.vmem [resolvable:$true] %s424
          %427 = dma.hbm_to_vmem [thread:$0]  %s423, 16, %s425, [#allocation12]
        $region40: #{tpu_custom_call.1} parent=11 // pred_fallthru
          _
        // Predicated region
        $region41: #{tpu_custom_call.1} parent=11 // pred_check
          %p428 = pneg %p224
        $region42: #{tpu_custom_call.1} parent=11 // pred_check_branch
          %430 = sbr.rel (%p428) target = $region44
        $region43: #{tpu_custom_call.1} parent=11 // pred_region
          %432 = vsyncadd [#allocation15], 0
          %s434 = sshll.u32 %s8, 4
          %s435 = int_to_ptr.hbm [resolvable:$true] %s434
          %s436 = sshll.u32 [#allocation14], 4
          %s437 = int_to_ptr.vmem [resolvable:$true] %s436
          %439 = dma.hbm_to_vmem [thread:$0]  %s435, 16, %s437, [#allocation15]
        $region44: #{tpu_custom_call.1} parent=11 // pred_fallthru
          _
        // Predicated region
        $region45: #{tpu_custom_call.1} parent=11 // pred_check
          %p440 = pneg %p245
        $region46: #{tpu_custom_call.1} parent=11 // pred_check_branch
          %442 = sbr.rel (%p440) target = $region48
        $region47: #{tpu_custom_call.1} parent=11 // pred_region
          %444 = vsyncadd [#allocation15], 0
          %s445 = sshll.u32 %s9, 4
          %s446 = int_to_ptr.hbm [resolvable:$true] %s445
          %s447 = sshll.u32 [#allocation16], 4
          %s448 = int_to_ptr.vmem [resolvable:$true] %s447
          %453 = dma.hbm_to_vmem [thread:$0]  %s446, 6144, %s448, [#allocation15], 384, 384, 24
        $region48: #{tpu_custom_call.1} parent=11 // pred_fallthru
          _
        // Predicated region
        $region49: #{tpu_custom_call.1} parent=11 // pred_check
          %p454 = pneg %p266
        $region50: #{tpu_custom_call.1} parent=11 // pred_check_branch
          %456 = sbr.rel (%p454) target = $region52
        $region51: #{tpu_custom_call.1} parent=11 // pred_region
          _
        $region52: #{tpu_custom_call.1} parent=11 // pred_fallthru
          _
        // Predicated region
        $region53: #{tpu_custom_call.1} parent=11 // pred_check
          %p457 = pneg %p287
        $region54: #{tpu_custom_call.1} parent=11 // pred_check_branch
          %459 = sbr.rel (%p457) target = $region56
        $region55: #{tpu_custom_call.1} parent=11 // pred_region
          %461 = vsyncadd [#allocation18], 0
          %s462 = sshll.u32 %s11, 4
          %s463 = int_to_ptr.hbm [resolvable:$true] %s462
          %s464 = sshll.u32 [#allocation17], 4
          %s465 = int_to_ptr.vmem [resolvable:$true] %s464
          %470 = dma.hbm_to_vmem [thread:$0]  %s463, 6144, %s465, [#allocation18], 64, 64, 4
        $region56: #{tpu_custom_call.1} parent=11 // pred_fallthru
          _
        // Predicated region
        $region57: #{tpu_custom_call.1} parent=11 // pred_check
          %p471 = pneg %p308
        $region58: #{tpu_custom_call.1} parent=11 // pred_check_branch
          %473 = sbr.rel (%p471) target = $region60
        $region59: #{tpu_custom_call.1} parent=11 // pred_region
          _
        $region60: #{tpu_custom_call.1} parent=11 // pred_fallthru
          _
      $region12: #{tpu_custom_call.1} parent=5 // pred_fallthru
        _
      %p474 = scmp.lt.s32.totalorder %s30, 2
      // Predicated region
      $region61: #{tpu_custom_call.1} parent=5 // pred_check
        %p475 = pneg %p474
      $region62: #{tpu_custom_call.1} parent=5 // pred_check_branch
        %477 = sbr.rel (%p475) target = $region64
      $region63: #{tpu_custom_call.1} parent=5 // pred_region
        // Predicated region
        $region65: #{tpu_custom_call.1} parent=63 // pred_check
          %p478 = pneg %p50
        $region66: #{tpu_custom_call.1} parent=63 // pred_check_branch
          %480 = sbr.rel (%p478) target = $region68
        $region67: #{tpu_custom_call.1} parent=63 // pred_region
          %s481 = sand.u32 %s40, 1
          %s482 = scalar_lea.sflag [#allocation3], %s481
          %s483 = sand.u32 %s40, 1
          %s484 = smul.addr %s483, 32
          %s485 = scalar_lea.vmem [#allocation2], %s484
          %487 = vsyncadd %s482, 0
          %s488 = smul.addr %s30, 4
          %s489 = smul.addr %s488, 8
          %s490 = scalar_lea.hbm %s0, %s489
          %s491 = sshll.u32 %s490, 4
          %s492 = int_to_ptr.hbm [resolvable:$true] %s491
          %s493 = sshll.u32 %s485, 4
          %s494 = int_to_ptr.vmem [resolvable:$true] %s493
          %499 = dma.hbm_to_vmem [thread:$0]  %s492, 512, %s494, %s482, 128, 128, 8
        $region68: #{tpu_custom_call.1} parent=63 // pred_fallthru
          _
      $region64: #{tpu_custom_call.1} parent=5 // pred_fallthru
        _
      %p500 = scmp.le.s32.totalorder 1, %s30
      %p501 = scmp.lt.s32.totalorder %s30, 3
      %p502 = pnand %p500, %p501
      %p503 = pneg %p502
      // Predicated region
      $region69: #{tpu_custom_call.1} parent=5 // pred_check
        _
      $region70: #{tpu_custom_call.1} parent=5 // pred_check_branch
        %505 = sbr.rel (%p502) target = $region72
      $region71: #{tpu_custom_call.1} parent=5 // pred_region
        %s506 = ssub.s32 %s30, 1
        %s507 = sand.u32 %s43, 1
        %s508 = scalar_lea.sflag [#allocation3], %s507
        %s509 = sand.u32 %s43, 1
        %s510 = smul.addr %s509, 32
        %s511 = scalar_lea.vmem [#allocation2], %s510
        // Predicated region
        $region73: #{tpu_custom_call.1} parent=71 // pred_check
          %p512 = pneg %p56
        $region74: #{tpu_custom_call.1} parent=71 // pred_check_branch
          %514 = sbr.rel (%p512) target = $region76
        $region75: #{tpu_custom_call.1} parent=71 // pred_region
          %516 = dma.done %s508, 512
        $region76: #{tpu_custom_call.1} parent=71 // pred_fallthru
          _
        // Predicated region
        $region77: #{tpu_custom_call.1} parent=71 // pred_check
          %p517 = pneg %p77
        $region78: #{tpu_custom_call.1} parent=71 // pred_check_branch
          %519 = sbr.rel (%p517) target = $region80
        $region79: #{tpu_custom_call.1} parent=71 // pred_region
          %521 = dma.done [#allocation6], 16
        $region80: #{tpu_custom_call.1} parent=71 // pred_fallthru
          _
        // Predicated region
        $region81: #{tpu_custom_call.1} parent=71 // pred_check
          %p522 = pneg %p98
        $region82: #{tpu_custom_call.1} parent=71 // pred_check_branch
          %524 = sbr.rel (%p522) target = $region84
        $region83: #{tpu_custom_call.1} parent=71 // pred_region
          %526 = dma.done [#allocation6], 16
        $region84: #{tpu_custom_call.1} parent=71 // pred_fallthru
          _
        // Predicated region
        $region85: #{tpu_custom_call.1} parent=71 // pred_check
          %p527 = pneg %p119
        $region86: #{tpu_custom_call.1} parent=71 // pred_check_branch
          %529 = sbr.rel (%p527) target = $region88
        $region87: #{tpu_custom_call.1} parent=71 // pred_region
          %531 = dma.done [#allocation9], 3072
        $region88: #{tpu_custom_call.1} parent=71 // pred_fallthru
          _
        // Predicated region
        $region89: #{tpu_custom_call.1} parent=71 // pred_check
          %p532 = pneg %p161
        $region90: #{tpu_custom_call.1} parent=71 // pred_check_branch
          %534 = sbr.rel (%p532) target = $region92
        $region91: #{tpu_custom_call.1} parent=71 // pred_region
          %536 = dma.done [#allocation9], 1024
        $region92: #{tpu_custom_call.1} parent=71 // pred_fallthru
          _
        // Predicated region
        $region93: #{tpu_custom_call.1} parent=71 // pred_check
          %p537 = pneg %p182
        $region94: #{tpu_custom_call.1} parent=71 // pred_check_branch
          %539 = sbr.rel (%p537) target = $region96
        $region95: #{tpu_custom_call.1} parent=71 // pred_region
          %541 = dma.done [#allocation12], 16
        $region96: #{tpu_custom_call.1} parent=71 // pred_fallthru
          _
        // Predicated region
        $region97: #{tpu_custom_call.1} parent=71 // pred_check
          %p542 = pneg %p203
        $region98: #{tpu_custom_call.1} parent=71 // pred_check_branch
          %544 = sbr.rel (%p542) target = $region100
        $region99: #{tpu_custom_call.1} parent=71 // pred_region
          %546 = dma.done [#allocation12], 16
        $region100: #{tpu_custom_call.1} parent=71 // pred_fallthru
          _
        // Predicated region
        $region101: #{tpu_custom_call.1} parent=71 // pred_check
          %p547 = pneg %p224
        $region102: #{tpu_custom_call.1} parent=71 // pred_check_branch
          %549 = sbr.rel (%p547) target = $region104
        $region103: #{tpu_custom_call.1} parent=71 // pred_region
          %551 = dma.done [#allocation15], 16
        $region104: #{tpu_custom_call.1} parent=71 // pred_fallthru
          _
        // Predicated region
        $region105: #{tpu_custom_call.1} parent=71 // pred_check
          %p552 = pneg %p245
        $region106: #{tpu_custom_call.1} parent=71 // pred_check_branch
          %554 = sbr.rel (%p552) target = $region108
        $region107: #{tpu_custom_call.1} parent=71 // pred_region
          %556 = dma.done [#allocation15], 6144
        $region108: #{tpu_custom_call.1} parent=71 // pred_fallthru
          _
        // Predicated region
        $region109: #{tpu_custom_call.1} parent=71 // pred_check
          %p557 = pneg %p287
        $region110: #{tpu_custom_call.1} parent=71 // pred_check_branch
          %559 = sbr.rel (%p557) target = $region112
        $region111: #{tpu_custom_call.1} parent=71 // pred_region
          %561 = dma.done [#allocation18], 6144
        $region112: #{tpu_custom_call.1} parent=71 // pred_fallthru
          _
        %s562 = sand.u32 %s43, 1
        %s563 = scalar_lea.sflag [#allocation3], %s562
        %s564 = sand.u32 %s43, 1
        %s565 = smul.addr %s564, 32
        %s566 = scalar_lea.vmem [#allocation2], %s565
        %p567 = pneg %p56
        %p568 = pneg %p53
        %p569 = pneg %p77
        %p570 = pneg %p74
        %p571 = pneg %p98
        %p572 = pneg %p95
        %p573 = pneg %p119
        %p574 = pneg %p116
        %p575 = pneg %p140
        %p576 = pneg %p137
        %p577 = pneg %p161
        %p578 = pneg %p158
        %p579 = pneg %p182
        %p580 = pneg %p179
        %p581 = pneg %p203
        %p582 = pneg %p200
        %p583 = pneg %p224
        %p584 = pneg %p221
        %p585 = pneg %p245
        %p586 = pneg %p242
        %p587 = pneg %p266
        %p588 = pneg %p263
        %p589 = pneg %p287
        %p590 = pneg %p284
        %p591 = pneg %p308
        %p592 = pneg %p305
        %p593 = pneg %p334
        %p594 = pneg %p331
        %s595 = sand.u32 %s321, 1
        %s596 = scalar_lea.sflag [#allocation4], %s595
        %s597 = sand.u32 %s321, 1
        %s598 = smul.addr %s597, 32
        %s599 = scalar_lea.vmem [#allocation19], %s598
        %v601 = vld [vmem:[%s511] sm:$0xff]
        %v602 = vld [vmem:[%s511 + $0x8] sm:$0xff]
        %v603 = vld [vmem:[%s511 + $0x10] sm:$0xff]
        %v604 = vld [vmem:[%s511 + $0x18] sm:$0xff]
        %605 = vadd.xlane.f32.xlu0 %v601
        %v606 = vpop.xlane.xlu0 %605
        %607 = vadd.xlane.f32.xlu0 %v602
        %v608 = vpop.xlane.xlu0 %607
        %609 = vadd.xlane.f32.xlu0 %v603
        %v610 = vpop.xlane.xlu0 %609
        %611 = vadd.xlane.f32.xlu0 %v604
        %v612 = vpop.xlane.xlu0 %611
        %v613 = vrcp.pop 128.0
        %v614 = vmul.f32 128.0, %v613
        %v615 = vsub.f32 1.0, %v614
        %v616 = vmul.f32 %v613, %v615
        %v617 = vadd.f32 %v613, %v616
        %vm618 = vweird.f32 %v613
        %v619 = vsel %vm618, %v613, %v617
        %v620 = vmul.f32 %v606, %v619
        %v621 = vmul.f32 %v608, %v619
        %v622 = vmul.f32 %v610, %v619
        %v623 = vmul.f32 %v612, %v619
        %v624 = vsub.f32 %v601, %v620
        %v625 = vsub.f32 %v602, %v621
        %v626 = vsub.f32 %v603, %v622
        %v627 = vsub.f32 %v604, %v623
        %v628 = vmul.f32 %v624, %v624
        %v629 = vmul.f32 %v625, %v625
        %v630 = vmul.f32 %v626, %v626
        %v631 = vmul.f32 %v627, %v627
        %632 = vadd.xlane.f32.xlu0 %v628
        %v633 = vpop.xlane.xlu0 %632
        %634 = vadd.xlane.f32.xlu0 %v629
        %v635 = vpop.xlane.xlu0 %634
        %636 = vadd.xlane.f32.xlu0 %v630
        %v637 = vpop.xlane.xlu0 %636
        %638 = vadd.xlane.f32.xlu0 %v631
        %v639 = vpop.xlane.xlu0 %638
        %v640 = vmul.f32 %v633, %v619
        %v641 = vmul.f32 %v635, %v619
        %v642 = vmul.f32 %v637, %v619
        %v643 = vmul.f32 %v639, %v619
        %v644 = vadd.f32 %v640, 1e-06
        %v645 = vadd.f32 %v641, 1e-06
        %v646 = vadd.f32 %v642, 1e-06
        %v647 = vadd.f32 %v643, 1e-06
        %v648 = vrsqrt.pop %v644
        %v649 = vmul.f32 %v648, %v644
        %v650 = vmul.f32 %v649, %v648
        %v651 = vmul.f32 0.5, %v650
        %v652 = vsub.f32 1.5, %v651
        %v653 = vmul.f32 %v648, %v652
        %vm654 = vweird.f32 %v644
        %vm655 = vweird.f32 %v648
        %vm656 = vmor %vm654, %vm655
        %v657 = vsel %vm656, %v648, %v653
        %v658 = vrsqrt.pop %v645
        %v659 = vmul.f32 %v658, %v645
        %v660 = vmul.f32 %v659, %v658
        %v661 = vmul.f32 0.5, %v660
        %v662 = vsub.f32 1.5, %v661
        %v663 = vmul.f32 %v658, %v662
        %vm664 = vweird.f32 %v645
        %vm665 = vweird.f32 %v658
        %vm666 = vmor %vm664, %vm665
        %v667 = vsel %vm666, %v658, %v663
        %v668 = vrsqrt.pop %v646
        %v669 = vmul.f32 %v668, %v646
        %v670 = vmul.f32 %v669, %v668
        %v671 = vmul.f32 0.5, %v670
        %v672 = vsub.f32 1.5, %v671
        %v673 = vmul.f32 %v668, %v672
        %vm674 = vweird.f32 %v646
        %vm675 = vweird.f32 %v668
        %vm676 = vmor %vm674, %vm675
        %v677 = vsel %vm676, %v668, %v673
        %v678 = vrsqrt.pop %v647
        %v679 = vmul.f32 %v678, %v647
        %v680 = vmul.f32 %v679, %v678
        %v681 = vmul.f32 0.5, %v680
        %v682 = vsub.f32 1.5, %v681
        %v683 = vmul.f32 %v678, %v682
        %vm684 = vweird.f32 %v647
        %vm685 = vweird.f32 %v678
        %vm686 = vmor %vm684, %vm685
        %v687 = vsel %vm686, %v678, %v683
        %v688 = vmul.f32 %v624, %v657
        %v689 = vmul.f32 %v625, %v667
        %v690 = vmul.f32 %v626, %v677
        %v691 = vmul.f32 %v627, %v687
        %v692 = vld [vmem:[#allocation5] sm:$0x1]
        %v694 = vperm.slane %v692, 0
        %v696 = vmul.f32 %v688, %v694
        %v697 = vmul.f32 %v689, %v694
        %v698 = vmul.f32 %v690, %v694
        %v699 = vmul.f32 %v691, %v694
        %v700 = vld [vmem:[#allocation7] sm:$0x1]
        %v702 = vperm.slane %v700, 0
        %v704 = vadd.f32 %v696, %v702
        %v705 = vadd.f32 %v697, %v702
        %v706 = vadd.f32 %v698, %v702
        %v707 = vadd.f32 %v699, %v702
        %v708 = vpack.c.bf16 %v705, %v704
        %v709 = vpack.c.bf16 %v707, %v706
        %v710 = vld [vmem:[#allocation8] sm:$0xff]
        %v711 = vld [vmem:[#allocation8 + $0x8] sm:$0xf]
        %v712 = vld [vmem:[#allocation8 + $0xc] sm:$0xff]
        %v713 = vld [vmem:[#allocation8 + $0x14] sm:$0xf]
        %v714 = vld [vmem:[#allocation8 + $0x18] sm:$0xff]
        %v715 = vld [vmem:[#allocation8 + $0x20] sm:$0xf]
        %v716 = vld [vmem:[#allocation8 + $0x24] sm:$0xff]
        %v717 = vld [vmem:[#allocation8 + $0x2c] sm:$0xf]
        %v718 = vld [vmem:[#allocation8 + $0x30] sm:$0xff]
        %v719 = vld [vmem:[#allocation8 + $0x38] sm:$0xf]
        %v720 = vld [vmem:[#allocation8 + $0x3c] sm:$0xff]
        %v721 = vld [vmem:[#allocation8 + $0x44] sm:$0xf]
        %v722 = vld [vmem:[#allocation8 + $0x48] sm:$0xff]
        %v723 = vld [vmem:[#allocation8 + $0x50] sm:$0xf]
        %v724 = vld [vmem:[#allocation8 + $0x54] sm:$0xff]
        %v725 = vld [vmem:[#allocation8 + $0x5c] sm:$0xf]
        %v726 = vld [vmem:[#allocation8 + $0x60] sm:$0xff]
        %v727 = vld [vmem:[#allocation8 + $0x68] sm:$0xf]
        %v728 = vld [vmem:[#allocation8 + $0x6c] sm:$0xff]
        %v729 = vld [vmem:[#allocation8 + $0x74] sm:$0xf]
        %v730 = vld [vmem:[#allocation8 + $0x78] sm:$0xff]
        %v731 = vld [vmem:[#allocation8 + $0x80] sm:$0xf]
        %v732 = vld [vmem:[#allocation8 + $0x84] sm:$0xff]
        %v733 = vld [vmem:[#allocation8 + $0x8c] sm:$0xf]
        %v734 = vld [vmem:[#allocation8 + $0x90] sm:$0xff]
        %v735 = vld [vmem:[#allocation8 + $0x98] sm:$0xf]
        %v736 = vld [vmem:[#allocation8 + $0x9c] sm:$0xff]
        %v737 = vld [vmem:[#allocation8 + $0xa4] sm:$0xf]
        %v738 = vld [vmem:[#allocation8 + $0xa8] sm:$0xff]
        %v739 = vld [vmem:[#allocation8 + $0xb0] sm:$0xf]
        %v740 = vld [vmem:[#allocation8 + $0xb4] sm:$0xff]
        %v741 = vld [vmem:[#allocation8 + $0xbc] sm:$0xf]
        %v742 = vld [vmem:[%s4] sm:$0x7]
        %v744 = vperm.slane %v742, 0
        %v745 = vperm.slane %v742, 1
        %v746 = vperm.slane %v742, 2
        %v782 = vunpack.c.l.b16 %v710
        %v783 = vunpack.c.h.b16 %v710
        %v784 = vunpack.c.l.b16 %v711
        %v785 = vunpack.c.l.b16 %v712
        %v786 = vunpack.c.h.b16 %v712
        %v787 = vunpack.c.l.b16 %v713
        %v788 = vunpack.c.l.b16 %v714
        %v789 = vunpack.c.h.b16 %v714
        %v790 = vunpack.c.l.b16 %v715
        %v791 = vunpack.c.l.b16 %v716
        %v792 = vunpack.c.h.b16 %v716
        %v793 = vunpack.c.l.b16 %v717
        %v794 = vunpack.c.l.b16 %v718
        %v795 = vunpack.c.h.b16 %v718
        %v796 = vunpack.c.l.b16 %v719
        %v797 = vunpack.c.l.b16 %v720
        %v798 = vunpack.c.h.b16 %v720
        %v799 = vunpack.c.l.b16 %v721
        %v800 = vunpack.c.l.b16 %v722
        %v801 = vunpack.c.h.b16 %v722
        %v802 = vunpack.c.l.b16 %v723
        %v803 = vunpack.c.l.b16 %v724
        %v804 = vunpack.c.h.b16 %v724
        %v805 = vunpack.c.l.b16 %v725
        %v806 = vunpack.c.l.b16 %v726
        %v807 = vunpack.c.h.b16 %v726
        %v808 = vunpack.c.l.b16 %v727
        %v809 = vunpack.c.l.b16 %v728
        %v810 = vunpack.c.h.b16 %v728
        %v811 = vunpack.c.l.b16 %v729
        %v812 = vunpack.c.l.b16 %v730
        %v813 = vunpack.c.h.b16 %v730
        %v814 = vunpack.c.l.b16 %v731
        %v815 = vunpack.c.l.b16 %v732
        %v816 = vunpack.c.h.b16 %v732
        %v817 = vunpack.c.l.b16 %v733
        %v818 = vunpack.c.l.b16 %v734
        %v819 = vunpack.c.h.b16 %v734
        %v820 = vunpack.c.l.b16 %v735
        %v821 = vunpack.c.l.b16 %v736
        %v822 = vunpack.c.h.b16 %v736
        %v823 = vunpack.c.l.b16 %v737
        %v824 = vunpack.c.l.b16 %v738
        %v825 = vunpack.c.h.b16 %v738
        %v826 = vunpack.c.l.b16 %v739
        %v827 = vunpack.c.l.b16 %v740
        %v828 = vunpack.c.h.b16 %v740
        %v829 = vunpack.c.l.b16 %v741
        %v830 = vpack.c.b16 %v785, %v782
        %v831 = vpack.c.b16 %v786, %v783
        %v832 = vpack.c.b16 %v787, %v784
        %v833 = vpack.c.b16 %v791, %v788
        %v834 = vpack.c.b16 %v792, %v789
        %v835 = vpack.c.b16 %v793, %v790
        %v836 = vpack.c.b16 %v797, %v794
        %v837 = vpack.c.b16 %v798, %v795
        %v838 = vpack.c.b16 %v799, %v796
        %v839 = vpack.c.b16 %v803, %v800
        %v840 = vpack.c.b16 %v804, %v801
        %v841 = vpack.c.b16 %v805, %v802
        %v842 = vpack.c.b16 %v809, %v806
        %v843 = vpack.c.b16 %v810, %v807
        %v844 = vpack.c.b16 %v811, %v808
        %v845 = vpack.c.b16 %v815, %v812
        %v846 = vpack.c.b16 %v816, %v813
        %v847 = vpack.c.b16 %v817, %v814
        %v848 = vpack.c.b16 %v821, %v818
        %v849 = vpack.c.b16 %v822, %v819
        %v850 = vpack.c.b16 %v823, %v820
        %v851 = vpack.c.b16 %v827, %v824
        %v852 = vpack.c.b16 %v828, %v825
        %v853 = vpack.c.b16 %v829, %v826
        %878 = vmatpush.bf16.msra.mxu0 %v851
        %879 = vmatpush.bf16.msra.mxu0 %v848
        %880 = vmatpush.bf16.msra.mxu0 %v845
        %881 = vmatpush.bf16.msra.mxu0 %v842
        %882 = vmatpush.bf16.msra.mxu0 %v839
        %883 = vmatpush.bf16.msra.mxu0 %v836
        %884 = vmatpush.bf16.msra.mxu0 %v833
        %885 = vmatpush.bf16.msra.mxu0 %v830
        %886 = vmatmul.bf16.gmra.mxu0 %v708
        %v887 = vpop.f32.mrf.mxu0
        %v888 = vadd.f32 %v744, %v887
        %v889 = vpop.f32.mrf.mxu0
        %v890 = vadd.f32 %v744, %v889
        %891 = vmatmul.bf16.gmra.mxu0 %v709
        %v892 = vpop.f32.mrf.mxu0
        %v893 = vadd.f32 %v744, %v892
        %v894 = vpop.f32.mrf.mxu0
        %v895 = vadd.f32 %v744, %v894
        %896 = vdwg.mxu0
        %897 = vmatpush.bf16.msra.mxu0 %v852
        %898 = vmatpush.bf16.msra.mxu0 %v849
        %899 = vmatpush.bf16.msra.mxu0 %v846
        %900 = vmatpush.bf16.msra.mxu0 %v843
        %901 = vmatpush.bf16.msra.mxu0 %v840
        %902 = vmatpush.bf16.msra.mxu0 %v837
        %903 = vmatpush.bf16.msra.mxu0 %v834
        %904 = vmatpush.bf16.msra.mxu0 %v831
        %905 = vmatmul.bf16.gmra.mxu0 %v708
        %v906 = vpop.f32.mrf.mxu0
        %v907 = vadd.f32 %v745, %v906
        %v908 = vpop.f32.mrf.mxu0
        %v909 = vadd.f32 %v745, %v908
        %910 = vmatmul.bf16.gmra.mxu0 %v709
        %v911 = vpop.f32.mrf.mxu0
        %v912 = vadd.f32 %v745, %v911
        %v913 = vpop.f32.mrf.mxu0
        %v914 = vadd.f32 %v745, %v913
        %915 = vdwg.mxu0
        %916 = vmatpush.bf16.msra.mxu0 %v853
        %917 = vmatpush.bf16.msra.mxu0 %v850
        %918 = vmatpush.bf16.msra.mxu0 %v847
        %919 = vmatpush.bf16.msra.mxu0 %v844
        %920 = vmatpush.bf16.msra.mxu0 %v841
        %921 = vmatpush.bf16.msra.mxu0 %v838
        %922 = vmatpush.bf16.msra.mxu0 %v835
        %923 = vmatpush.bf16.msra.mxu0 %v832
        %924 = vmatmul.bf16.gmra.mxu0 %v708
        %v925 = vpop.f32.mrf.mxu0
        %v926 = vadd.f32 %v746, %v925
        %v927 = vpop.f32.mrf.mxu0
        %v928 = vadd.f32 %v746, %v927
        %929 = vmatmul.bf16.gmra.mxu0 %v709
        %v930 = vpop.f32.mrf.mxu0
        %v931 = vadd.f32 %v746, %v930
        %v932 = vpop.f32.mrf.mxu0
        %v933 = vadd.f32 %v746, %v932
        %934 = vdwg.mxu0
        %v935 = vpack.c.bf16 %v907, %v888
        %v936 = vpack.c.bf16 %v926, %v926
        %v937 = vpack.c.bf16 %v909, %v890
        %v938 = vpack.c.bf16 %v928, %v928
        %v939 = vpack.c.bf16 %v912, %v893
        %v940 = vpack.c.bf16 %v931, %v931
        %v941 = vpack.c.bf16 %v914, %v895
        %v942 = vpack.c.bf16 %v933, %v933
        %v947 = vunpack.c.l.b16 %v935
        %v948 = vunpack.c.l.b16 %v937
        %v949 = vunpack.c.l.b16 %v939
        %v950 = vunpack.c.l.b16 %v941
        %v951 = vpack.c.b16 %v948, %v947
        %v952 = vpack.c.b16 %v950, %v949
        %v953 = vunpack.c.h.b16 %v935
        %v954 = vunpack.c.h.b16 %v937
        %v955 = vunpack.c.h.b16 %v939
        %v956 = vunpack.c.h.b16 %v941
        %v957 = vpack.c.b16 %v954, %v953
        %v958 = vpack.c.b16 %v956, %v955
        %vm959 = vcmask 261120
        %v961 = vsel %vm959, %v951, 0
        %v964 = vsel %vm959, %v952, 0
        %v967 = vsel %vm959, %v957, 0
        %v970 = vsel %vm959, %v958, 0
        %972 = vmatpush.bf16.xpose.msra.mxu0 0
        %973 = vmatpush.bf16.xpose.msra.mxu0 0
        %974 = vmatpush.bf16.xpose.msra.mxu0 0
        %975 = vmatpush.bf16.xpose.msra.mxu0 0
        %976 = vmatpush.bf16.xpose.msra.mxu0 0
        %977 = vmatpush.bf16.xpose.msra.mxu0 0
        %978 = vmatpush.bf16.xpose.msra.mxu0 %v970
        %979 = vmatpush.bf16.xpose.msra.mxu0 %v967
        %980 = vmatmul.bf16.gmra.mxu0 %v961
        %v981 = vpop.f32.mrf.mxu0
        %v982 = vadd.f32 0.0, %v981
        %v983 = vpop.f32.mrf.mxu0
        %v984 = vadd.f32 0.0, %v983
        %985 = vmatmul.bf16.gmra.mxu0 %v964
        %v986 = vpop.f32.mrf.mxu0
        %v987 = vadd.f32 0.0, %v986
        %v988 = vpop.f32.mrf.mxu0
        %v989 = vadd.f32 0.0, %v988
        %990 = vdwg.mxu0
        %v991 = vsel %vm959, %v982, -inf
        %992 = vmax.xlane.f32.xlu0 %v991
        %v993 = vpop.xlane.xlu0 %992
        %v994 = vsel %vm959, %v984, -inf
        %995 = vmax.xlane.f32.xlu0 %v994
        %v996 = vpop.xlane.xlu0 %995
        %v997 = vsel %vm959, %v987, -inf
        %998 = vmax.xlane.f32.xlu0 %v997
        %v999 = vpop.xlane.xlu0 %998
        %v1000 = vsel %vm959, %v989, -inf
        %1001 = vmax.xlane.f32.xlu0 %v1000
        %v1002 = vpop.xlane.xlu0 %1001
        %v1003 = vsub.f32 %v982, %v993
        %v1004 = vsub.f32 %v984, %v996
        %v1005 = vsub.f32 %v987, %v999
        %v1006 = vsub.f32 %v989, %v1002
        %v1007 = vmul.f32 %v1003, 1.442695
        %v1008 = vpow.pop %v1007
        %v1009 = vmul.f32 %v1004, 1.442695
        %v1010 = vpow.pop %v1009
        %v1011 = vmul.f32 %v1005, 1.442695
        %v1012 = vpow.pop %v1011
        %v1013 = vmul.f32 %v1006, 1.442695
        %v1014 = vpow.pop %v1013
        %v1015 = vsel %vm959, %v1008, 0.0
        %1016 = vadd.xlane.f32.xlu0 %v1015
        %v1017 = vpop.xlane.xlu0 %1016
        %v1018 = vsel %vm959, %v1010, 0.0
        %1019 = vadd.xlane.f32.xlu0 %v1018
        %v1020 = vpop.xlane.xlu0 %1019
        %v1021 = vsel %vm959, %v1012, 0.0
        %1022 = vadd.xlane.f32.xlu0 %v1021
        %v1023 = vpop.xlane.xlu0 %1022
        %v1024 = vsel %vm959, %v1014, 0.0
        %1025 = vadd.xlane.f32.xlu0 %v1024
        %v1026 = vpop.xlane.xlu0 %1025
        %v1027 = vrcp.pop %v1017
        %v1028 = vrcp.pop %v1020
        %v1029 = vrcp.pop %v1023
        %v1030 = vrcp.pop %v1026
        %v1031 = vmul.f32 %v1008, %v1027
        %v1032 = vmul.f32 %v1010, %v1028
        %v1033 = vmul.f32 %v1012, %v1029
        %v1034 = vmul.f32 %v1014, %v1030
        %v1035 = vpack.c.bf16 %v1032, %v1031
        %v1036 = vpack.c.bf16 %v1034, %v1033
        %v1041 = vunpack.c.l.b16 %v936
        %v1042 = vunpack.c.l.b16 %v938
        %v1043 = vunpack.c.l.b16 %v940
        %v1044 = vunpack.c.l.b16 %v942
        %v1045 = vpack.c.b16 %v1042, %v1041
        %v1046 = vpack.c.b16 %v1044, %v1043
        %v1050 = vsel %vm959, %v1035, 0
        %v1053 = vsel %vm959, %v1036, 0
        %1055 = vmatpush.bf16.msra.mxu0 0
        %1056 = vmatpush.bf16.msra.mxu0 0
        %1057 = vmatpush.bf16.msra.mxu0 0
        %1058 = vmatpush.bf16.msra.mxu0 0
        %1059 = vmatpush.bf16.msra.mxu0 0
        %1060 = vmatpush.bf16.msra.mxu0 0
        %1061 = vmatpush.bf16.msra.mxu0 %v1046
        %1062 = vmatpush.bf16.msra.mxu0 %v1045
        %1063 = vmatmul.bf16.gmra.mxu0 %v1050
        %v1064 = vpop.f32.mrf.mxu0
        %v1065 = vadd.f32 0.0, %v1064
        %v1066 = vpop.f32.mrf.mxu0
        %v1067 = vadd.f32 0.0, %v1066
        %1068 = vmatmul.bf16.gmra.mxu0 %v1053
        %v1069 = vpop.f32.mrf.mxu0
        %v1070 = vadd.f32 0.0, %v1069
        %v1071 = vpop.f32.mrf.mxu0
        %v1072 = vadd.f32 0.0, %v1071
        %1073 = vdwg.mxu0
        %v1074 = vpack.c.bf16 %v1067, %v1065
        %v1075 = vpack.c.bf16 %v1072, %v1070
        %v1076 = vld [vmem:[#allocation10] sm:$0xf]
        %v1077 = vld [vmem:[#allocation10 + $0x4] sm:$0xf]
        %v1078 = vld [vmem:[#allocation10 + $0x8] sm:$0xf]
        %v1079 = vld [vmem:[#allocation10 + $0xc] sm:$0xf]
        %1080 = vrot.lane.b32.xlu0 %v951, 96
        %v1081 = vpop.permute.xlu0 %1080
        %1082 = vrot.lane.b32.xlu0 %v952, 96
        %v1083 = vpop.permute.xlu0 %1082
        %1084 = vrot.lane.b32.xlu0 %v957, 96
        %v1085 = vpop.permute.xlu0 %1084
        %1086 = vrot.lane.b32.xlu0 %v958, 96
        %v1087 = vpop.permute.xlu0 %1086
        %v1089 = vsel %vm959, %v1081, 0
        %v1092 = vsel %vm959, %v1083, 0
        %v1095 = vsel %vm959, %v1085, 0
        %v1098 = vsel %vm959, %v1087, 0
        %1100 = vmatpush.bf16.xpose.msra.mxu0 0
        %1101 = vmatpush.bf16.xpose.msra.mxu0 0
        %1102 = vmatpush.bf16.xpose.msra.mxu0 0
        %1103 = vmatpush.bf16.xpose.msra.mxu0 0
        %1104 = vmatpush.bf16.xpose.msra.mxu0 0
        %1105 = vmatpush.bf16.xpose.msra.mxu0 0
        %1106 = vmatpush.bf16.xpose.msra.mxu0 %v1098
        %1107 = vmatpush.bf16.xpose.msra.mxu0 %v1095
        %1108 = vmatmul.bf16.gmra.mxu0 %v1089
        %v1109 = vpop.f32.mrf.mxu0
        %v1110 = vadd.f32 0.0, %v1109
        %v1111 = vpop.f32.mrf.mxu0
        %v1112 = vadd.f32 0.0, %v1111
        %1113 = vmatmul.bf16.gmra.mxu0 %v1092
        %v1114 = vpop.f32.mrf.mxu0
        %v1115 = vadd.f32 0.0, %v1114
        %v1116 = vpop.f32.mrf.mxu0
        %v1117 = vadd.f32 0.0, %v1116
        %1118 = vdwg.mxu0
        %v1119 = vsel %vm959, %v1110, -inf
        %1120 = vmax.xlane.f32.xlu0 %v1119
        %v1121 = vpop.xlane.xlu0 %1120
        %v1122 = vsel %vm959, %v1112, -inf
        %1123 = vmax.xlane.f32.xlu0 %v1122
        %v1124 = vpop.xlane.xlu0 %1123
        %v1125 = vsel %vm959, %v1115, -inf
        %1126 = vmax.xlane.f32.xlu0 %v1125
        %v1127 = vpop.xlane.xlu0 %1126
        %v1128 = vsel %vm959, %v1117, -inf
        %1129 = vmax.xlane.f32.xlu0 %v1128
        %v1130 = vpop.xlane.xlu0 %1129
        %v1131 = vsub.f32 %v1110, %v1121
        %v1132 = vsub.f32 %v1112, %v1124
        %v1133 = vsub.f32 %v1115, %v1127
        %v1134 = vsub.f32 %v1117, %v1130
        %v1135 = vmul.f32 %v1131, 1.442695
        %v1136 = vpow.pop %v1135
        %v1137 = vmul.f32 %v1132, 1.442695
        %v1138 = vpow.pop %v1137
        %v1139 = vmul.f32 %v1133, 1.442695
        %v1140 = vpow.pop %v1139
        %v1141 = vmul.f32 %v1134, 1.442695
        %v1142 = vpow.pop %v1141
        %v1143 = vsel %vm959, %v1136, 0.0
        %1144 = vadd.xlane.f32.xlu0 %v1143
        %v1145 = vpop.xlane.xlu0 %1144
        %v1146 = vsel %vm959, %v1138, 0.0
        %1147 = vadd.xlane.f32.xlu0 %v1146
        %v1148 = vpop.xlane.xlu0 %1147
        %v1149 = vsel %vm959, %v1140, 0.0
        %1150 = vadd.xlane.f32.xlu0 %v1149
        %v1151 = vpop.xlane.xlu0 %1150
        %v1152 = vsel %vm959, %v1142, 0.0
        %1153 = vadd.xlane.f32.xlu0 %v1152
        %v1154 = vpop.xlane.xlu0 %1153
        %v1155 = vrcp.pop %v1145
        %v1156 = vrcp.pop %v1148
        %v1157 = vrcp.pop %v1151
        %v1158 = vrcp.pop %v1154
        %v1159 = vmul.f32 %v1136, %v1155
        %v1160 = vmul.f32 %v1138, %v1156
        %v1161 = vmul.f32 %v1140, %v1157
        %v1162 = vmul.f32 %v1142, %v1158
        %v1163 = vpack.c.bf16 %v1160, %v1159
        %v1164 = vpack.c.bf16 %v1162, %v1161
        %1165 = vrot.lane.b32.xlu0 %v1045, 96
        %v1166 = vpop.permute.xlu0 %1165
        %1167 = vrot.lane.b32.xlu0 %v1046, 96
        %v1168 = vpop.permute.xlu0 %1167
        %v1172 = vsel %vm959, %v1163, 0
        %v1175 = vsel %vm959, %v1164, 0
        %1177 = vmatpush.bf16.msra.mxu0 0
        %1178 = vmatpush.bf16.msra.mxu0 0
        %1179 = vmatpush.bf16.msra.mxu0 0
        %1180 = vmatpush.bf16.msra.mxu0 0
        %1181 = vmatpush.bf16.msra.mxu0 0
        %1182 = vmatpush.bf16.msra.mxu0 0
        %1183 = vmatpush.bf16.msra.mxu0 %v1168
        %1184 = vmatpush.bf16.msra.mxu0 %v1166
        %1185 = vmatmul.bf16.gmra.mxu0 %v1172
        %v1186 = vpop.f32.mrf.mxu0
        %v1187 = vadd.f32 0.0, %v1186
        %v1188 = vpop.f32.mrf.mxu0
        %v1189 = vadd.f32 0.0, %v1188
        %1190 = vmatmul.bf16.gmra.mxu0 %v1175
        %v1191 = vpop.f32.mrf.mxu0
        %v1192 = vadd.f32 0.0, %v1191
        %v1193 = vpop.f32.mrf.mxu0
        %v1194 = vadd.f32 0.0, %v1193
        %1195 = vdwg.mxu0
        %v1196 = vpack.c.bf16 %v1189, %v1187
        %v1197 = vpack.c.bf16 %v1194, %v1192
        %v1198 = vld [vmem:[#allocation10 + $0x10] sm:$0xf]
        %v1199 = vld [vmem:[#allocation10 + $0x14] sm:$0xf]
        %v1200 = vld [vmem:[#allocation10 + $0x18] sm:$0xf]
        %v1201 = vld [vmem:[#allocation10 + $0x1c] sm:$0xf]
        %v1206 = vunpack.c.l.b16 %v1198
        %v1207 = vunpack.c.l.b16 %v1199
        %v1208 = vunpack.c.l.b16 %v1200
        %v1209 = vunpack.c.l.b16 %v1201
        %v1210 = vpack.c.b16 %v1207, %v1206
        %v1211 = vpack.c.b16 %v1209, %v1208
        %v1215 = vsel %vm959, %v1196, 0
        %v1218 = vsel %vm959, %v1197, 0
        %1220 = vmatpush.bf16.msra.mxu0 0
        %1221 = vmatpush.bf16.msra.mxu0 0
        %1222 = vmatpush.bf16.msra.mxu0 0
        %1223 = vmatpush.bf16.msra.mxu0 0
        %1224 = vmatpush.bf16.msra.mxu0 0
        %1225 = vmatpush.bf16.msra.mxu0 0
        %1226 = vmatpush.bf16.msra.mxu0 %v1211
        %1227 = vmatpush.bf16.msra.mxu0 %v1210
        %1228 = vmatmul.bf16.gmra.mxu0 %v1215
        %v1229 = vpop.f32.mrf.mxu0
        %v1230 = vadd.f32 0.0, %v1229
        %v1231 = vpop.f32.mrf.mxu0
        %v1232 = vadd.f32 0.0, %v1231
        %1233 = vmatmul.bf16.gmra.mxu0 %v1218
        %v1234 = vpop.f32.mrf.mxu0
        %v1235 = vadd.f32 0.0, %v1234
        %v1236 = vpop.f32.mrf.mxu0
        %v1237 = vadd.f32 0.0, %v1236
        %1238 = vdwg.mxu0
        %v1243 = vunpack.c.l.b16 %v1076
        %v1244 = vunpack.c.l.b16 %v1077
        %v1245 = vunpack.c.l.b16 %v1078
        %v1246 = vunpack.c.l.b16 %v1079
        %v1247 = vpack.c.b16 %v1244, %v1243
        %v1248 = vpack.c.b16 %v1246, %v1245
        %v1252 = vsel %vm959, %v1074, 0
        %v1255 = vsel %vm959, %v1075, 0
        %1257 = vmatpush.bf16.msra.mxu0 0
        %1258 = vmatpush.bf16.msra.mxu0 0
        %1259 = vmatpush.bf16.msra.mxu0 0
        %1260 = vmatpush.bf16.msra.mxu0 0
        %1261 = vmatpush.bf16.msra.mxu0 0
        %1262 = vmatpush.bf16.msra.mxu0 0
        %1263 = vmatpush.bf16.msra.mxu0 %v1248
        %1264 = vmatpush.bf16.msra.mxu0 %v1247
        %1265 = vmatmul.bf16.gmra.mxu0 %v1252
        %v1266 = vpop.f32.mrf.mxu0
        %v1267 = vadd.f32 %v1230, %v1266
        %v1268 = vpop.f32.mrf.mxu0
        %v1269 = vadd.f32 %v1232, %v1268
        %1270 = vmatmul.bf16.gmra.mxu0 %v1255
        %v1271 = vpop.f32.mrf.mxu0
        %v1272 = vadd.f32 %v1235, %v1271
        %v1273 = vpop.f32.mrf.mxu0
        %v1274 = vadd.f32 %v1237, %v1273
        %1275 = vdwg.mxu0
        %1276 = vrot.lane.b32.xlu0 %v951, 64
        %v1277 = vpop.permute.xlu0 %1276
        %1278 = vrot.lane.b32.xlu0 %v952, 64
        %v1279 = vpop.permute.xlu0 %1278
        %1280 = vrot.lane.b32.xlu0 %v957, 64
        %v1281 = vpop.permute.xlu0 %1280
        %1282 = vrot.lane.b32.xlu0 %v958, 64
        %v1283 = vpop.permute.xlu0 %1282
        %v1285 = vsel %vm959, %v1277, 0
        %v1288 = vsel %vm959, %v1279, 0
        %v1291 = vsel %vm959, %v1281, 0
        %v1294 = vsel %vm959, %v1283, 0
        %1296 = vmatpush.bf16.xpose.msra.mxu0 0
        %1297 = vmatpush.bf16.xpose.msra.mxu0 0
        %1298 = vmatpush.bf16.xpose.msra.mxu0 0
        %1299 = vmatpush.bf16.xpose.msra.mxu0 0
        %1300 = vmatpush.bf16.xpose.msra.mxu0 0
        %1301 = vmatpush.bf16.xpose.msra.mxu0 0
        %1302 = vmatpush.bf16.xpose.msra.mxu0 %v1294
        %1303 = vmatpush.bf16.xpose.msra.mxu0 %v1291
        %1304 = vmatmul.bf16.gmra.mxu0 %v1285
        %v1305 = vpop.f32.mrf.mxu0
        %v1306 = vadd.f32 0.0, %v1305
        %v1307 = vpop.f32.mrf.mxu0
        %v1308 = vadd.f32 0.0, %v1307
        %1309 = vmatmul.bf16.gmra.mxu0 %v1288
        %v1310 = vpop.f32.mrf.mxu0
        %v1311 = vadd.f32 0.0, %v1310
        %v1312 = vpop.f32.mrf.mxu0
        %v1313 = vadd.f32 0.0, %v1312
        %1314 = vdwg.mxu0
        %v1315 = vsel %vm959, %v1306, -inf
        %1316 = vmax.xlane.f32.xlu0 %v1315
        %v1317 = vpop.xlane.xlu0 %1316
        %v1318 = vsel %vm959, %v1308, -inf
        %1319 = vmax.xlane.f32.xlu0 %v1318
        %v1320 = vpop.xlane.xlu0 %1319
        %v1321 = vsel %vm959, %v1311, -inf
        %1322 = vmax.xlane.f32.xlu0 %v1321
        %v1323 = vpop.xlane.xlu0 %1322
        %v1324 = vsel %vm959, %v1313, -inf
        %1325 = vmax.xlane.f32.xlu0 %v1324
        %v1326 = vpop.xlane.xlu0 %1325
        %v1327 = vsub.f32 %v1306, %v1317
        %v1328 = vsub.f32 %v1308, %v1320
        %v1329 = vsub.f32 %v1311, %v1323
        %v1330 = vsub.f32 %v1313, %v1326
        %v1331 = vmul.f32 %v1327, 1.442695
        %v1332 = vpow.pop %v1331
        %v1333 = vmul.f32 %v1328, 1.442695
        %v1334 = vpow.pop %v1333
        %v1335 = vmul.f32 %v1329, 1.442695
        %v1336 = vpow.pop %v1335
        %v1337 = vmul.f32 %v1330, 1.442695
        %v1338 = vpow.pop %v1337
        %v1339 = vsel %vm959, %v1332, 0.0
        %1340 = vadd.xlane.f32.xlu0 %v1339
        %v1341 = vpop.xlane.xlu0 %1340
        %v1342 = vsel %vm959, %v1334, 0.0
        %1343 = vadd.xlane.f32.xlu0 %v1342
        %v1344 = vpop.xlane.xlu0 %1343
        %v1345 = vsel %vm959, %v1336, 0.0
        %1346 = vadd.xlane.f32.xlu0 %v1345
        %v1347 = vpop.xlane.xlu0 %1346
        %v1348 = vsel %vm959, %v1338, 0.0
        %1349 = vadd.xlane.f32.xlu0 %v1348
        %v1350 = vpop.xlane.xlu0 %1349
        %v1351 = vrcp.pop %v1341
        %v1352 = vrcp.pop %v1344
        %v1353 = vrcp.pop %v1347
        %v1354 = vrcp.pop %v1350
        %v1355 = vmul.f32 %v1332, %v1351
        %v1356 = vmul.f32 %v1334, %v1352
        %v1357 = vmul.f32 %v1336, %v1353
        %v1358 = vmul.f32 %v1338, %v1354
        %v1359 = vpack.c.bf16 %v1356, %v1355
        %v1360 = vpack.c.bf16 %v1358, %v1357
        %1361 = vrot.lane.b32.xlu0 %v1045, 64
        %v1362 = vpop.permute.xlu0 %1361
        %1363 = vrot.lane.b32.xlu0 %v1046, 64
        %v1364 = vpop.permute.xlu0 %1363
        %v1368 = vsel %vm959, %v1359, 0
        %v1371 = vsel %vm959, %v1360, 0
        %1373 = vmatpush.bf16.msra.mxu0 0
        %1374 = vmatpush.bf16.msra.mxu0 0
        %1375 = vmatpush.bf16.msra.mxu0 0
        %1376 = vmatpush.bf16.msra.mxu0 0
        %1377 = vmatpush.bf16.msra.mxu0 0
        %1378 = vmatpush.bf16.msra.mxu0 0
        %1379 = vmatpush.bf16.msra.mxu0 %v1364
        %1380 = vmatpush.bf16.msra.mxu0 %v1362
        %1381 = vmatmul.bf16.gmra.mxu0 %v1368
        %v1382 = vpop.f32.mrf.mxu0
        %v1383 = vadd.f32 0.0, %v1382
        %v1384 = vpop.f32.mrf.mxu0
        %v1385 = vadd.f32 0.0, %v1384
        %1386 = vmatmul.bf16.gmra.mxu0 %v1371
        %v1387 = vpop.f32.mrf.mxu0
        %v1388 = vadd.f32 0.0, %v1387
        %v1389 = vpop.f32.mrf.mxu0
        %v1390 = vadd.f32 0.0, %v1389
        %1391 = vdwg.mxu0
        %v1392 = vpack.c.bf16 %v1385, %v1383
        %v1393 = vpack.c.bf16 %v1390, %v1388
        %v1394 = vld [vmem:[#allocation10 + $0x20] sm:$0xf]
        %v1395 = vld [vmem:[#allocation10 + $0x24] sm:$0xf]
        %v1396 = vld [vmem:[#allocation10 + $0x28] sm:$0xf]
        %v1397 = vld [vmem:[#allocation10 + $0x2c] sm:$0xf]
        %v1402 = vunpack.c.l.b16 %v1394
        %v1403 = vunpack.c.l.b16 %v1395
        %v1404 = vunpack.c.l.b16 %v1396
        %v1405 = vunpack.c.l.b16 %v1397
        %v1406 = vpack.c.b16 %v1403, %v1402
        %v1407 = vpack.c.b16 %v1405, %v1404
        %v1411 = vsel %vm959, %v1392, 0
        %v1414 = vsel %vm959, %v1393, 0
        %1416 = vmatpush.bf16.msra.mxu0 0
        %1417 = vmatpush.bf16.msra.mxu0 0
        %1418 = vmatpush.bf16.msra.mxu0 0
        %1419 = vmatpush.bf16.msra.mxu0 0
        %1420 = vmatpush.bf16.msra.mxu0 0
        %1421 = vmatpush.bf16.msra.mxu0 0
        %1422 = vmatpush.bf16.msra.mxu0 %v1407
        %1423 = vmatpush.bf16.msra.mxu0 %v1406
        %1424 = vmatmul.bf16.gmra.mxu0 %v1411
        %v1425 = vpop.f32.mrf.mxu0
        %v1426 = vadd.f32 0.0, %v1425
        %v1427 = vpop.f32.mrf.mxu0
        %v1428 = vadd.f32 0.0, %v1427
        %1429 = vmatmul.bf16.gmra.mxu0 %v1414
        %v1430 = vpop.f32.mrf.mxu0
        %v1431 = vadd.f32 0.0, %v1430
        %v1432 = vpop.f32.mrf.mxu0
        %v1433 = vadd.f32 0.0, %v1432
        %1434 = vdwg.mxu0
        %v1435 = vadd.f32 %v1267, %v1426
        %v1436 = vadd.f32 %v1269, %v1428
        %v1437 = vadd.f32 %v1272, %v1431
        %v1438 = vadd.f32 %v1274, %v1433
        %1439 = vrot.lane.b32.xlu0 %v951, 32
        %v1440 = vpop.permute.xlu0 %1439
        %1441 = vrot.lane.b32.xlu0 %v952, 32
        %v1442 = vpop.permute.xlu0 %1441
        %1443 = vrot.lane.b32.xlu0 %v957, 32
        %v1444 = vpop.permute.xlu0 %1443
        %1445 = vrot.lane.b32.xlu0 %v958, 32
        %v1446 = vpop.permute.xlu0 %1445
        %v1448 = vsel %vm959, %v1440, 0
        %v1451 = vsel %vm959, %v1442, 0
        %v1454 = vsel %vm959, %v1444, 0
        %v1457 = vsel %vm959, %v1446, 0
        %1459 = vmatpush.bf16.xpose.msra.mxu0 0
        %1460 = vmatpush.bf16.xpose.msra.mxu0 0
        %1461 = vmatpush.bf16.xpose.msra.mxu0 0
        %1462 = vmatpush.bf16.xpose.msra.mxu0 0
        %1463 = vmatpush.bf16.xpose.msra.mxu0 0
        %1464 = vmatpush.bf16.xpose.msra.mxu0 0
        %1465 = vmatpush.bf16.xpose.msra.mxu0 %v1457
        %1466 = vmatpush.bf16.xpose.msra.mxu0 %v1454
        %1467 = vmatmul.bf16.gmra.mxu0 %v1448
        %v1468 = vpop.f32.mrf.mxu0
        %v1469 = vadd.f32 0.0, %v1468
        %v1470 = vpop.f32.mrf.mxu0
        %v1471 = vadd.f32 0.0, %v1470
        %1472 = vmatmul.bf16.gmra.mxu0 %v1451
        %v1473 = vpop.f32.mrf.mxu0
        %v1474 = vadd.f32 0.0, %v1473
        %v1475 = vpop.f32.mrf.mxu0
        %v1476 = vadd.f32 0.0, %v1475
        %1477 = vdwg.mxu0
        %v1478 = vsel %vm959, %v1469, -inf
        %1479 = vmax.xlane.f32.xlu0 %v1478
        %v1480 = vpop.xlane.xlu0 %1479
        %v1481 = vsel %vm959, %v1471, -inf
        %1482 = vmax.xlane.f32.xlu0 %v1481
        %v1483 = vpop.xlane.xlu0 %1482
        %v1484 = vsel %vm959, %v1474, -inf
        %1485 = vmax.xlane.f32.xlu0 %v1484
        %v1486 = vpop.xlane.xlu0 %1485
        %v1487 = vsel %vm959, %v1476, -inf
        %1488 = vmax.xlane.f32.xlu0 %v1487
        %v1489 = vpop.xlane.xlu0 %1488
        %v1490 = vsub.f32 %v1469, %v1480
        %v1491 = vsub.f32 %v1471, %v1483
        %v1492 = vsub.f32 %v1474, %v1486
        %v1493 = vsub.f32 %v1476, %v1489
        %v1494 = vmul.f32 %v1490, 1.442695
        %v1495 = vpow.pop %v1494
        %v1496 = vmul.f32 %v1491, 1.442695
        %v1497 = vpow.pop %v1496
        %v1498 = vmul.f32 %v1492, 1.442695
        %v1499 = vpow.pop %v1498
        %v1500 = vmul.f32 %v1493, 1.442695
        %v1501 = vpow.pop %v1500
        %v1502 = vsel %vm959, %v1495, 0.0
        %1503 = vadd.xlane.f32.xlu0 %v1502
        %v1504 = vpop.xlane.xlu0 %1503
        %v1505 = vsel %vm959, %v1497, 0.0
        %1506 = vadd.xlane.f32.xlu0 %v1505
        %v1507 = vpop.xlane.xlu0 %1506
        %v1508 = vsel %vm959, %v1499, 0.0
        %1509 = vadd.xlane.f32.xlu0 %v1508
        %v1510 = vpop.xlane.xlu0 %1509
        %v1511 = vsel %vm959, %v1501, 0.0
        %1512 = vadd.xlane.f32.xlu0 %v1511
        %v1513 = vpop.xlane.xlu0 %1512
        %v1514 = vrcp.pop %v1504
        %v1515 = vrcp.pop %v1507
        %v1516 = vrcp.pop %v1510
        %v1517 = vrcp.pop %v1513
        %v1518 = vmul.f32 %v1495, %v1514
        %v1519 = vmul.f32 %v1497, %v1515
        %v1520 = vmul.f32 %v1499, %v1516
        %v1521 = vmul.f32 %v1501, %v1517
        %v1522 = vpack.c.bf16 %v1519, %v1518
        %v1523 = vpack.c.bf16 %v1521, %v1520
        %1524 = vrot.lane.b32.xlu0 %v1045, 32
        %v1525 = vpop.permute.xlu0 %1524
        %1526 = vrot.lane.b32.xlu0 %v1046, 32
        %v1527 = vpop.permute.xlu0 %1526
        %v1531 = vsel %vm959, %v1522, 0
        %v1534 = vsel %vm959, %v1523, 0
        %1536 = vmatpush.bf16.msra.mxu0 0
        %1537 = vmatpush.bf16.msra.mxu0 0
        %1538 = vmatpush.bf16.msra.mxu0 0
        %1539 = vmatpush.bf16.msra.mxu0 0
        %1540 = vmatpush.bf16.msra.mxu0 0
        %1541 = vmatpush.bf16.msra.mxu0 0
        %1542 = vmatpush.bf16.msra.mxu0 %v1527
        %1543 = vmatpush.bf16.msra.mxu0 %v1525
        %1544 = vmatmul.bf16.gmra.mxu0 %v1531
        %v1545 = vpop.f32.mrf.mxu0
        %v1546 = vadd.f32 0.0, %v1545
        %v1547 = vpop.f32.mrf.mxu0
        %v1548 = vadd.f32 0.0, %v1547
        %1549 = vmatmul.bf16.gmra.mxu0 %v1534
        %v1550 = vpop.f32.mrf.mxu0
        %v1551 = vadd.f32 0.0, %v1550
        %v1552 = vpop.f32.mrf.mxu0
        %v1553 = vadd.f32 0.0, %v1552
        %1554 = vdwg.mxu0
        %v1555 = vpack.c.bf16 %v1548, %v1546
        %v1556 = vpack.c.bf16 %v1553, %v1551
        %v1557 = vld [vmem:[#allocation10 + $0x30] sm:$0xf]
        %v1558 = vld [vmem:[#allocation10 + $0x34] sm:$0xf]
        %v1559 = vld [vmem:[#allocation10 + $0x38] sm:$0xf]
        %v1560 = vld [vmem:[#allocation10 + $0x3c] sm:$0xf]
        %v1565 = vunpack.c.l.b16 %v1557
        %v1566 = vunpack.c.l.b16 %v1558
        %v1567 = vunpack.c.l.b16 %v1559
        %v1568 = vunpack.c.l.b16 %v1560
        %v1569 = vpack.c.b16 %v1566, %v1565
        %v1570 = vpack.c.b16 %v1568, %v1567
        %v1574 = vsel %vm959, %v1555, 0
        %v1577 = vsel %vm959, %v1556, 0
        %1579 = vmatpush.bf16.msra.mxu0 0
        %1580 = vmatpush.bf16.msra.mxu0 0
        %1581 = vmatpush.bf16.msra.mxu0 0
        %1582 = vmatpush.bf16.msra.mxu0 0
        %1583 = vmatpush.bf16.msra.mxu0 0
        %1584 = vmatpush.bf16.msra.mxu0 0
        %1585 = vmatpush.bf16.msra.mxu0 %v1570
        %1586 = vmatpush.bf16.msra.mxu0 %v1569
        %1587 = vmatmul.bf16.gmra.mxu0 %v1574
        %v1588 = vpop.f32.mrf.mxu0
        %v1589 = vadd.f32 0.0, %v1588
        %v1590 = vpop.f32.mrf.mxu0
        %v1591 = vadd.f32 0.0, %v1590
        %1592 = vmatmul.bf16.gmra.mxu0 %v1577
        %v1593 = vpop.f32.mrf.mxu0
        %v1594 = vadd.f32 0.0, %v1593
        %v1595 = vpop.f32.mrf.mxu0
        %v1596 = vadd.f32 0.0, %v1595
        %1597 = vdwg.mxu0
        %v1598 = vadd.f32 %v1435, %v1589
        %v1599 = vadd.f32 %v1436, %v1591
        %v1600 = vadd.f32 %v1437, %v1594
        %v1601 = vadd.f32 %v1438, %v1596
        %v1602 = vadd.f32 %v601, %v1598
        %v1603 = vadd.f32 %v602, %v1599
        %v1604 = vadd.f32 %v603, %v1600
        %v1605 = vadd.f32 %v604, %v1601
        %v1606 = vld [vmem:[#allocation11] sm:$0x1]
        %v1608 = vperm.slane %v1606, 0
        %v1610 = vadd.f32 %v1602, %v1608
        %v1611 = vadd.f32 %v1603, %v1608
        %v1612 = vadd.f32 %v1604, %v1608
        %v1613 = vadd.f32 %v1605, %v1608
        %1614 = vadd.xlane.f32.xlu0 %v1610
        %v1615 = vpop.xlane.xlu0 %1614
        %1616 = vadd.xlane.f32.xlu0 %v1611
        %v1617 = vpop.xlane.xlu0 %1616
        %1618 = vadd.xlane.f32.xlu0 %v1612
        %v1619 = vpop.xlane.xlu0 %1618
        %1620 = vadd.xlane.f32.xlu0 %v1613
        %v1621 = vpop.xlane.xlu0 %1620
        %v1622 = vmul.f32 %v1615, %v619
        %v1623 = vmul.f32 %v1617, %v619
        %v1624 = vmul.f32 %v1619, %v619
        %v1625 = vmul.f32 %v1621, %v619
        %v1626 = vsub.f32 %v1610, %v1622
        %v1627 = vsub.f32 %v1611, %v1623
        %v1628 = vsub.f32 %v1612, %v1624
        %v1629 = vsub.f32 %v1613, %v1625
        %v1630 = vmul.f32 %v1626, %v1626
        %v1631 = vmul.f32 %v1627, %v1627
        %v1632 = vmul.f32 %v1628, %v1628
        %v1633 = vmul.f32 %v1629, %v1629
        %1634 = vadd.xlane.f32.xlu0 %v1630
        %v1635 = vpop.xlane.xlu0 %1634
        %1636 = vadd.xlane.f32.xlu0 %v1631
        %v1637 = vpop.xlane.xlu0 %1636
        %1638 = vadd.xlane.f32.xlu0 %v1632
        %v1639 = vpop.xlane.xlu0 %1638
        %1640 = vadd.xlane.f32.xlu0 %v1633
        %v1641 = vpop.xlane.xlu0 %1640
        %v1642 = vmul.f32 %v1635, %v619
        %v1643 = vmul.f32 %v1637, %v619
        %v1644 = vmul.f32 %v1639, %v619
        %v1645 = vmul.f32 %v1641, %v619
        %v1646 = vadd.f32 %v1642, 1e-06
        %v1647 = vadd.f32 %v1643, 1e-06
        %v1648 = vadd.f32 %v1644, 1e-06
        %v1649 = vadd.f32 %v1645, 1e-06
        %v1650 = vrsqrt.pop %v1646
        %v1651 = vmul.f32 %v1650, %v1646
        %v1652 = vmul.f32 %v1651, %v1650
        %v1653 = vmul.f32 0.5, %v1652
        %v1654 = vsub.f32 1.5, %v1653
        %v1655 = vmul.f32 %v1650, %v1654
        %vm1656 = vweird.f32 %v1646
        %vm1657 = vweird.f32 %v1650
        %vm1658 = vmor %vm1656, %vm1657
        %v1659 = vsel %vm1658, %v1650, %v1655
        %v1660 = vrsqrt.pop %v1647
        %v1661 = vmul.f32 %v1660, %v1647
        %v1662 = vmul.f32 %v1661, %v1660
        %v1663 = vmul.f32 0.5, %v1662
        %v1664 = vsub.f32 1.5, %v1663
        %v1665 = vmul.f32 %v1660, %v1664
        %vm1666 = vweird.f32 %v1647
        %vm1667 = vweird.f32 %v1660
        %vm1668 = vmor %vm1666, %vm1667
        %v1669 = vsel %vm1668, %v1660, %v1665
        %v1670 = vrsqrt.pop %v1648
        %v1671 = vmul.f32 %v1670, %v1648
        %v1672 = vmul.f32 %v1671, %v1670
        %v1673 = vmul.f32 0.5, %v1672
        %v1674 = vsub.f32 1.5, %v1673
        %v1675 = vmul.f32 %v1670, %v1674
        %vm1676 = vweird.f32 %v1648
        %vm1677 = vweird.f32 %v1670
        %vm1678 = vmor %vm1676, %vm1677
        %v1679 = vsel %vm1678, %v1670, %v1675
        %v1680 = vrsqrt.pop %v1649
        %v1681 = vmul.f32 %v1680, %v1649
        %v1682 = vmul.f32 %v1681, %v1680
        %v1683 = vmul.f32 0.5, %v1682
        %v1684 = vsub.f32 1.5, %v1683
        %v1685 = vmul.f32 %v1680, %v1684
        %vm1686 = vweird.f32 %v1649
        %vm1687 = vweird.f32 %v1680
        %vm1688 = vmor %vm1686, %vm1687
        %v1689 = vsel %vm1688, %v1680, %v1685
        %v1690 = vmul.f32 %v1626, %v1659
        %v1691 = vmul.f32 %v1627, %v1669
        %v1692 = vmul.f32 %v1628, %v1679
        %v1693 = vmul.f32 %v1629, %v1689
        %v1694 = vld [vmem:[#allocation13] sm:$0x1]
        %v1696 = vperm.slane %v1694, 0
        %v1698 = vmul.f32 %v1690, %v1696
        %v1699 = vmul.f32 %v1691, %v1696
        %v1700 = vmul.f32 %v1692, %v1696
        %v1701 = vmul.f32 %v1693, %v1696
        %v1702 = vld [vmem:[#allocation14] sm:$0x1]
        %v1704 = vperm.slane %v1702, 0
        %v1706 = vadd.f32 %v1698, %v1704
        %v1707 = vadd.f32 %v1699, %v1704
        %v1708 = vadd.f32 %v1700, %v1704
        %v1709 = vadd.f32 %v1701, %v1704
        %v1710 = vpack.c.bf16 %v1707, %v1706
        %v1711 = vpack.c.bf16 %v1709, %v1708
        %v1712 = vld [vmem:[#allocation16] sm:$0xff]
        %v1713 = vld [vmem:[#allocation16 + $0x8] sm:$0xff]
        %v1714 = vld [vmem:[#allocation16 + $0x18] sm:$0xff]
        %v1715 = vld [vmem:[#allocation16 + $0x20] sm:$0xff]
        %v1716 = vld [vmem:[#allocation16 + $0x30] sm:$0xff]
        %v1717 = vld [vmem:[#allocation16 + $0x38] sm:$0xff]
        %v1718 = vld [vmem:[#allocation16 + $0x48] sm:$0xff]
        %v1719 = vld [vmem:[#allocation16 + $0x50] sm:$0xff]
        %v1720 = vld [vmem:[#allocation16 + $0x60] sm:$0xff]
        %v1721 = vld [vmem:[#allocation16 + $0x68] sm:$0xff]
        %v1722 = vld [vmem:[#allocation16 + $0x78] sm:$0xff]
        %v1723 = vld [vmem:[#allocation16 + $0x80] sm:$0xff]
        %v1724 = vld [vmem:[#allocation16 + $0x90] sm:$0xff]
        %v1725 = vld [vmem:[#allocation16 + $0x98] sm:$0xff]
        %v1726 = vld [vmem:[#allocation16 + $0xa8] sm:$0xff]
        %v1727 = vld [vmem:[#allocation16 + $0xb0] sm:$0xff]
        %v1728 = vld [vmem:[#allocation16 + $0xc0] sm:$0xff]
        %v1729 = vld [vmem:[#allocation16 + $0xc8] sm:$0xff]
        %v1730 = vld [vmem:[#allocation16 + $0xd8] sm:$0xff]
        %v1731 = vld [vmem:[#allocation16 + $0xe0] sm:$0xff]
        %v1732 = vld [vmem:[#allocation16 + $0xf0] sm:$0xff]
        %v1733 = vld [vmem:[#allocation16 + $0xf8] sm:$0xff]
        %v1734 = vld [vmem:[#allocation16 + $0x108] sm:$0xff]
        %v1735 = vld [vmem:[#allocation16 + $0x110] sm:$0xff]
        %v1736 = vld [vmem:[#allocation16 + $0x120] sm:$0xff]
        %v1737 = vld [vmem:[#allocation16 + $0x128] sm:$0xff]
        %v1738 = vld [vmem:[#allocation16 + $0x138] sm:$0xff]
        %v1739 = vld [vmem:[#allocation16 + $0x140] sm:$0xff]
        %v1740 = vld [vmem:[#allocation16 + $0x150] sm:$0xff]
        %v1741 = vld [vmem:[#allocation16 + $0x158] sm:$0xff]
        %v1742 = vld [vmem:[#allocation16 + $0x168] sm:$0xff]
        %v1743 = vld [vmem:[#allocation16 + $0x170] sm:$0xff]
        %v1744 = vld [vmem:[%s10] sm:$0xf]
        %v1746 = vperm.slane %v1744, 0
        %v1747 = vperm.slane %v1744, 1
        %v1748 = vperm.slane %v1744, 2
        %v1749 = vperm.slane %v1744, 3
        %v1786 = vunpack.c.l.b16 %v1712
        %v1787 = vunpack.c.h.b16 %v1712
        %v1788 = vunpack.c.l.b16 %v1713
        %v1789 = vunpack.c.h.b16 %v1713
        %v1790 = vunpack.c.l.b16 %v1714
        %v1791 = vunpack.c.h.b16 %v1714
        %v1792 = vunpack.c.l.b16 %v1715
        %v1793 = vunpack.c.h.b16 %v1715
        %v1794 = vunpack.c.l.b16 %v1716
        %v1795 = vunpack.c.h.b16 %v1716
        %v1796 = vunpack.c.l.b16 %v1717
        %v1797 = vunpack.c.h.b16 %v1717
        %v1798 = vunpack.c.l.b16 %v1718
        %v1799 = vunpack.c.h.b16 %v1718
        %v1800 = vunpack.c.l.b16 %v1719
        %v1801 = vunpack.c.h.b16 %v1719
        %v1802 = vunpack.c.l.b16 %v1720
        %v1803 = vunpack.c.h.b16 %v1720
        %v1804 = vunpack.c.l.b16 %v1721
        %v1805 = vunpack.c.h.b16 %v1721
        %v1806 = vunpack.c.l.b16 %v1722
        %v1807 = vunpack.c.h.b16 %v1722
        %v1808 = vunpack.c.l.b16 %v1723
        %v1809 = vunpack.c.h.b16 %v1723
        %v1810 = vunpack.c.l.b16 %v1724
        %v1811 = vunpack.c.h.b16 %v1724
        %v1812 = vunpack.c.l.b16 %v1725
        %v1813 = vunpack.c.h.b16 %v1725
        %v1814 = vunpack.c.l.b16 %v1726
        %v1815 = vunpack.c.h.b16 %v1726
        %v1816 = vunpack.c.l.b16 %v1727
        %v1817 = vunpack.c.h.b16 %v1727
        %v1818 = vunpack.c.l.b16 %v1728
        %v1819 = vunpack.c.h.b16 %v1728
        %v1820 = vunpack.c.l.b16 %v1729
        %v1821 = vunpack.c.h.b16 %v1729
        %v1822 = vunpack.c.l.b16 %v1730
        %v1823 = vunpack.c.h.b16 %v1730
        %v1824 = vunpack.c.l.b16 %v1731
        %v1825 = vunpack.c.h.b16 %v1731
        %v1826 = vunpack.c.l.b16 %v1732
        %v1827 = vunpack.c.h.b16 %v1732
        %v1828 = vunpack.c.l.b16 %v1733
        %v1829 = vunpack.c.h.b16 %v1733
        %v1830 = vunpack.c.l.b16 %v1734
        %v1831 = vunpack.c.h.b16 %v1734
        %v1832 = vunpack.c.l.b16 %v1735
        %v1833 = vunpack.c.h.b16 %v1735
        %v1834 = vunpack.c.l.b16 %v1736
        %v1835 = vunpack.c.h.b16 %v1736
        %v1836 = vunpack.c.l.b16 %v1737
        %v1837 = vunpack.c.h.b16 %v1737
        %v1838 = vunpack.c.l.b16 %v1738
        %v1839 = vunpack.c.h.b16 %v1738
        %v1840 = vunpack.c.l.b16 %v1739
        %v1841 = vunpack.c.h.b16 %v1739
        %v1842 = vunpack.c.l.b16 %v1740
        %v1843 = vunpack.c.h.b16 %v1740
        %v1844 = vunpack.c.l.b16 %v1741
        %v1845 = vunpack.c.h.b16 %v1741
        %v1846 = vunpack.c.l.b16 %v1742
        %v1847 = vunpack.c.h.b16 %v1742
        %v1848 = vunpack.c.l.b16 %v1743
        %v1849 = vunpack.c.h.b16 %v1743
        %v1850 = vpack.c.b16 %v1790, %v1786
        %v1851 = vpack.c.b16 %v1791, %v1787
        %v1852 = vpack.c.b16 %v1792, %v1788
        %v1853 = vpack.c.b16 %v1793, %v1789
        %v1854 = vpack.c.b16 %v1798, %v1794
        %v1855 = vpack.c.b16 %v1799, %v1795
        %v1856 = vpack.c.b16 %v1800, %v1796
        %v1857 = vpack.c.b16 %v1801, %v1797
        %v1858 = vpack.c.b16 %v1806, %v1802
        %v1859 = vpack.c.b16 %v1807, %v1803
        %v1860 = vpack.c.b16 %v1808, %v1804
        %v1861 = vpack.c.b16 %v1809, %v1805
        %v1862 = vpack.c.b16 %v1814, %v1810
        %v1863 = vpack.c.b16 %v1815, %v1811
        %v1864 = vpack.c.b16 %v1816, %v1812
        %v1865 = vpack.c.b16 %v1817, %v1813
        %v1866 = vpack.c.b16 %v1822, %v1818
        %v1867 = vpack.c.b16 %v1823, %v1819
        %v1868 = vpack.c.b16 %v1824, %v1820
        %v1869 = vpack.c.b16 %v1825, %v1821
        %v1870 = vpack.c.b16 %v1830, %v1826
        %v1871 = vpack.c.b16 %v1831, %v1827
        %v1872 = vpack.c.b16 %v1832, %v1828
        %v1873 = vpack.c.b16 %v1833, %v1829
        %v1874 = vpack.c.b16 %v1838, %v1834
        %v1875 = vpack.c.b16 %v1839, %v1835
        %v1876 = vpack.c.b16 %v1840, %v1836
        %v1877 = vpack.c.b16 %v1841, %v1837
        %v1878 = vpack.c.b16 %v1846, %v1842
        %v1879 = vpack.c.b16 %v1847, %v1843
        %v1880 = vpack.c.b16 %v1848, %v1844
        %v1881 = vpack.c.b16 %v1849, %v1845
        %1914 = vmatpush.bf16.msra.mxu0 %v1878
        %1915 = vmatpush.bf16.msra.mxu0 %v1874
        %1916 = vmatpush.bf16.msra.mxu0 %v1870
        %1917 = vmatpush.bf16.msra.mxu0 %v1866
        %1918 = vmatpush.bf16.msra.mxu0 %v1862
        %1919 = vmatpush.bf16.msra.mxu0 %v1858
        %1920 = vmatpush.bf16.msra.mxu0 %v1854
        %1921 = vmatpush.bf16.msra.mxu0 %v1850
        %1922 = vmatmul.bf16.gmra.mxu0 %v1710
        %v1923 = vpop.f32.mrf.mxu0
        %v1924 = vadd.f32 %v1746, %v1923
        %v1925 = vpop.f32.mrf.mxu0
        %v1926 = vadd.f32 %v1746, %v1925
        %1927 = vmatmul.bf16.gmra.mxu0 %v1711
        %v1928 = vpop.f32.mrf.mxu0
        %v1929 = vadd.f32 %v1746, %v1928
        %v1930 = vpop.f32.mrf.mxu0
        %v1931 = vadd.f32 %v1746, %v1930
        %1932 = vdwg.mxu0
        %1933 = vmatpush.bf16.msra.mxu0 %v1879
        %1934 = vmatpush.bf16.msra.mxu0 %v1875
        %1935 = vmatpush.bf16.msra.mxu0 %v1871
        %1936 = vmatpush.bf16.msra.mxu0 %v1867
        %1937 = vmatpush.bf16.msra.mxu0 %v1863
        %1938 = vmatpush.bf16.msra.mxu0 %v1859
        %1939 = vmatpush.bf16.msra.mxu0 %v1855
        %1940 = vmatpush.bf16.msra.mxu0 %v1851
        %1941 = vmatmul.bf16.gmra.mxu0 %v1710
        %v1942 = vpop.f32.mrf.mxu0
        %v1943 = vadd.f32 %v1747, %v1942
        %v1944 = vpop.f32.mrf.mxu0
        %v1945 = vadd.f32 %v1747, %v1944
        %1946 = vmatmul.bf16.gmra.mxu0 %v1711
        %v1947 = vpop.f32.mrf.mxu0
        %v1948 = vadd.f32 %v1747, %v1947
        %v1949 = vpop.f32.mrf.mxu0
        %v1950 = vadd.f32 %v1747, %v1949
        %1951 = vdwg.mxu0
        %1952 = vmatpush.bf16.msra.mxu0 %v1880
        %1953 = vmatpush.bf16.msra.mxu0 %v1876
        %1954 = vmatpush.bf16.msra.mxu0 %v1872
        %1955 = vmatpush.bf16.msra.mxu0 %v1868
        %1956 = vmatpush.bf16.msra.mxu0 %v1864
        %1957 = vmatpush.bf16.msra.mxu0 %v1860
        %1958 = vmatpush.bf16.msra.mxu0 %v1856
        %1959 = vmatpush.bf16.msra.mxu0 %v1852
        %1960 = vmatmul.bf16.gmra.mxu0 %v1710
        %v1961 = vpop.f32.mrf.mxu0
        %v1962 = vadd.f32 %v1748, %v1961
        %v1963 = vpop.f32.mrf.mxu0
        %v1964 = vadd.f32 %v1748, %v1963
        %1965 = vmatmul.bf16.gmra.mxu0 %v1711
        %v1966 = vpop.f32.mrf.mxu0
        %v1967 = vadd.f32 %v1748, %v1966
        %v1968 = vpop.f32.mrf.mxu0
        %v1969 = vadd.f32 %v1748, %v1968
        %1970 = vdwg.mxu0
        %1971 = vmatpush.bf16.msra.mxu0 %v1881
        %1972 = vmatpush.bf16.msra.mxu0 %v1877
        %1973 = vmatpush.bf16.msra.mxu0 %v1873
        %1974 = vmatpush.bf16.msra.mxu0 %v1869
        %1975 = vmatpush.bf16.msra.mxu0 %v1865
        %1976 = vmatpush.bf16.msra.mxu0 %v1861
        %1977 = vmatpush.bf16.msra.mxu0 %v1857
        %1978 = vmatpush.bf16.msra.mxu0 %v1853
        %1979 = vmatmul.bf16.gmra.mxu0 %v1710
        %v1980 = vpop.f32.mrf.mxu0
        %v1981 = vadd.f32 %v1749, %v1980
        %v1982 = vpop.f32.mrf.mxu0
        %v1983 = vadd.f32 %v1749, %v1982
        %1984 = vmatmul.bf16.gmra.mxu0 %v1711
        %v1985 = vpop.f32.mrf.mxu0
        %v1986 = vadd.f32 %v1749, %v1985
        %v1987 = vpop.f32.mrf.mxu0
        %v1988 = vadd.f32 %v1749, %v1987
        %1989 = vdwg.mxu0
        %v1990 = vmul.f32 %v1924, 0.5
        %v1991 = vmul.f32 %v1943, 0.5
        %v1992 = vmul.f32 %v1962, 0.5
        %v1993 = vmul.f32 %v1981, 0.5
        %v1994 = vmul.f32 %v1926, 0.5
        %v1995 = vmul.f32 %v1945, 0.5
        %v1996 = vmul.f32 %v1964, 0.5
        %v1997 = vmul.f32 %v1983, 0.5
        %v1998 = vmul.f32 %v1929, 0.5
        %v1999 = vmul.f32 %v1948, 0.5
        %v2000 = vmul.f32 %v1967, 0.5
        %v2001 = vmul.f32 %v1986, 0.5
        %v2002 = vmul.f32 %v1931, 0.5
        %v2003 = vmul.f32 %v1950, 0.5
        %v2004 = vmul.f32 %v1969, 0.5
        %v2005 = vmul.f32 %v1988, 0.5
        %v2006 = vmul.f32 %v1924, 0.044715
        %v2007 = vmul.f32 %v1943, 0.044715
        %v2008 = vmul.f32 %v1962, 0.044715
        %v2009 = vmul.f32 %v1981, 0.044715
        %v2010 = vmul.f32 %v1926, 0.044715
        %v2011 = vmul.f32 %v1945, 0.044715
        %v2012 = vmul.f32 %v1964, 0.044715
        %v2013 = vmul.f32 %v1983, 0.044715
        %v2014 = vmul.f32 %v1929, 0.044715
        %v2015 = vmul.f32 %v1948, 0.044715
        %v2016 = vmul.f32 %v1967, 0.044715
        %v2017 = vmul.f32 %v1986, 0.044715
        %v2018 = vmul.f32 %v1931, 0.044715
        %v2019 = vmul.f32 %v1950, 0.044715
        %v2020 = vmul.f32 %v1969, 0.044715
        %v2021 = vmul.f32 %v1988, 0.044715
        %v2022 = vmul.f32 %v2006, %v1924
        %v2023 = vmul.f32 %v2007, %v1943
        %v2024 = vmul.f32 %v2008, %v1962
        %v2025 = vmul.f32 %v2009, %v1981
        %v2026 = vmul.f32 %v2010, %v1926
        %v2027 = vmul.f32 %v2011, %v1945
        %v2028 = vmul.f32 %v2012, %v1964
        %v2029 = vmul.f32 %v2013, %v1983
        %v2030 = vmul.f32 %v2014, %v1929
        %v2031 = vmul.f32 %v2015, %v1948
        %v2032 = vmul.f32 %v2016, %v1967
        %v2033 = vmul.f32 %v2017, %v1986
        %v2034 = vmul.f32 %v2018, %v1931
        %v2035 = vmul.f32 %v2019, %v1950
        %v2036 = vmul.f32 %v2020, %v1969
        %v2037 = vmul.f32 %v2021, %v1988
        %v2038 = vmul.f32 %v2022, %v1924
        %v2039 = vmul.f32 %v2023, %v1943
        %v2040 = vmul.f32 %v2024, %v1962
        %v2041 = vmul.f32 %v2025, %v1981
        %v2042 = vmul.f32 %v2026, %v1926
        %v2043 = vmul.f32 %v2027, %v1945
        %v2044 = vmul.f32 %v2028, %v1964
        %v2045 = vmul.f32 %v2029, %v1983
        %v2046 = vmul.f32 %v2030, %v1929
        %v2047 = vmul.f32 %v2031, %v1948
        %v2048 = vmul.f32 %v2032, %v1967
        %v2049 = vmul.f32 %v2033, %v1986
        %v2050 = vmul.f32 %v2034, %v1931
        %v2051 = vmul.f32 %v2035, %v1950
        %v2052 = vmul.f32 %v2036, %v1969
        %v2053 = vmul.f32 %v2037, %v1988
        %v2054 = vadd.f32 %v1924, %v2038
        %v2055 = vadd.f32 %v1943, %v2039
        %v2056 = vadd.f32 %v1962, %v2040
        %v2057 = vadd.f32 %v1981, %v2041
        %v2058 = vadd.f32 %v1926, %v2042
        %v2059 = vadd.f32 %v1945, %v2043
        %v2060 = vadd.f32 %v1964, %v2044
        %v2061 = vadd.f32 %v1983, %v2045
        %v2062 = vadd.f32 %v1929, %v2046
        %v2063 = vadd.f32 %v1948, %v2047
        %v2064 = vadd.f32 %v1967, %v2048
        %v2065 = vadd.f32 %v1986, %v2049
        %v2066 = vadd.f32 %v1931, %v2050
        %v2067 = vadd.f32 %v1950, %v2051
        %v2068 = vadd.f32 %v1969, %v2052
        %v2069 = vadd.f32 %v1988, %v2053
        %v2070 = vmul.f32 %v2054, 0.7978846
        %v2071 = vmul.f32 %v2055, 0.7978846
        %v2072 = vmul.f32 %v2056, 0.7978846
        %v2073 = vmul.f32 %v2057, 0.7978846
        %v2074 = vmul.f32 %v2058, 0.7978846
        %v2075 = vmul.f32 %v2059, 0.7978846
        %v2076 = vmul.f32 %v2060, 0.7978846
        %v2077 = vmul.f32 %v2061, 0.7978846
        %v2078 = vmul.f32 %v2062, 0.7978846
        %v2079 = vmul.f32 %v2063, 0.7978846
        %v2080 = vmul.f32 %v2064, 0.7978846
        %v2081 = vmul.f32 %v2065, 0.7978846
        %v2082 = vmul.f32 %v2066, 0.7978846
        %v2083 = vmul.f32 %v2067, 0.7978846
        %v2084 = vmul.f32 %v2068, 0.7978846
        %v2085 = vmul.f32 %v2069, 0.7978846
        %v2086 = vtanh.pop %v2070
        %v2087 = vtanh.pop %v2071
        %v2088 = vtanh.pop %v2072
        %v2089 = vtanh.pop %v2073
        %v2090 = vtanh.pop %v2074
        %v2091 = vtanh.pop %v2075
        %v2092 = vtanh.pop %v2076
        %v2093 = vtanh.pop %v2077
        %v2094 = vtanh.pop %v2078
        %v2095 = vtanh.pop %v2079
        %v2096 = vtanh.pop %v2080
        %v2097 = vtanh.pop %v2081
        %v2098 = vtanh.pop %v2082
        %v2099 = vtanh.pop %v2083
        %v2100 = vtanh.pop %v2084
        %v2101 = vtanh.pop %v2085
        %v2102 = vadd.f32 %v2086, 1.0
        %v2103 = vadd.f32 %v2087, 1.0
        %v2104 = vadd.f32 %v2088, 1.0
        %v2105 = vadd.f32 %v2089, 1.0
        %v2106 = vadd.f32 %v2090, 1.0
        %v2107 = vadd.f32 %v2091, 1.0
        %v2108 = vadd.f32 %v2092, 1.0
        %v2109 = vadd.f32 %v2093, 1.0
        %v2110 = vadd.f32 %v2094, 1.0
        %v2111 = vadd.f32 %v2095, 1.0
        %v2112 = vadd.f32 %v2096, 1.0
        %v2113 = vadd.f32 %v2097, 1.0
        %v2114 = vadd.f32 %v2098, 1.0
        %v2115 = vadd.f32 %v2099, 1.0
        %v2116 = vadd.f32 %v2100, 1.0
        %v2117 = vadd.f32 %v2101, 1.0
        %v2118 = vmul.f32 %v1990, %v2102
        %v2119 = vmul.f32 %v1991, %v2103
        %v2120 = vmul.f32 %v1992, %v2104
        %v2121 = vmul.f32 %v1993, %v2105
        %v2122 = vmul.f32 %v1994, %v2106
        %v2123 = vmul.f32 %v1995, %v2107
        %v2124 = vmul.f32 %v1996, %v2108
        %v2125 = vmul.f32 %v1997, %v2109
        %v2126 = vmul.f32 %v1998, %v2110
        %v2127 = vmul.f32 %v1999, %v2111
        %v2128 = vmul.f32 %v2000, %v2112
        %v2129 = vmul.f32 %v2001, %v2113
        %v2130 = vmul.f32 %v2002, %v2114
        %v2131 = vmul.f32 %v2003, %v2115
        %v2132 = vmul.f32 %v2004, %v2116
        %v2133 = vmul.f32 %v2005, %v2117
        %v2134 = vpack.c.bf16 %v2122, %v2118
        %v2135 = vpack.c.bf16 %v2123, %v2119
        %v2136 = vpack.c.bf16 %v2124, %v2120
        %v2137 = vpack.c.bf16 %v2125, %v2121
        %v2138 = vpack.c.bf16 %v2130, %v2126
        %v2139 = vpack.c.bf16 %v2131, %v2127
        %v2140 = vpack.c.bf16 %v2132, %v2128
        %v2141 = vpack.c.bf16 %v2133, %v2129
        %v2142 = vld [vmem:[#allocation17] sm:$0xf]
        %v2143 = vld [vmem:[#allocation17 + $0x4] sm:$0xf]
        %v2144 = vld [vmem:[#allocation17 + $0x8] sm:$0xf]
        %v2145 = vld [vmem:[#allocation17 + $0xc] sm:$0xf]
        %v2146 = vld [vmem:[#allocation17 + $0x10] sm:$0xf]
        %v2147 = vld [vmem:[#allocation17 + $0x14] sm:$0xf]
        %v2148 = vld [vmem:[#allocation17 + $0x18] sm:$0xf]
        %v2149 = vld [vmem:[#allocation17 + $0x1c] sm:$0xf]
        %v2150 = vld [vmem:[#allocation17 + $0x20] sm:$0xf]
        %v2151 = vld [vmem:[#allocation17 + $0x24] sm:$0xf]
        %v2152 = vld [vmem:[#allocation17 + $0x28] sm:$0xf]
        %v2153 = vld [vmem:[#allocation17 + $0x2c] sm:$0xf]
        %v2154 = vld [vmem:[#allocation17 + $0x30] sm:$0xf]
        %v2155 = vld [vmem:[#allocation17 + $0x34] sm:$0xf]
        %v2156 = vld [vmem:[#allocation17 + $0x38] sm:$0xf]
        %v2157 = vld [vmem:[#allocation17 + $0x3c] sm:$0xf]
        %v2158 = vld [vmem:[#allocation17 + $0x40] sm:$0xf]
        %v2159 = vld [vmem:[#allocation17 + $0x44] sm:$0xf]
        %v2160 = vld [vmem:[#allocation17 + $0x48] sm:$0xf]
        %v2161 = vld [vmem:[#allocation17 + $0x4c] sm:$0xf]
        %v2162 = vld [vmem:[#allocation17 + $0x50] sm:$0xf]
        %v2163 = vld [vmem:[#allocation17 + $0x54] sm:$0xf]
        %v2164 = vld [vmem:[#allocation17 + $0x58] sm:$0xf]
        %v2165 = vld [vmem:[#allocation17 + $0x5c] sm:$0xf]
        %v2166 = vld [vmem:[#allocation17 + $0x60] sm:$0xf]
        %v2167 = vld [vmem:[#allocation17 + $0x64] sm:$0xf]
        %v2168 = vld [vmem:[#allocation17 + $0x68] sm:$0xf]
        %v2169 = vld [vmem:[#allocation17 + $0x6c] sm:$0xf]
        %v2170 = vld [vmem:[#allocation17 + $0x70] sm:$0xf]
        %v2171 = vld [vmem:[#allocation17 + $0x74] sm:$0xf]
        %v2172 = vld [vmem:[#allocation17 + $0x78] sm:$0xf]
        %v2173 = vld [vmem:[#allocation17 + $0x7c] sm:$0xf]
        %v2174 = vld [vmem:[#allocation17 + $0x80] sm:$0xf]
        %v2175 = vld [vmem:[#allocation17 + $0x84] sm:$0xf]
        %v2176 = vld [vmem:[#allocation17 + $0x88] sm:$0xf]
        %v2177 = vld [vmem:[#allocation17 + $0x8c] sm:$0xf]
        %v2178 = vld [vmem:[#allocation17 + $0x90] sm:$0xf]
        %v2179 = vld [vmem:[#allocation17 + $0x94] sm:$0xf]
        %v2180 = vld [vmem:[#allocation17 + $0x98] sm:$0xf]
        %v2181 = vld [vmem:[#allocation17 + $0x9c] sm:$0xf]
        %v2182 = vld [vmem:[#allocation17 + $0xa0] sm:$0xf]
        %v2183 = vld [vmem:[#allocation17 + $0xa4] sm:$0xf]
        %v2184 = vld [vmem:[#allocation17 + $0xa8] sm:$0xf]
        %v2185 = vld [vmem:[#allocation17 + $0xac] sm:$0xf]
        %v2186 = vld [vmem:[#allocation17 + $0xb0] sm:$0xf]
        %v2187 = vld [vmem:[#allocation17 + $0xb4] sm:$0xf]
        %v2188 = vld [vmem:[#allocation17 + $0xb8] sm:$0xf]
        %v2189 = vld [vmem:[#allocation17 + $0xbc] sm:$0xf]
        %v2190 = vld [vmem:[#allocation17 + $0xc0] sm:$0xf]
        %v2191 = vld [vmem:[#allocation17 + $0xc4] sm:$0xf]
        %v2192 = vld [vmem:[#allocation17 + $0xc8] sm:$0xf]
        %v2193 = vld [vmem:[#allocation17 + $0xcc] sm:$0xf]
        %v2194 = vld [vmem:[#allocation17 + $0xd0] sm:$0xf]
        %v2195 = vld [vmem:[#allocation17 + $0xd4] sm:$0xf]
        %v2196 = vld [vmem:[#allocation17 + $0xd8] sm:$0xf]
        %v2197 = vld [vmem:[#allocation17 + $0xdc] sm:$0xf]
        %v2198 = vld [vmem:[#allocation17 + $0xe0] sm:$0xf]
        %v2199 = vld [vmem:[#allocation17 + $0xe4] sm:$0xf]
        %v2200 = vld [vmem:[#allocation17 + $0xe8] sm:$0xf]
        %v2201 = vld [vmem:[#allocation17 + $0xec] sm:$0xf]
        %v2202 = vld [vmem:[#allocation17 + $0xf0] sm:$0xf]
        %v2203 = vld [vmem:[#allocation17 + $0xf4] sm:$0xf]
        %v2204 = vld [vmem:[#allocation17 + $0xf8] sm:$0xf]
        %v2205 = vld [vmem:[#allocation17 + $0xfc] sm:$0xf]
        %v2206 = vld [vmem:[#allocation16 + $0x10] sm:$0xff]
        %v2207 = vld [vmem:[#allocation16 + $0x28] sm:$0xff]
        %v2208 = vld [vmem:[#allocation16 + $0x40] sm:$0xff]
        %v2209 = vld [vmem:[#allocation16 + $0x58] sm:$0xff]
        %v2210 = vld [vmem:[#allocation16 + $0x70] sm:$0xff]
        %v2211 = vld [vmem:[#allocation16 + $0x88] sm:$0xff]
        %v2212 = vld [vmem:[#allocation16 + $0xa0] sm:$0xff]
        %v2213 = vld [vmem:[#allocation16 + $0xb8] sm:$0xff]
        %v2214 = vld [vmem:[#allocation16 + $0xd0] sm:$0xff]
        %v2215 = vld [vmem:[#allocation16 + $0xe8] sm:$0xff]
        %v2216 = vld [vmem:[#allocation16 + $0x100] sm:$0xff]
        %v2217 = vld [vmem:[#allocation16 + $0x118] sm:$0xff]
        %v2218 = vld [vmem:[#allocation16 + $0x130] sm:$0xff]
        %v2219 = vld [vmem:[#allocation16 + $0x148] sm:$0xff]
        %v2220 = vld [vmem:[#allocation16 + $0x160] sm:$0xff]
        %v2221 = vld [vmem:[#allocation16 + $0x178] sm:$0xff]
        %v2222 = vld [vmem:[%s10 + $0x4] sm:$0x3]
        %v2224 = vperm.slane %v2222, 0
        %v2225 = vperm.slane %v2222, 1
        %v2244 = vunpack.c.l.b16 %v2206
        %v2245 = vunpack.c.h.b16 %v2206
        %v2246 = vunpack.c.l.b16 %v2207
        %v2247 = vunpack.c.h.b16 %v2207
        %v2248 = vunpack.c.l.b16 %v2208
        %v2249 = vunpack.c.h.b16 %v2208
        %v2250 = vunpack.c.l.b16 %v2209
        %v2251 = vunpack.c.h.b16 %v2209
        %v2252 = vunpack.c.l.b16 %v2210
        %v2253 = vunpack.c.h.b16 %v2210
        %v2254 = vunpack.c.l.b16 %v2211
        %v2255 = vunpack.c.h.b16 %v2211
        %v2256 = vunpack.c.l.b16 %v2212
        %v2257 = vunpack.c.h.b16 %v2212
        %v2258 = vunpack.c.l.b16 %v2213
        %v2259 = vunpack.c.h.b16 %v2213
        %v2260 = vunpack.c.l.b16 %v2214
        %v2261 = vunpack.c.h.b16 %v2214
        %v2262 = vunpack.c.l.b16 %v2215
        %v2263 = vunpack.c.h.b16 %v2215
        %v2264 = vunpack.c.l.b16 %v2216
        %v2265 = vunpack.c.h.b16 %v2216
        %v2266 = vunpack.c.l.b16 %v2217
        %v2267 = vunpack.c.h.b16 %v2217
        %v2268 = vunpack.c.l.b16 %v2218
        %v2269 = vunpack.c.h.b16 %v2218
        %v2270 = vunpack.c.l.b16 %v2219
        %v2271 = vunpack.c.h.b16 %v2219
        %v2272 = vunpack.c.l.b16 %v2220
        %v2273 = vunpack.c.h.b16 %v2220
        %v2274 = vunpack.c.l.b16 %v2221
        %v2275 = vunpack.c.h.b16 %v2221
        %v2276 = vpack.c.b16 %v2246, %v2244
        %v2277 = vpack.c.b16 %v2247, %v2245
        %v2278 = vpack.c.b16 %v2250, %v2248
        %v2279 = vpack.c.b16 %v2251, %v2249
        %v2280 = vpack.c.b16 %v2254, %v2252
        %v2281 = vpack.c.b16 %v2255, %v2253
        %v2282 = vpack.c.b16 %v2258, %v2256
        %v2283 = vpack.c.b16 %v2259, %v2257
        %v2284 = vpack.c.b16 %v2262, %v2260
        %v2285 = vpack.c.b16 %v2263, %v2261
        %v2286 = vpack.c.b16 %v2266, %v2264
        %v2287 = vpack.c.b16 %v2267, %v2265
        %v2288 = vpack.c.b16 %v2270, %v2268
        %v2289 = vpack.c.b16 %v2271, %v2269
        %v2290 = vpack.c.b16 %v2274, %v2272
        %v2291 = vpack.c.b16 %v2275, %v2273
        %2308 = vmatpush.bf16.msra.mxu0 %v2290
        %2309 = vmatpush.bf16.msra.mxu0 %v2288
        %2310 = vmatpush.bf16.msra.mxu0 %v2286
        %2311 = vmatpush.bf16.msra.mxu0 %v2284
        %2312 = vmatpush.bf16.msra.mxu0 %v2282
        %2313 = vmatpush.bf16.msra.mxu0 %v2280
        %2314 = vmatpush.bf16.msra.mxu0 %v2278
        %2315 = vmatpush.bf16.msra.mxu0 %v2276
        %2316 = vmatmul.bf16.gmra.mxu0 %v1710
        %v2317 = vpop.f32.mrf.mxu0
        %v2318 = vadd.f32 %v2224, %v2317
        %v2319 = vpop.f32.mrf.mxu0
        %v2320 = vadd.f32 %v2224, %v2319
        %2321 = vmatmul.bf16.gmra.mxu0 %v1711
        %v2322 = vpop.f32.mrf.mxu0
        %v2323 = vadd.f32 %v2224, %v2322
        %v2324 = vpop.f32.mrf.mxu0
        %v2325 = vadd.f32 %v2224, %v2324
        %2326 = vdwg.mxu0
        %2327 = vmatpush.bf16.msra.mxu0 %v2291
        %2328 = vmatpush.bf16.msra.mxu0 %v2289
        %2329 = vmatpush.bf16.msra.mxu0 %v2287
        %2330 = vmatpush.bf16.msra.mxu0 %v2285
        %2331 = vmatpush.bf16.msra.mxu0 %v2283
        %2332 = vmatpush.bf16.msra.mxu0 %v2281
        %2333 = vmatpush.bf16.msra.mxu0 %v2279
        %2334 = vmatpush.bf16.msra.mxu0 %v2277
        %2335 = vmatmul.bf16.gmra.mxu0 %v1710
        %v2336 = vpop.f32.mrf.mxu0
        %v2337 = vadd.f32 %v2225, %v2336
        %v2338 = vpop.f32.mrf.mxu0
        %v2339 = vadd.f32 %v2225, %v2338
        %2340 = vmatmul.bf16.gmra.mxu0 %v1711
        %v2341 = vpop.f32.mrf.mxu0
        %v2342 = vadd.f32 %v2225, %v2341
        %v2343 = vpop.f32.mrf.mxu0
        %v2344 = vadd.f32 %v2225, %v2343
        %2345 = vdwg.mxu0
        %v2346 = vmul.f32 %v2318, 0.5
        %v2347 = vmul.f32 %v2337, 0.5
        %v2348 = vmul.f32 %v2320, 0.5
        %v2349 = vmul.f32 %v2339, 0.5
        %v2350 = vmul.f32 %v2323, 0.5
        %v2351 = vmul.f32 %v2342, 0.5
        %v2352 = vmul.f32 %v2325, 0.5
        %v2353 = vmul.f32 %v2344, 0.5
        %v2354 = vmul.f32 %v2318, 0.044715
        %v2355 = vmul.f32 %v2337, 0.044715
        %v2356 = vmul.f32 %v2320, 0.044715
        %v2357 = vmul.f32 %v2339, 0.044715
        %v2358 = vmul.f32 %v2323, 0.044715
        %v2359 = vmul.f32 %v2342, 0.044715
        %v2360 = vmul.f32 %v2325, 0.044715
        %v2361 = vmul.f32 %v2344, 0.044715
        %v2362 = vmul.f32 %v2354, %v2318
        %v2363 = vmul.f32 %v2355, %v2337
        %v2364 = vmul.f32 %v2356, %v2320
        %v2365 = vmul.f32 %v2357, %v2339
        %v2366 = vmul.f32 %v2358, %v2323
        %v2367 = vmul.f32 %v2359, %v2342
        %v2368 = vmul.f32 %v2360, %v2325
        %v2369 = vmul.f32 %v2361, %v2344
        %v2370 = vmul.f32 %v2362, %v2318
        %v2371 = vmul.f32 %v2363, %v2337
        %v2372 = vmul.f32 %v2364, %v2320
        %v2373 = vmul.f32 %v2365, %v2339
        %v2374 = vmul.f32 %v2366, %v2323
        %v2375 = vmul.f32 %v2367, %v2342
        %v2376 = vmul.f32 %v2368, %v2325
        %v2377 = vmul.f32 %v2369, %v2344
        %v2378 = vadd.f32 %v2318, %v2370
        %v2379 = vadd.f32 %v2337, %v2371
        %v2380 = vadd.f32 %v2320, %v2372
        %v2381 = vadd.f32 %v2339, %v2373
        %v2382 = vadd.f32 %v2323, %v2374
        %v2383 = vadd.f32 %v2342, %v2375
        %v2384 = vadd.f32 %v2325, %v2376
        %v2385 = vadd.f32 %v2344, %v2377
        %v2386 = vmul.f32 %v2378, 0.7978846
        %v2387 = vmul.f32 %v2379, 0.7978846
        %v2388 = vmul.f32 %v2380, 0.7978846
        %v2389 = vmul.f32 %v2381, 0.7978846
        %v2390 = vmul.f32 %v2382, 0.7978846
        %v2391 = vmul.f32 %v2383, 0.7978846
        %v2392 = vmul.f32 %v2384, 0.7978846
        %v2393 = vmul.f32 %v2385, 0.7978846
        %v2394 = vtanh.pop %v2386
        %v2395 = vtanh.pop %v2387
        %v2396 = vtanh.pop %v2388
        %v2397 = vtanh.pop %v2389
        %v2398 = vtanh.pop %v2390
        %v2399 = vtanh.pop %v2391
        %v2400 = vtanh.pop %v2392
        %v2401 = vtanh.pop %v2393
        %v2402 = vadd.f32 %v2394, 1.0
        %v2403 = vadd.f32 %v2395, 1.0
        %v2404 = vadd.f32 %v2396, 1.0
        %v2405 = vadd.f32 %v2397, 1.0
        %v2406 = vadd.f32 %v2398, 1.0
        %v2407 = vadd.f32 %v2399, 1.0
        %v2408 = vadd.f32 %v2400, 1.0
        %v2409 = vadd.f32 %v2401, 1.0
        %v2410 = vmul.f32 %v2346, %v2402
        %v2411 = vmul.f32 %v2347, %v2403
        %v2412 = vmul.f32 %v2348, %v2404
        %v2413 = vmul.f32 %v2349, %v2405
        %v2414 = vmul.f32 %v2350, %v2406
        %v2415 = vmul.f32 %v2351, %v2407
        %v2416 = vmul.f32 %v2352, %v2408
        %v2417 = vmul.f32 %v2353, %v2409
        %v2418 = vpack.c.bf16 %v2412, %v2410
        %v2419 = vpack.c.bf16 %v2413, %v2411
        %v2420 = vpack.c.bf16 %v2416, %v2414
        %v2421 = vpack.c.bf16 %v2417, %v2415
        %v2422 = vld [vmem:[#allocation17 + $0x100] sm:$0xf]
        %v2423 = vld [vmem:[#allocation17 + $0x104] sm:$0xf]
        %v2424 = vld [vmem:[#allocation17 + $0x108] sm:$0xf]
        %v2425 = vld [vmem:[#allocation17 + $0x10c] sm:$0xf]
        %v2426 = vld [vmem:[#allocation17 + $0x110] sm:$0xf]
        %v2427 = vld [vmem:[#allocation17 + $0x114] sm:$0xf]
        %v2428 = vld [vmem:[#allocation17 + $0x118] sm:$0xf]
        %v2429 = vld [vmem:[#allocation17 + $0x11c] sm:$0xf]
        %v2430 = vld [vmem:[#allocation17 + $0x120] sm:$0xf]
        %v2431 = vld [vmem:[#allocation17 + $0x124] sm:$0xf]
        %v2432 = vld [vmem:[#allocation17 + $0x128] sm:$0xf]
        %v2433 = vld [vmem:[#allocation17 + $0x12c] sm:$0xf]
        %v2434 = vld [vmem:[#allocation17 + $0x130] sm:$0xf]
        %v2435 = vld [vmem:[#allocation17 + $0x134] sm:$0xf]
        %v2436 = vld [vmem:[#allocation17 + $0x138] sm:$0xf]
        %v2437 = vld [vmem:[#allocation17 + $0x13c] sm:$0xf]
        %v2438 = vld [vmem:[#allocation17 + $0x140] sm:$0xf]
        %v2439 = vld [vmem:[#allocation17 + $0x144] sm:$0xf]
        %v2440 = vld [vmem:[#allocation17 + $0x148] sm:$0xf]
        %v2441 = vld [vmem:[#allocation17 + $0x14c] sm:$0xf]
        %v2442 = vld [vmem:[#allocation17 + $0x150] sm:$0xf]
        %v2443 = vld [vmem:[#allocation17 + $0x154] sm:$0xf]
        %v2444 = vld [vmem:[#allocation17 + $0x158] sm:$0xf]
        %v2445 = vld [vmem:[#allocation17 + $0x15c] sm:$0xf]
        %v2446 = vld [vmem:[#allocation17 + $0x160] sm:$0xf]
        %v2447 = vld [vmem:[#allocation17 + $0x164] sm:$0xf]
        %v2448 = vld [vmem:[#allocation17 + $0x168] sm:$0xf]
        %v2449 = vld [vmem:[#allocation17 + $0x16c] sm:$0xf]
        %v2450 = vld [vmem:[#allocation17 + $0x170] sm:$0xf]
        %v2451 = vld [vmem:[#allocation17 + $0x174] sm:$0xf]
        %v2452 = vld [vmem:[#allocation17 + $0x178] sm:$0xf]
        %v2453 = vld [vmem:[#allocation17 + $0x17c] sm:$0xf]
        %v2486 = vunpack.c.l.b16 %v2422
        %v2487 = vunpack.c.l.b16 %v2423
        %v2488 = vunpack.c.l.b16 %v2424
        %v2489 = vunpack.c.l.b16 %v2425
        %v2490 = vunpack.c.l.b16 %v2426
        %v2491 = vunpack.c.l.b16 %v2427
        %v2492 = vunpack.c.l.b16 %v2428
        %v2493 = vunpack.c.l.b16 %v2429
        %v2494 = vunpack.c.l.b16 %v2430
        %v2495 = vunpack.c.l.b16 %v2431
        %v2496 = vunpack.c.l.b16 %v2432
        %v2497 = vunpack.c.l.b16 %v2433
        %v2498 = vunpack.c.l.b16 %v2434
        %v2499 = vunpack.c.l.b16 %v2435
        %v2500 = vunpack.c.l.b16 %v2436
        %v2501 = vunpack.c.l.b16 %v2437
        %v2502 = vunpack.c.l.b16 %v2438
        %v2503 = vunpack.c.l.b16 %v2439
        %v2504 = vunpack.c.l.b16 %v2440
        %v2505 = vunpack.c.l.b16 %v2441
        %v2506 = vunpack.c.l.b16 %v2442
        %v2507 = vunpack.c.l.b16 %v2443
        %v2508 = vunpack.c.l.b16 %v2444
        %v2509 = vunpack.c.l.b16 %v2445
        %v2510 = vunpack.c.l.b16 %v2446
        %v2511 = vunpack.c.l.b16 %v2447
        %v2512 = vunpack.c.l.b16 %v2448
        %v2513 = vunpack.c.l.b16 %v2449
        %v2514 = vunpack.c.l.b16 %v2450
        %v2515 = vunpack.c.l.b16 %v2451
        %v2516 = vunpack.c.l.b16 %v2452
        %v2517 = vunpack.c.l.b16 %v2453
        %v2518 = vpack.c.b16 %v2487, %v2486
        %v2519 = vpack.c.b16 %v2489, %v2488
        %v2520 = vpack.c.b16 %v2491, %v2490
        %v2521 = vpack.c.b16 %v2493, %v2492
        %v2522 = vpack.c.b16 %v2495, %v2494
        %v2523 = vpack.c.b16 %v2497, %v2496
        %v2524 = vpack.c.b16 %v2499, %v2498
        %v2525 = vpack.c.b16 %v2501, %v2500
        %v2526 = vpack.c.b16 %v2503, %v2502
        %v2527 = vpack.c.b16 %v2505, %v2504
        %v2528 = vpack.c.b16 %v2507, %v2506
        %v2529 = vpack.c.b16 %v2509, %v2508
        %v2530 = vpack.c.b16 %v2511, %v2510
        %v2531 = vpack.c.b16 %v2513, %v2512
        %v2532 = vpack.c.b16 %v2515, %v2514
        %v2533 = vpack.c.b16 %v2517, %v2516
        %2550 = vmatpush.bf16.msra.mxu0 %v2525
        %2551 = vmatpush.bf16.msra.mxu0 %v2524
        %2552 = vmatpush.bf16.msra.mxu0 %v2523
        %2553 = vmatpush.bf16.msra.mxu0 %v2522
        %2554 = vmatpush.bf16.msra.mxu0 %v2521
        %2555 = vmatpush.bf16.msra.mxu0 %v2520
        %2556 = vmatpush.bf16.msra.mxu0 %v2519
        %2557 = vmatpush.bf16.msra.mxu0 %v2518
        %2558 = vmatmul.bf16.gmra.mxu0 %v2418
        %v2559 = vpop.f32.mrf.mxu0
        %v2560 = vadd.f32 0.0, %v2559
        %v2561 = vpop.f32.mrf.mxu0
        %v2562 = vadd.f32 0.0, %v2561
        %2563 = vmatmul.bf16.gmra.mxu0 %v2420
        %v2564 = vpop.f32.mrf.mxu0
        %v2565 = vadd.f32 0.0, %v2564
        %v2566 = vpop.f32.mrf.mxu0
        %v2567 = vadd.f32 0.0, %v2566
        %2568 = vdwg.mxu0
        %2569 = vmatpush.bf16.msra.mxu0 %v2533
        %2570 = vmatpush.bf16.msra.mxu0 %v2532
        %2571 = vmatpush.bf16.msra.mxu0 %v2531
        %2572 = vmatpush.bf16.msra.mxu0 %v2530
        %2573 = vmatpush.bf16.msra.mxu0 %v2529
        %2574 = vmatpush.bf16.msra.mxu0 %v2528
        %2575 = vmatpush.bf16.msra.mxu0 %v2527
        %2576 = vmatpush.bf16.msra.mxu0 %v2526
        %2577 = vmatmul.bf16.gmra.mxu0 %v2419
        %v2578 = vpop.f32.mrf.mxu0
        %v2579 = vadd.f32 %v2560, %v2578
        %v2580 = vpop.f32.mrf.mxu0
        %v2581 = vadd.f32 %v2562, %v2580
        %2582 = vmatmul.bf16.gmra.mxu0 %v2421
        %v2583 = vpop.f32.mrf.mxu0
        %v2584 = vadd.f32 %v2565, %v2583
        %v2585 = vpop.f32.mrf.mxu0
        %v2586 = vadd.f32 %v2567, %v2585
        %2587 = vdwg.mxu0
        %v2652 = vunpack.c.l.b16 %v2142
        %v2653 = vunpack.c.l.b16 %v2143
        %v2654 = vunpack.c.l.b16 %v2144
        %v2655 = vunpack.c.l.b16 %v2145
        %v2656 = vunpack.c.l.b16 %v2146
        %v2657 = vunpack.c.l.b16 %v2147
        %v2658 = vunpack.c.l.b16 %v2148
        %v2659 = vunpack.c.l.b16 %v2149
        %v2660 = vunpack.c.l.b16 %v2150
        %v2661 = vunpack.c.l.b16 %v2151
        %v2662 = vunpack.c.l.b16 %v2152
        %v2663 = vunpack.c.l.b16 %v2153
        %v2664 = vunpack.c.l.b16 %v2154
        %v2665 = vunpack.c.l.b16 %v2155
        %v2666 = vunpack.c.l.b16 %v2156
        %v2667 = vunpack.c.l.b16 %v2157
        %v2668 = vunpack.c.l.b16 %v2158
        %v2669 = vunpack.c.l.b16 %v2159
        %v2670 = vunpack.c.l.b16 %v2160
        %v2671 = vunpack.c.l.b16 %v2161
        %v2672 = vunpack.c.l.b16 %v2162
        %v2673 = vunpack.c.l.b16 %v2163
        %v2674 = vunpack.c.l.b16 %v2164
        %v2675 = vunpack.c.l.b16 %v2165
        %v2676 = vunpack.c.l.b16 %v2166
        %v2677 = vunpack.c.l.b16 %v2167
        %v2678 = vunpack.c.l.b16 %v2168
        %v2679 = vunpack.c.l.b16 %v2169
        %v2680 = vunpack.c.l.b16 %v2170
        %v2681 = vunpack.c.l.b16 %v2171
        %v2682 = vunpack.c.l.b16 %v2172
        %v2683 = vunpack.c.l.b16 %v2173
        %v2684 = vunpack.c.l.b16 %v2174
        %v2685 = vunpack.c.l.b16 %v2175
        %v2686 = vunpack.c.l.b16 %v2176
        %v2687 = vunpack.c.l.b16 %v2177
        %v2688 = vunpack.c.l.b16 %v2178
        %v2689 = vunpack.c.l.b16 %v2179
        %v2690 = vunpack.c.l.b16 %v2180
        %v2691 = vunpack.c.l.b16 %v2181
        %v2692 = vunpack.c.l.b16 %v2182
        %v2693 = vunpack.c.l.b16 %v2183
        %v2694 = vunpack.c.l.b16 %v2184
        %v2695 = vunpack.c.l.b16 %v2185
        %v2696 = vunpack.c.l.b16 %v2186
        %v2697 = vunpack.c.l.b16 %v2187
        %v2698 = vunpack.c.l.b16 %v2188
        %v2699 = vunpack.c.l.b16 %v2189
        %v2700 = vunpack.c.l.b16 %v2190
        %v2701 = vunpack.c.l.b16 %v2191
        %v2702 = vunpack.c.l.b16 %v2192
        %v2703 = vunpack.c.l.b16 %v2193
        %v2704 = vunpack.c.l.b16 %v2194
        %v2705 = vunpack.c.l.b16 %v2195
        %v2706 = vunpack.c.l.b16 %v2196
        %v2707 = vunpack.c.l.b16 %v2197
        %v2708 = vunpack.c.l.b16 %v2198
        %v2709 = vunpack.c.l.b16 %v2199
        %v2710 = vunpack.c.l.b16 %v2200
        %v2711 = vunpack.c.l.b16 %v2201
        %v2712 = vunpack.c.l.b16 %v2202
        %v2713 = vunpack.c.l.b16 %v2203
        %v2714 = vunpack.c.l.b16 %v2204
        %v2715 = vunpack.c.l.b16 %v2205
        %v2716 = vpack.c.b16 %v2653, %v2652
        %v2717 = vpack.c.b16 %v2655, %v2654
        %v2718 = vpack.c.b16 %v2657, %v2656
        %v2719 = vpack.c.b16 %v2659, %v2658
        %v2720 = vpack.c.b16 %v2661, %v2660
        %v2721 = vpack.c.b16 %v2663, %v2662
        %v2722 = vpack.c.b16 %v2665, %v2664
        %v2723 = vpack.c.b16 %v2667, %v2666
        %v2724 = vpack.c.b16 %v2669, %v2668
        %v2725 = vpack.c.b16 %v2671, %v2670
        %v2726 = vpack.c.b16 %v2673, %v2672
        %v2727 = vpack.c.b16 %v2675, %v2674
        %v2728 = vpack.c.b16 %v2677, %v2676
        %v2729 = vpack.c.b16 %v2679, %v2678
        %v2730 = vpack.c.b16 %v2681, %v2680
        %v2731 = vpack.c.b16 %v2683, %v2682
        %v2732 = vpack.c.b16 %v2685, %v2684
        %v2733 = vpack.c.b16 %v2687, %v2686
        %v2734 = vpack.c.b16 %v2689, %v2688
        %v2735 = vpack.c.b16 %v2691, %v2690
        %v2736 = vpack.c.b16 %v2693, %v2692
        %v2737 = vpack.c.b16 %v2695, %v2694
        %v2738 = vpack.c.b16 %v2697, %v2696
        %v2739 = vpack.c.b16 %v2699, %v2698
        %v2740 = vpack.c.b16 %v2701, %v2700
        %v2741 = vpack.c.b16 %v2703, %v2702
        %v2742 = vpack.c.b16 %v2705, %v2704
        %v2743 = vpack.c.b16 %v2707, %v2706
        %v2744 = vpack.c.b16 %v2709, %v2708
        %v2745 = vpack.c.b16 %v2711, %v2710
        %v2746 = vpack.c.b16 %v2713, %v2712
        %v2747 = vpack.c.b16 %v2715, %v2714
        %2780 = vmatpush.bf16.msra.mxu0 %v2723
        %2781 = vmatpush.bf16.msra.mxu0 %v2722
        %2782 = vmatpush.bf16.msra.mxu0 %v2721
        %2783 = vmatpush.bf16.msra.mxu0 %v2720
        %2784 = vmatpush.bf16.msra.mxu0 %v2719
        %2785 = vmatpush.bf16.msra.mxu0 %v2718
        %2786 = vmatpush.bf16.msra.mxu0 %v2717
        %2787 = vmatpush.bf16.msra.mxu0 %v2716
        %2788 = vmatmul.bf16.gmra.mxu0 %v2134
        %v2789 = vpop.f32.mrf.mxu0
        %v2790 = vadd.f32 %v2579, %v2789
        %v2791 = vpop.f32.mrf.mxu0
        %v2792 = vadd.f32 %v2581, %v2791
        %2793 = vmatmul.bf16.gmra.mxu0 %v2138
        %v2794 = vpop.f32.mrf.mxu0
        %v2795 = vadd.f32 %v2584, %v2794
        %v2796 = vpop.f32.mrf.mxu0
        %v2797 = vadd.f32 %v2586, %v2796
        %2798 = vdwg.mxu0
        %2799 = vmatpush.bf16.msra.mxu0 %v2731
        %2800 = vmatpush.bf16.msra.mxu0 %v2730
        %2801 = vmatpush.bf16.msra.mxu0 %v2729
        %2802 = vmatpush.bf16.msra.mxu0 %v2728
        %2803 = vmatpush.bf16.msra.mxu0 %v2727
        %2804 = vmatpush.bf16.msra.mxu0 %v2726
        %2805 = vmatpush.bf16.msra.mxu0 %v2725
        %2806 = vmatpush.bf16.msra.mxu0 %v2724
        %2807 = vmatmul.bf16.gmra.mxu0 %v2135
        %v2808 = vpop.f32.mrf.mxu0
        %v2809 = vadd.f32 %v2790, %v2808
        %v2810 = vpop.f32.mrf.mxu0
        %v2811 = vadd.f32 %v2792, %v2810
        %2812 = vmatmul.bf16.gmra.mxu0 %v2139
        %v2813 = vpop.f32.mrf.mxu0
        %v2814 = vadd.f32 %v2795, %v2813
        %v2815 = vpop.f32.mrf.mxu0
        %v2816 = vadd.f32 %v2797, %v2815
        %2817 = vdwg.mxu0
        %2818 = vmatpush.bf16.msra.mxu0 %v2739
        %2819 = vmatpush.bf16.msra.mxu0 %v2738
        %2820 = vmatpush.bf16.msra.mxu0 %v2737
        %2821 = vmatpush.bf16.msra.mxu0 %v2736
        %2822 = vmatpush.bf16.msra.mxu0 %v2735
        %2823 = vmatpush.bf16.msra.mxu0 %v2734
        %2824 = vmatpush.bf16.msra.mxu0 %v2733
        %2825 = vmatpush.bf16.msra.mxu0 %v2732
        %2826 = vmatmul.bf16.gmra.mxu0 %v2136
        %v2827 = vpop.f32.mrf.mxu0
        %v2828 = vadd.f32 %v2809, %v2827
        %v2829 = vpop.f32.mrf.mxu0
        %v2830 = vadd.f32 %v2811, %v2829
        %2831 = vmatmul.bf16.gmra.mxu0 %v2140
        %v2832 = vpop.f32.mrf.mxu0
        %v2833 = vadd.f32 %v2814, %v2832
        %v2834 = vpop.f32.mrf.mxu0
        %v2835 = vadd.f32 %v2816, %v2834
        %2836 = vdwg.mxu0
        %2837 = vmatpush.bf16.msra.mxu0 %v2747
        %2838 = vmatpush.bf16.msra.mxu0 %v2746
        %2839 = vmatpush.bf16.msra.mxu0 %v2745
        %2840 = vmatpush.bf16.msra.mxu0 %v2744
        %2841 = vmatpush.bf16.msra.mxu0 %v2743
        %2842 = vmatpush.bf16.msra.mxu0 %v2742
        %2843 = vmatpush.bf16.msra.mxu0 %v2741
        %2844 = vmatpush.bf16.msra.mxu0 %v2740
        %2845 = vmatmul.bf16.gmra.mxu0 %v2137
        %v2846 = vpop.f32.mrf.mxu0
        %v2847 = vadd.f32 %v2828, %v2846
        %v2848 = vpop.f32.mrf.mxu0
        %v2849 = vadd.f32 %v2830, %v2848
        %2850 = vmatmul.bf16.gmra.mxu0 %v2141
        %v2851 = vpop.f32.mrf.mxu0
        %v2852 = vadd.f32 %v2833, %v2851
        %v2853 = vpop.f32.mrf.mxu0
        %v2854 = vadd.f32 %v2835, %v2853
        %2855 = vdwg.mxu0
        %v2856 = vadd.f32 %v1610, %v2847
        %v2857 = vadd.f32 %v1611, %v2849
        %v2858 = vadd.f32 %v1612, %v2852
        %v2859 = vadd.f32 %v1613, %v2854
        %v2860 = vld [vmem:[%s12] sm:$0x1]
        %v2862 = vperm.slane %v2860, 0
        %v2864 = vadd.f32 %v2856, %v2862
        %v2865 = vadd.f32 %v2857, %v2862
        %v2866 = vadd.f32 %v2858, %v2862
        %v2867 = vadd.f32 %v2859, %v2862
        %2868 = vst [vmem:[%s599] sm:$0xff] %v2864
        %2869 = vst [vmem:[%s599 + $0x8] sm:$0xff] %v2865
        %2870 = vst [vmem:[%s599 + $0x10] sm:$0xff] %v2866
        %2871 = vst [vmem:[%s599 + $0x18] sm:$0xff] %v2867
        %s2872 = sand.u32 %s321, 1
        %s2873 = scalar_lea.sflag [#allocation4], %s2872
        %s2874 = sand.u32 %s321, 1
        %s2875 = smul.addr %s2874, 32
        %s2876 = scalar_lea.vmem [#allocation19], %s2875
        // Predicated region
        $region113: #{tpu_custom_call.1} parent=71 // pred_check
          %p2877 = pneg %p331
        $region114: #{tpu_custom_call.1} parent=71 // pred_check_branch
          %2879 = sbr.rel (%p2877) target = $region116
        $region115: #{tpu_custom_call.1} parent=71 // pred_region
          %2881 = vsyncadd %s2873, 0
          %s2882 = smul.addr %s35, 4
          %s2883 = smul.addr %s2882, 8
          %s2884 = scalar_lea.hbm %s13, %s2883
          %s2885 = sshll.u32 %s2876, 4
          %s2886 = int_to_ptr.vmem [resolvable:$true] %s2885
          %s2887 = sshll.u32 %s2884, 4
          %s2888 = int_to_ptr.hbm [resolvable:$true] %s2887
          %2893 = dma.vmem_to_hbm [thread:$0]  %s2886, 512, %s2888, %s2873, 128, 128, 8
        $region116: #{tpu_custom_call.1} parent=71 // pred_fallthru
          _
      $region72: #{tpu_custom_call.1} parent=5 // pred_fallthru
        _
      %p2894 = scmp.le.s32.totalorder 2, %s30
      // Predicated region
      $region117: #{tpu_custom_call.1} parent=5 // pred_check
        %p2895 = pneg %p2894
      $region118: #{tpu_custom_call.1} parent=5 // pred_check_branch
        %2897 = sbr.rel (%p2895) target = $region120
      $region119: #{tpu_custom_call.1} parent=5 // pred_region
        %s2898 = ssub.s32 %s30, 2
        // Predicated region
        $region121: #{tpu_custom_call.1} parent=119 // pred_check
          %p2899 = pneg %p337
        $region122: #{tpu_custom_call.1} parent=119 // pred_check_branch
          %2901 = sbr.rel (%p2899) target = $region124
        $region123: #{tpu_custom_call.1} parent=119 // pred_region
          %s2902 = sand.u32 %s322, 1
          %s2903 = scalar_lea.sflag [#allocation4], %s2902
          %s2904 = sand.u32 %s322, 1
          %s2905 = smul.addr %s2904, 32
          %s2906 = scalar_lea.vmem [#allocation19], %s2905
          %2908 = dma.done %s2903, 512
        $region124: #{tpu_custom_call.1} parent=119 // pred_fallthru
          _
      $region120: #{tpu_custom_call.1} parent=5 // pred_fallthru
        _
    $region6: #{tpu_custom_call.1} parent=1 // loop_footer
      %s34 = sadd.s32 1, %s30
    $region7: #{tpu_custom_call.1} parent=1 // loop_footer_branch
      %29 = sbr.rel target = $region3
    $region8: #{tpu_custom_call.1} parent=1 // loop_exit
      _
    %2909 = vsyncpa [#allocation3], 1
    %s2910 = scalar_lea.sflag [#allocation3], 1
    %2911 = vsyncpa %s2910, 1
    %2912 = vsyncpa [#allocation6], 1
    %2913 = vsyncpa [#allocation9], 1
    %2914 = vsyncpa [#allocation12], 1
    %2915 = vsyncpa [#allocation15], 1
    %2916 = vsyncpa [#allocation18], 1
    %2917 = vsyncpa [#allocation4], 1
    %s2918 = scalar_lea.sflag [#allocation4], 1
    %2919 = vsyncpa %s2918, 1

</llo_original>
